<compile_context>
chip_gen: v7x
topology: tpu7x:2x2x1
jax: 0.10.0
libtpu: 0.0.40
codegen_flags: <defaults>
</compile_context>

<pallas_src>
import jax
import jax.numpy as jnp
from jax.experimental import pallas as pl
from jax.experimental.pallas import tpu as pltpu

LANE = 128


# ---------------------------------------------------------------------------
# helpers
# ---------------------------------------------------------------------------
def _round_up(x, m):
    return (x + m - 1) // m * m


def _fold_bn(bn_params, eps=1e-5):
    gamma, beta, mean, var = bn_params
    scale = gamma / jnp.sqrt(var + eps)
    shift = beta - mean * scale
    return scale, shift


def _pad_last(v, target):
    return jnp.pad(v, ((0, 0),) * (v.ndim - 1) + ((0, target - v.shape[-1]),))


def _pick_row_tile(ho, wo):
    """Largest divisor of ho keeping the GEMM M (= th*wo) and f32 acc modest."""
    best = 1
    for th in range(1, ho + 1):
        if ho % th == 0 and th * wo <= 1024:
            best = th
    return best


# ---------------------------------------------------------------------------
# fused conv kernel (bn+relu on input, 3x3 conv via 9 MXU matmuls,
# optional fused 1x1 shortcut output, optional residual-add epilogue)
# ---------------------------------------------------------------------------
def _make_conv_kernel(*, stride, th, wo, hp, wp, cin_p, cout_p, has_sc, has_res):
    nph = stride * stride

    def kernel(*refs):
        x_refs = refs[:nph]                       # parity phases of the padded input
        w_ref = refs[nph]                         # (3, 3, cin_p, cout_p) bf16
        scale_ref = refs[nph + 1]                 # (1, cin_p) f32 (folded BN)
        shift_ref = refs[nph + 2]                 # (1, cin_p) f32
        pos = nph + 3
        wsc_ref = None
        res_ref = None
        if has_sc:
            wsc_ref = refs[pos]; pos += 1         # (cin_p, cout_p) bf16
        if has_res:
            res_ref = refs[pos]; pos += 1         # (1, th, wo, cout_p) f32
        o_ref = refs[pos]; pos += 1               # (1, th, wo, cout_p) f32
        sc_ref = refs[pos] if has_sc else None    # (1, th, wo, cout_p) f32

        r0 = pl.program_id(1) * th
        scale = scale_ref[...]
        shift = shift_ref[...]

        # ---- BN + ReLU on the needed slab of each phase (computed once) ----
        # The spatial zero-padding halo must be re-zeroed after the affine+relu
        # (otherwise relu(shift) would leak into the border taps).
        acts = []
        for pr in range(stride):
            row = []
            nrows = th + (2 - pr) // stride
            for pc in range(stride):
                xr = x_refs[pr * stride + pc]
                wph = xr.shape[2]
                slab = xr[0, pl.ds(r0, nrows), :, :]          # (nrows, wph, cin_p) f32
                a = jnp.maximum(slab * scale + shift, 0.0)
                ri = jax.lax.broadcasted_iota(jnp.int32, (nrows, wph, 1), 0)
                ci = jax.lax.broadcasted_iota(jnp.int32, (nrows, wph, 1), 1)
                gr = (r0 + ri) * stride + pr                   # global padded row
                gc = ci * stride + pc                          # global padded col
                interior = (gr > 0) & (gr < hp - 1) & (gc > 0) & (gc < wp - 1)
                row.append(jnp.where(interior, a, 0.0))
            acts.append(row)

        # ---- 3x3 conv: 9 accumulated MXU matmuls over shifted taps ---------
        acc = jnp.zeros((th * wo, cout_p), jnp.float32)
        for kh in range(3):
            pr, ro = kh % stride, kh // stride
            for kw in range(3):
                pc, co = kw % stride, kw // stride
                a_tap = acts[pr][pc][ro:ro + th, co:co + wo, :]
                a_tap = a_tap.reshape(th * wo, cin_p).astype(jnp.bfloat16)
                acc += jnp.dot(a_tap, w_ref[kh, kw],
                               preferred_element_type=jnp.float32)

        out = acc.reshape(th, wo, cout_p)
        if has_res:
            out = out + res_ref[0]                             # residual epilogue
        o_ref[0] = out.astype(o_ref.dtype)

        # ---- fused 1x1 strided shortcut (reuses the centre tap) ------------
        if has_sc:
            p, off = 1 % stride, 1 // stride
            a11 = acts[p][p][off:off + th, off:off + wo, :]
            a11 = a11.reshape(th * wo, cin_p).astype(jnp.bfloat16)
            sc = jnp.dot(a11, wsc_ref[...], preferred_element_type=jnp.float32)
            sc_ref[0] = sc.reshape(th, wo, cout_p).astype(sc_ref.dtype)

    return kernel


def _conv3x3(x_pad, w, scale, shift, *, stride, wsc=None, res=None):
    """3x3 conv (pad=1, stride) of relu(x*scale+shift); NHWC, channel-padded."""
    n, hp, wp, cin_p = x_pad.shape
    cout_p = w.shape[-1]
    ho = (hp - 3) // stride + 1
    wo = (wp - 3) // stride + 1
    th = _pick_row_tile(ho, wo)

    # parity phases (stride=1 -> the identity single phase)
    phases = [x_pad[:, rp::stride, cp::stride, :]
              for rp in range(stride) for cp in range(stride)]

    in_specs = [pl.BlockSpec((1,) + p.shape[1:], lambda b, i: (b, 0, 0, 0))
                for p in phases]
    inputs = list(phases)
    in_specs += [pl.BlockSpec(w.shape, lambda b, i: (0, 0, 0, 0)),
                 pl.BlockSpec(scale.shape, lambda b, i: (0, 0)),
                 pl.BlockSpec(shift.shape, lambda b, i: (0, 0))]
    inputs += [w, scale, shift]
    if wsc is not None:
        in_specs.append(pl.BlockSpec(wsc.shape, lambda b, i: (0, 0)))
        inputs.append(wsc)
    if res is not None:
        in_specs.append(pl.BlockSpec((1, th, wo, cout_p), lambda b, i: (b, i, 0, 0)))
        inputs.append(res)

    out_spec = pl.BlockSpec((1, th, wo, cout_p), lambda b, i: (b, i, 0, 0))
    out_shape = [jax.ShapeDtypeStruct((n, ho, wo, cout_p), jnp.float32)]
    out_specs = [out_spec]
    if wsc is not None:
        out_shape.append(jax.ShapeDtypeStruct((n, ho, wo, cout_p), jnp.float32))
        out_specs.append(out_spec)

    kernel = _make_conv_kernel(stride=stride, th=th, wo=wo, hp=hp, wp=wp,
                               cin_p=cin_p, cout_p=cout_p,
                               has_sc=wsc is not None, has_res=res is not None)

    outs = pl.pallas_call(
        kernel,
        out_shape=out_shape,
        grid_spec=pltpu.PrefetchScalarGridSpec(
            num_scalar_prefetch=0,
            grid=(n, ho // th),
            in_specs=in_specs,
            out_specs=out_specs),
        compiler_params=pltpu.CompilerParams(
            dimension_semantics=("parallel", "parallel")),
    )(*inputs)

    if wsc is None:
        return outs[0], None
    return outs[0], outs[1]


# ---------------------------------------------------------------------------
# BaseBlock forward (public wrapper, NCHW in / NCHW out like the PyTorch module)
# ---------------------------------------------------------------------------
def base_block_forward(x_nchw, params, stride):
    x = jnp.transpose(x_nchw, (0, 2, 3, 1)).astype(jnp.float32)   # NCHW -> NHWC
    n, h, w, cin = x.shape
    cout = params["conv1_w"].shape[0]
    cin_p, cout_p = _round_up(cin, LANE), _round_up(cout, LANE)

    s1, b1 = _fold_bn(params["bn1"])
    s2, b2 = _fold_bn(params["bn2"])
    s1p = _pad_last(s1.reshape(1, cin), cin_p)
    b1p = _pad_last(b1.reshape(1, cin), cin_p)
    s2p = _pad_last(s2.reshape(1, cout), cout_p)
    b2p = _pad_last(b2.reshape(1, cout), cout_p)

    def conv_w(wt, ci_p, co_p):
        wt = jnp.transpose(wt, (2, 3, 1, 0))                      # (3,3,Cin,Cout)
        wt = jnp.pad(wt, ((0, 0), (0, 0),
                          (0, ci_p - wt.shape[2]), (0, co_p - wt.shape[3])))
        return wt.astype(jnp.bfloat16)

    w1 = conv_w(params["conv1_w"], cin_p, cout_p)
    w2 = conv_w(params["conv2_w"], cout_p, cout_p)

    has_sc = (stride != 1) or (cin != cout)
    wsc = None
    if has_sc:
        wsc = params["shortcut_w"][:, :, 0, 0].T                  # (Cin, Cout)
        wsc = jnp.pad(wsc, ((0, cin_p - cin), (0, cout_p - cout))).astype(jnp.bfloat16)

    # conv1 (+ fused bn1/relu, + fused 1x1 strided shortcut)
    x_pad = jnp.pad(x, ((0, 0), (1, 1), (1, 1), (0, cin_p - cin)))
    c1, shortcut = _conv3x3(x_pad, w1, s1p, b1p, stride=stride, wsc=wsc)

    if not has_sc:
        # identity shortcut: the raw input (channel-padded to the lane width)
        shortcut = jnp.pad(x, ((0, 0), (0, 0), (0, 0), (0, cout_p - cin)))

    # conv2 (+ fused bn2/relu, + residual add in the epilogue)
    c1_pad = jnp.pad(c1, ((0, 0), (1, 1), (1, 1), (0, 0)))
    y, _ = _conv3x3(c1_pad, w2, s2p, b2p, stride=1, res=shortcut)

    y = y[:, :, :, :cout]
    return jnp.transpose(y, (0, 3, 1, 2))                         # NHWC -> NCHW


# ---------------------------------------------------------------------------
# deterministic parameter init (shapes from BaseBlock.__init__)
# ---------------------------------------------------------------------------
def init_params(key, in_channels, out_channels, stride):
    ks = jax.random.split(key, 12)

    def bn(kg, kb, km, kv, c):
        gamma = 1.0 + 0.1 * jax.random.normal(kg, (c,), jnp.float32)
        beta = 0.1 * jax.random.normal(kb, (c,), jnp.float32)
        mean = 0.1 * jax.random.normal(km, (c,), jnp.float32)
        var = jax.random.uniform(kv, (c,), jnp.float32, 0.5, 1.5)
        return (gamma, beta, mean, var)

    params = {
        "bn1": bn(ks[0], ks[1], ks[2], ks[3], in_channels),
        "conv1_w": 0.1 * jax.random.normal(
            ks[4], (out_channels, in_channels, 3, 3), jnp.float32),
        "bn2": bn(ks[5], ks[6], ks[7], ks[8], out_channels),
        "conv2_w": 0.1 * jax.random.normal(
            ks[9], (out_channels, out_channels, 3, 3), jnp.float32),
    }
    if stride != 1 or in_channels != out_channels:
        params["shortcut_w"] = 0.1 * jax.random.normal(
            ks[10], (out_channels, in_channels, 1, 1), jnp.float32)
    return params


# ---------------------------------------------------------------------------
# pure-JAX reference (XLA convs) used only to validate the Pallas path
# ---------------------------------------------------------------------------
def _ref_forward(x_nchw, params, stride, eps=1e-5):
    def bn(x, p):
        g, b, m, v = p
        return ((x - m[None, :, None, None])
                / jnp.sqrt(v[None, :, None, None] + eps)
                * g[None, :, None, None] + b[None, :, None, None])

    def conv(x, w, s, pad):
        return jax.lax.conv_general_dilated(
            x, w, (s, s), ((pad, pad), (pad, pad)),
            dimension_numbers=("NCHW", "OIHW", "NCHW"))

    out = jax.nn.relu(bn(x_nchw, params["bn1"]))
    if "shortcut_w" in params:
        sc = conv(out, params["shortcut_w"], stride, 0)
    else:
        sc = x_nchw
    out = conv(out, params["conv1_w"], stride, 1)
    out = conv(jax.nn.relu(bn(out, params["bn2"])), params["conv2_w"], 1, 1)
    return out + sc


if __name__ == "__main__":
    key = jax.random.PRNGKey(0)
    kx, kp = jax.random.split(key)

    fwd = jax.jit(base_block_forward, static_argnums=(2,))

    # Case 1: stride=2 with channel expansion -> exercises the fused 1x1 shortcut.
    x = jax.random.normal(kx, (2, 4, 16, 16), jnp.float32)
    params = init_params(kp, 4, 8, stride=2)
    y = jax.block_until_ready(fwd(x, params, 2))
    y_ref = _ref_forward(x, params, 2)
    assert y.shape == (2, 8, 8, 8), y.shape
    assert bool(jnp.allclose(y, y_ref, atol=5e-2, rtol=5e-2)), (
        float(jnp.max(jnp.abs(y - y_ref))))

    # Case 2: stride=1, same channels -> identity shortcut path.
    x2 = jax.random.normal(kx, (2, 8, 16, 16), jnp.float32)
    params2 = init_params(kp, 8, 8, stride=1)
    y2 = jax.block_until_ready(fwd(x2, params2, 1))
    y2_ref = _ref_forward(x2, params2, 1)
    assert y2.shape == (2, 8, 16, 16), y2.shape
    assert bool(jnp.allclose(y2, y2_ref, atol=5e-2, rtol=5e-2)), (
        float(jnp.max(jnp.abs(y2 - y2_ref))))

    print("KERNEL_OK")
</pallas_src>

<mosaic_0001>
module attributes {stable_mosaic.version = 11 : i64} {
  func.func @kernel(%arg0: i32, %arg1: i32, %arg2: memref<1x9x9x128xf32, #tpu.memory_space<vmem>>, %arg3: memref<1x9x9x128xf32, #tpu.memory_space<vmem>>, %arg4: memref<1x9x9x128xf32, #tpu.memory_space<vmem>>, %arg5: memref<1x9x9x128xf32, #tpu.memory_space<vmem>>, %arg6: memref<3x3x128x128xbf16, #tpu.memory_space<vmem>>, %arg7: memref<1x128xf32, #tpu.memory_space<vmem>>, %arg8: memref<1x128xf32, #tpu.memory_space<vmem>>, %arg9: memref<128x128xbf16, #tpu.memory_space<vmem>>, %arg10: memref<1x8x8x128xf32, #tpu.memory_space<vmem>>, %arg11: memref<1x8x8x128xf32, #tpu.memory_space<vmem>>) attributes {dimension_semantics = [#tpu.dimension_semantics<parallel>, #tpu.dimension_semantics<parallel>], iteration_bounds = array<i64: 2, 1>, scalar_prefetch = 0 : i64, scratch_operands = 0 : i64, tpu.core_type = #tpu.core_type<tc>, window_params = [{transform_indices = @transform_0, window_bounds = array<i64: 1, 9, 9, 128>}, {transform_indices = @transform_1, window_bounds = array<i64: 1, 9, 9, 128>}, {transform_indices = @transform_2, window_bounds = array<i64: 1, 9, 9, 128>}, {transform_indices = @transform_3, window_bounds = array<i64: 1, 9, 9, 128>}, {pipeline_mode = #tpu.pipeline_mode<synchronous>, transform_indices = @transform_4, window_bounds = array<i64: 3, 3, 128, 128>}, {pipeline_mode = #tpu.pipeline_mode<synchronous>, transform_indices = @transform_5, window_bounds = array<i64: 1, 128>}, {pipeline_mode = #tpu.pipeline_mode<synchronous>, transform_indices = @transform_6, window_bounds = array<i64: 1, 128>}, {pipeline_mode = #tpu.pipeline_mode<synchronous>, transform_indices = @transform_7, window_bounds = array<i64: 128, 128>}, {transform_indices = @transform_8, window_bounds = array<i64: 1, 8, 8, 128>}, {transform_indices = @transform_9, window_bounds = array<i64: 1, 8, 8, 128>}]} {
    %c8_i32 = arith.constant 8 : i32
    %0 = arith.muli %arg1, %c8_i32 : i32
    %c0 = arith.constant 0 : index
    %c0_0 = arith.constant 0 : index
    %1 = vector.load %arg7[%c0, %c0_0] : memref<1x128xf32, #tpu.memory_space<vmem>>, vector<1x128xf32>
    %c0_1 = arith.constant 0 : index
    %c0_2 = arith.constant 0 : index
    %2 = vector.load %arg8[%c0_1, %c0_2] : memref<1x128xf32, #tpu.memory_space<vmem>>, vector<1x128xf32>
    %c0_3 = arith.constant 0 : index
    %3 = arith.index_cast %0 : i32 to index
    %c0_4 = arith.constant 0 : index
    %c0_5 = arith.constant 0 : index
    %4 = vector.load %arg2[%c0_3, %3, %c0_4, %c0_5] : memref<1x9x9x128xf32, #tpu.memory_space<vmem>>, vector<1x9x9x128xf32>
    %5 = vector.shape_cast %4 : vector<1x9x9x128xf32> to vector<9x9x128xf32>
    %6 = vector.shape_cast %1 : vector<1x128xf32> to vector<1x1x128xf32>
    %7 = vector.broadcast %6 : vector<1x1x128xf32> to vector<9x9x128xf32>
    %8 = arith.mulf %5, %7 : vector<9x9x128xf32>
    %9 = vector.shape_cast %2 : vector<1x128xf32> to vector<1x1x128xf32>
    %10 = vector.broadcast %9 : vector<1x1x128xf32> to vector<9x9x128xf32>
    %11 = arith.addf %8, %10 : vector<9x9x128xf32>
    %cst = arith.constant 0.000000e+00 : f32
    %12 = vector.broadcast %cst : f32 to vector<9x9x128xf32>
    %13 = arith.maximumf %11, %12 : vector<9x9x128xf32>
    %14 = tpu.iota {dimensions = array<i32: 0>} : vector<9x9x1xi32>
    %15 = tpu.iota {dimensions = array<i32: 1>} : vector<9x9x1xi32>
    %16 = vector.broadcast %0 : i32 to vector<9x9x1xi32>
    %17 = arith.addi %16, %14 : vector<9x9x1xi32>
    %c2_i32 = arith.constant 2 : i32
    %18 = vector.broadcast %c2_i32 : i32 to vector<9x9x1xi32>
    %19 = arith.muli %17, %18 : vector<9x9x1xi32>
    %c0_i32 = arith.constant 0 : i32
    %20 = vector.broadcast %c0_i32 : i32 to vector<9x9x1xi32>
    %21 = arith.addi %19, %20 : vector<9x9x1xi32>
    %c2_i32_6 = arith.constant 2 : i32
    %22 = vector.broadcast %c2_i32_6 : i32 to vector<9x9x1xi32>
    %23 = arith.muli %15, %22 : vector<9x9x1xi32>
    %c0_i32_7 = arith.constant 0 : i32
    %24 = vector.broadcast %c0_i32_7 : i32 to vector<9x9x1xi32>
    %25 = arith.addi %23, %24 : vector<9x9x1xi32>
    %c0_i32_8 = arith.constant 0 : i32
    %26 = vector.broadcast %c0_i32_8 : i32 to vector<9x9x1xi32>
    %27 = arith.cmpi sgt, %21, %26 : vector<9x9x1xi32>
    %c17_i32 = arith.constant 17 : i32
    %28 = vector.broadcast %c17_i32 : i32 to vector<9x9x1xi32>
    %29 = arith.cmpi slt, %21, %28 : vector<9x9x1xi32>
    %30 = arith.andi %27, %29 : vector<9x9x1xi1>
    %c0_i32_9 = arith.constant 0 : i32
    %31 = vector.broadcast %c0_i32_9 : i32 to vector<9x9x1xi32>
    %32 = arith.cmpi sgt, %25, %31 : vector<9x9x1xi32>
    %33 = arith.andi %30, %32 : vector<9x9x1xi1>
    %c17_i32_10 = arith.constant 17 : i32
    %34 = vector.broadcast %c17_i32_10 : i32 to vector<9x9x1xi32>
    %35 = arith.cmpi slt, %25, %34 : vector<9x9x1xi32>
    %36 = arith.andi %33, %35 : vector<9x9x1xi1>
    %cst_11 = arith.constant 0.000000e+00 : f32
    %37 = vector.shape_cast %36 : vector<9x9x1xi1> to vector<9x9x1xi1>
    %38 = vector.broadcast %37 : vector<9x9x1xi1> to vector<9x9x128xi1>
    %39 = vector.broadcast %cst_11 : f32 to vector<9x9x128xf32>
    %40 = arith.select %38, %13, %39 : vector<9x9x128xi1>, vector<9x9x128xf32>
    %c0_12 = arith.constant 0 : index
    %41 = arith.index_cast %0 : i32 to index
    %c0_13 = arith.constant 0 : index
    %c0_14 = arith.constant 0 : index
    %42 = vector.load %arg3[%c0_12, %41, %c0_13, %c0_14] : memref<1x9x9x128xf32, #tpu.memory_space<vmem>>, vector<1x9x9x128xf32>
    %43 = vector.shape_cast %42 : vector<1x9x9x128xf32> to vector<9x9x128xf32>
    %44 = vector.shape_cast %1 : vector<1x128xf32> to vector<1x1x128xf32>
    %45 = vector.broadcast %44 : vector<1x1x128xf32> to vector<9x9x128xf32>
    %46 = arith.mulf %43, %45 : vector<9x9x128xf32>
    %47 = vector.shape_cast %2 : vector<1x128xf32> to vector<1x1x128xf32>
    %48 = vector.broadcast %47 : vector<1x1x128xf32> to vector<9x9x128xf32>
    %49 = arith.addf %46, %48 : vector<9x9x128xf32>
    %cst_15 = arith.constant 0.000000e+00 : f32
    %50 = vector.broadcast %cst_15 : f32 to vector<9x9x128xf32>
    %51 = arith.maximumf %49, %50 : vector<9x9x128xf32>
    %52 = tpu.iota {dimensions = array<i32: 0>} : vector<9x9x1xi32>
    %53 = tpu.iota {dimensions = array<i32: 1>} : vector<9x9x1xi32>
    %54 = vector.broadcast %0 : i32 to vector<9x9x1xi32>
    %55 = arith.addi %54, %52 : vector<9x9x1xi32>
    %c2_i32_16 = arith.constant 2 : i32
    %56 = vector.broadcast %c2_i32_16 : i32 to vector<9x9x1xi32>
    %57 = arith.muli %55, %56 : vector<9x9x1xi32>
    %c0_i32_17 = arith.constant 0 : i32
    %58 = vector.broadcast %c0_i32_17 : i32 to vector<9x9x1xi32>
    %59 = arith.addi %57, %58 : vector<9x9x1xi32>
    %c2_i32_18 = arith.constant 2 : i32
    %60 = vector.broadcast %c2_i32_18 : i32 to vector<9x9x1xi32>
    %61 = arith.muli %53, %60 : vector<9x9x1xi32>
    %c1_i32 = arith.constant 1 : i32
    %62 = vector.broadcast %c1_i32 : i32 to vector<9x9x1xi32>
    %63 = arith.addi %61, %62 : vector<9x9x1xi32>
    %c0_i32_19 = arith.constant 0 : i32
    %64 = vector.broadcast %c0_i32_19 : i32 to vector<9x9x1xi32>
    %65 = arith.cmpi sgt, %59, %64 : vector<9x9x1xi32>
    %c17_i32_20 = arith.constant 17 : i32
    %66 = vector.broadcast %c17_i32_20 : i32 to vector<9x9x1xi32>
    %67 = arith.cmpi slt, %59, %66 : vector<9x9x1xi32>
    %68 = arith.andi %65, %67 : vector<9x9x1xi1>
    %c0_i32_21 = arith.constant 0 : i32
    %69 = vector.broadcast %c0_i32_21 : i32 to vector<9x9x1xi32>
    %70 = arith.cmpi sgt, %63, %69 : vector<9x9x1xi32>
    %71 = arith.andi %68, %70 : vector<9x9x1xi1>
    %c17_i32_22 = arith.constant 17 : i32
    %72 = vector.broadcast %c17_i32_22 : i32 to vector<9x9x1xi32>
    %73 = arith.cmpi slt, %63, %72 : vector<9x9x1xi32>
    %74 = arith.andi %71, %73 : vector<9x9x1xi1>
    %cst_23 = arith.constant 0.000000e+00 : f32
    %75 = vector.shape_cast %74 : vector<9x9x1xi1> to vector<9x9x1xi1>
    %76 = vector.broadcast %75 : vector<9x9x1xi1> to vector<9x9x128xi1>
    %77 = vector.broadcast %cst_23 : f32 to vector<9x9x128xf32>
    %78 = arith.select %76, %51, %77 : vector<9x9x128xi1>, vector<9x9x128xf32>
    %c0_24 = arith.constant 0 : index
    %79 = arith.index_cast %0 : i32 to index
    %c0_25 = arith.constant 0 : index
    %c0_26 = arith.constant 0 : index
    %80 = vector.load %arg4[%c0_24, %79, %c0_25, %c0_26] : memref<1x9x9x128xf32, #tpu.memory_space<vmem>>, vector<1x8x9x128xf32>
    %81 = vector.shape_cast %80 : vector<1x8x9x128xf32> to vector<8x9x128xf32>
    %82 = vector.shape_cast %1 : vector<1x128xf32> to vector<1x1x128xf32>
    %83 = vector.broadcast %82 : vector<1x1x128xf32> to vector<8x9x128xf32>
    %84 = arith.mulf %81, %83 : vector<8x9x128xf32>
    %85 = vector.shape_cast %2 : vector<1x128xf32> to vector<1x1x128xf32>
    %86 = vector.broadcast %85 : vector<1x1x128xf32> to vector<8x9x128xf32>
    %87 = arith.addf %84, %86 : vector<8x9x128xf32>
    %cst_27 = arith.constant 0.000000e+00 : f32
    %88 = vector.broadcast %cst_27 : f32 to vector<8x9x128xf32>
    %89 = arith.maximumf %87, %88 : vector<8x9x128xf32>
    %90 = tpu.iota {dimensions = array<i32: 0>} : vector<8x9x1xi32>
    %91 = tpu.iota {dimensions = array<i32: 1>} : vector<8x9x1xi32>
    %92 = vector.broadcast %0 : i32 to vector<8x9x1xi32>
    %93 = arith.addi %92, %90 : vector<8x9x1xi32>
    %c2_i32_28 = arith.constant 2 : i32
    %94 = vector.broadcast %c2_i32_28 : i32 to vector<8x9x1xi32>
    %95 = arith.muli %93, %94 : vector<8x9x1xi32>
    %c1_i32_29 = arith.constant 1 : i32
    %96 = vector.broadcast %c1_i32_29 : i32 to vector<8x9x1xi32>
    %97 = arith.addi %95, %96 : vector<8x9x1xi32>
    %c2_i32_30 = arith.constant 2 : i32
    %98 = vector.broadcast %c2_i32_30 : i32 to vector<8x9x1xi32>
    %99 = arith.muli %91, %98 : vector<8x9x1xi32>
    %c0_i32_31 = arith.constant 0 : i32
    %100 = vector.broadcast %c0_i32_31 : i32 to vector<8x9x1xi32>
    %101 = arith.addi %99, %100 : vector<8x9x1xi32>
    %c0_i32_32 = arith.constant 0 : i32
    %102 = vector.broadcast %c0_i32_32 : i32 to vector<8x9x1xi32>
    %103 = arith.cmpi sgt, %97, %102 : vector<8x9x1xi32>
    %c17_i32_33 = arith.constant 17 : i32
    %104 = vector.broadcast %c17_i32_33 : i32 to vector<8x9x1xi32>
    %105 = arith.cmpi slt, %97, %104 : vector<8x9x1xi32>
    %106 = arith.andi %103, %105 : vector<8x9x1xi1>
    %c0_i32_34 = arith.constant 0 : i32
    %107 = vector.broadcast %c0_i32_34 : i32 to vector<8x9x1xi32>
    %108 = arith.cmpi sgt, %101, %107 : vector<8x9x1xi32>
    %109 = arith.andi %106, %108 : vector<8x9x1xi1>
    %c17_i32_35 = arith.constant 17 : i32
    %110 = vector.broadcast %c17_i32_35 : i32 to vector<8x9x1xi32>
    %111 = arith.cmpi slt, %101, %110 : vector<8x9x1xi32>
    %112 = arith.andi %109, %111 : vector<8x9x1xi1>
    %cst_36 = arith.constant 0.000000e+00 : f32
    %113 = vector.shape_cast %112 : vector<8x9x1xi1> to vector<8x9x1xi1>
    %114 = vector.broadcast %113 : vector<8x9x1xi1> to vector<8x9x128xi1>
    %115 = vector.broadcast %cst_36 : f32 to vector<8x9x128xf32>
    %116 = arith.select %114, %89, %115 : vector<8x9x128xi1>, vector<8x9x128xf32>
    %c0_37 = arith.constant 0 : index
    %117 = arith.index_cast %0 : i32 to index
    %c0_38 = arith.constant 0 : index
    %c0_39 = arith.constant 0 : index
    %118 = vector.load %arg5[%c0_37, %117, %c0_38, %c0_39] : memref<1x9x9x128xf32, #tpu.memory_space<vmem>>, vector<1x8x9x128xf32>
    %119 = vector.shape_cast %118 : vector<1x8x9x128xf32> to vector<8x9x128xf32>
    %120 = vector.shape_cast %1 : vector<1x128xf32> to vector<1x1x128xf32>
    %121 = vector.broadcast %120 : vector<1x1x128xf32> to vector<8x9x128xf32>
    %122 = arith.mulf %119, %121 : vector<8x9x128xf32>
    %123 = vector.shape_cast %2 : vector<1x128xf32> to vector<1x1x128xf32>
    %124 = vector.broadcast %123 : vector<1x1x128xf32> to vector<8x9x128xf32>
    %125 = arith.addf %122, %124 : vector<8x9x128xf32>
    %cst_40 = arith.constant 0.000000e+00 : f32
    %126 = vector.broadcast %cst_40 : f32 to vector<8x9x128xf32>
    %127 = arith.maximumf %125, %126 : vector<8x9x128xf32>
    %128 = tpu.iota {dimensions = array<i32: 0>} : vector<8x9x1xi32>
    %129 = tpu.iota {dimensions = array<i32: 1>} : vector<8x9x1xi32>
    %130 = vector.broadcast %0 : i32 to vector<8x9x1xi32>
    %131 = arith.addi %130, %128 : vector<8x9x1xi32>
    %c2_i32_41 = arith.constant 2 : i32
    %132 = vector.broadcast %c2_i32_41 : i32 to vector<8x9x1xi32>
    %133 = arith.muli %131, %132 : vector<8x9x1xi32>
    %c1_i32_42 = arith.constant 1 : i32
    %134 = vector.broadcast %c1_i32_42 : i32 to vector<8x9x1xi32>
    %135 = arith.addi %133, %134 : vector<8x9x1xi32>
    %c2_i32_43 = arith.constant 2 : i32
    %136 = vector.broadcast %c2_i32_43 : i32 to vector<8x9x1xi32>
    %137 = arith.muli %129, %136 : vector<8x9x1xi32>
    %c1_i32_44 = arith.constant 1 : i32
    %138 = vector.broadcast %c1_i32_44 : i32 to vector<8x9x1xi32>
    %139 = arith.addi %137, %138 : vector<8x9x1xi32>
    %c0_i32_45 = arith.constant 0 : i32
    %140 = vector.broadcast %c0_i32_45 : i32 to vector<8x9x1xi32>
    %141 = arith.cmpi sgt, %135, %140 : vector<8x9x1xi32>
    %c17_i32_46 = arith.constant 17 : i32
    %142 = vector.broadcast %c17_i32_46 : i32 to vector<8x9x1xi32>
    %143 = arith.cmpi slt, %135, %142 : vector<8x9x1xi32>
    %144 = arith.andi %141, %143 : vector<8x9x1xi1>
    %c0_i32_47 = arith.constant 0 : i32
    %145 = vector.broadcast %c0_i32_47 : i32 to vector<8x9x1xi32>
    %146 = arith.cmpi sgt, %139, %145 : vector<8x9x1xi32>
    %147 = arith.andi %144, %146 : vector<8x9x1xi1>
    %c17_i32_48 = arith.constant 17 : i32
    %148 = vector.broadcast %c17_i32_48 : i32 to vector<8x9x1xi32>
    %149 = arith.cmpi slt, %139, %148 : vector<8x9x1xi32>
    %150 = arith.andi %147, %149 : vector<8x9x1xi1>
    %cst_49 = arith.constant 0.000000e+00 : f32
    %151 = vector.shape_cast %150 : vector<8x9x1xi1> to vector<8x9x1xi1>
    %152 = vector.broadcast %151 : vector<8x9x1xi1> to vector<8x9x128xi1>
    %153 = vector.broadcast %cst_49 : f32 to vector<8x9x128xf32>
    %154 = arith.select %152, %127, %153 : vector<8x9x128xi1>, vector<8x9x128xf32>
    %cst_50 = arith.constant 0.000000e+00 : f32
    %155 = vector.broadcast %cst_50 : f32 to vector<64x128xf32>
    %156 = vector.extract_strided_slice %40 {offsets = [0, 0, 0], sizes = [8, 8, 128], strides = [1, 1, 1]} : vector<9x9x128xf32> to vector<8x8x128xf32>
    %157 = vector.shape_cast %156 : vector<8x8x128xf32> to vector<64x128xf32>
    %158 = arith.truncf %157 : vector<64x128xf32> to vector<64x128xbf16>
    %c0_51 = arith.constant 0 : index
    %c0_52 = arith.constant 0 : index
    %c0_53 = arith.constant 0 : index
    %c0_54 = arith.constant 0 : index
    %159 = vector.load %arg6[%c0_51, %c0_52, %c0_53, %c0_54] : memref<3x3x128x128xbf16, #tpu.memory_space<vmem>>, vector<1x1x128x128xbf16>
    %160 = vector.shape_cast %159 : vector<1x1x128x128xbf16> to vector<128x128xbf16>
    %cst_55 = arith.constant dense<0.000000e+00> : vector<64x128xf32>
    %161 = tpu.matmul %158, %160, %cst_55 {dimension_numbers = #tpu.dot_dimension_numbers<[1], [0], [0], [1], [0, 0, 1, 1], [], []>} : vector<64x128xbf16>, vector<128x128xbf16>, vector<64x128xf32> -> vector<64x128xf32>
    %162 = arith.addf %155, %161 : vector<64x128xf32>
    %163 = vector.extract_strided_slice %78 {offsets = [0, 0, 0], sizes = [8, 8, 128], strides = [1, 1, 1]} : vector<9x9x128xf32> to vector<8x8x128xf32>
    %164 = vector.shape_cast %163 : vector<8x8x128xf32> to vector<64x128xf32>
    %165 = arith.truncf %164 : vector<64x128xf32> to vector<64x128xbf16>
    %c0_56 = arith.constant 0 : index
    %c1 = arith.constant 1 : index
    %c0_57 = arith.constant 0 : index
    %c0_58 = arith.constant 0 : index
    %166 = vector.load %arg6[%c0_56, %c1, %c0_57, %c0_58] : memref<3x3x128x128xbf16, #tpu.memory_space<vmem>>, vector<1x1x128x128xbf16>
    %167 = vector.shape_cast %166 : vector<1x1x128x128xbf16> to vector<128x128xbf16>
    %cst_59 = arith.constant dense<0.000000e+00> : vector<64x128xf32>
    %168 = tpu.matmul %165, %167, %cst_59 {dimension_numbers = #tpu.dot_dimension_numbers<[1], [0], [0], [1], [0, 0, 1, 1], [], []>} : vector<64x128xbf16>, vector<128x128xbf16>, vector<64x128xf32> -> vector<64x128xf32>
    %169 = arith.addf %162, %168 : vector<64x128xf32>
    %170 = vector.extract_strided_slice %40 {offsets = [0, 1, 0], sizes = [8, 8, 128], strides = [1, 1, 1]} : vector<9x9x128xf32> to vector<8x8x128xf32>
    %171 = vector.shape_cast %170 : vector<8x8x128xf32> to vector<64x128xf32>
    %172 = arith.truncf %171 : vector<64x128xf32> to vector<64x128xbf16>
    %c0_60 = arith.constant 0 : index
    %c2 = arith.constant 2 : index
    %c0_61 = arith.constant 0 : index
    %c0_62 = arith.constant 0 : index
    %173 = vector.load %arg6[%c0_60, %c2, %c0_61, %c0_62] : memref<3x3x128x128xbf16, #tpu.memory_space<vmem>>, vector<1x1x128x128xbf16>
    %174 = vector.shape_cast %173 : vector<1x1x128x128xbf16> to vector<128x128xbf16>
    %cst_63 = arith.constant dense<0.000000e+00> : vector<64x128xf32>
    %175 = tpu.matmul %172, %174, %cst_63 {dimension_numbers = #tpu.dot_dimension_numbers<[1], [0], [0], [1], [0, 0, 1, 1], [], []>} : vector<64x128xbf16>, vector<128x128xbf16>, vector<64x128xf32> -> vector<64x128xf32>
    %176 = arith.addf %169, %175 : vector<64x128xf32>
    %177 = vector.extract_strided_slice %116 {offsets = [0, 0, 0], sizes = [8, 8, 128], strides = [1, 1, 1]} : vector<8x9x128xf32> to vector<8x8x128xf32>
    %178 = vector.shape_cast %177 : vector<8x8x128xf32> to vector<64x128xf32>
    %179 = arith.truncf %178 : vector<64x128xf32> to vector<64x128xbf16>
    %c1_64 = arith.constant 1 : index
    %c0_65 = arith.constant 0 : index
    %c0_66 = arith.constant 0 : index
    %c0_67 = arith.constant 0 : index
    %180 = vector.load %arg6[%c1_64, %c0_65, %c0_66, %c0_67] : memref<3x3x128x128xbf16, #tpu.memory_space<vmem>>, vector<1x1x128x128xbf16>
    %181 = vector.shape_cast %180 : vector<1x1x128x128xbf16> to vector<128x128xbf16>
    %cst_68 = arith.constant dense<0.000000e+00> : vector<64x128xf32>
    %182 = tpu.matmul %179, %181, %cst_68 {dimension_numbers = #tpu.dot_dimension_numbers<[1], [0], [0], [1], [0, 0, 1, 1], [], []>} : vector<64x128xbf16>, vector<128x128xbf16>, vector<64x128xf32> -> vector<64x128xf32>
    %183 = arith.addf %176, %182 : vector<64x128xf32>
    %184 = vector.extract_strided_slice %154 {offsets = [0, 0, 0], sizes = [8, 8, 128], strides = [1, 1, 1]} : vector<8x9x128xf32> to vector<8x8x128xf32>
    %185 = vector.shape_cast %184 : vector<8x8x128xf32> to vector<64x128xf32>
    %186 = arith.truncf %185 : vector<64x128xf32> to vector<64x128xbf16>
    %c1_69 = arith.constant 1 : index
    %c1_70 = arith.constant 1 : index
    %c0_71 = arith.constant 0 : index
    %c0_72 = arith.constant 0 : index
    %187 = vector.load %arg6[%c1_69, %c1_70, %c0_71, %c0_72] : memref<3x3x128x128xbf16, #tpu.memory_space<vmem>>, vector<1x1x128x128xbf16>
    %188 = vector.shape_cast %187 : vector<1x1x128x128xbf16> to vector<128x128xbf16>
    %cst_73 = arith.constant dense<0.000000e+00> : vector<64x128xf32>
    %189 = tpu.matmul %186, %188, %cst_73 {dimension_numbers = #tpu.dot_dimension_numbers<[1], [0], [0], [1], [0, 0, 1, 1], [], []>} : vector<64x128xbf16>, vector<128x128xbf16>, vector<64x128xf32> -> vector<64x128xf32>
    %190 = arith.addf %183, %189 : vector<64x128xf32>
    %191 = vector.extract_strided_slice %116 {offsets = [0, 1, 0], sizes = [8, 8, 128], strides = [1, 1, 1]} : vector<8x9x128xf32> to vector<8x8x128xf32>
    %192 = vector.shape_cast %191 : vector<8x8x128xf32> to vector<64x128xf32>
    %193 = arith.truncf %192 : vector<64x128xf32> to vector<64x128xbf16>
    %c1_74 = arith.constant 1 : index
    %c2_75 = arith.constant 2 : index
    %c0_76 = arith.constant 0 : index
    %c0_77 = arith.constant 0 : index
    %194 = vector.load %arg6[%c1_74, %c2_75, %c0_76, %c0_77] : memref<3x3x128x128xbf16, #tpu.memory_space<vmem>>, vector<1x1x128x128xbf16>
    %195 = vector.shape_cast %194 : vector<1x1x128x128xbf16> to vector<128x128xbf16>
    %cst_78 = arith.constant dense<0.000000e+00> : vector<64x128xf32>
    %196 = tpu.matmul %193, %195, %cst_78 {dimension_numbers = #tpu.dot_dimension_numbers<[1], [0], [0], [1], [0, 0, 1, 1], [], []>} : vector<64x128xbf16>, vector<128x128xbf16>, vector<64x128xf32> -> vector<64x128xf32>
    %197 = arith.addf %190, %196 : vector<64x128xf32>
    %198 = vector.extract_strided_slice %40 {offsets = [1, 0, 0], sizes = [8, 8, 128], strides = [1, 1, 1]} : vector<9x9x128xf32> to vector<8x8x128xf32>
    %199 = vector.shape_cast %198 : vector<8x8x128xf32> to vector<64x128xf32>
    %200 = arith.truncf %199 : vector<64x128xf32> to vector<64x128xbf16>
    %c2_79 = arith.constant 2 : index
    %c0_80 = arith.constant 0 : index
    %c0_81 = arith.constant 0 : index
    %c0_82 = arith.constant 0 : index
    %201 = vector.load %arg6[%c2_79, %c0_80, %c0_81, %c0_82] : memref<3x3x128x128xbf16, #tpu.memory_space<vmem>>, vector<1x1x128x128xbf16>
    %202 = vector.shape_cast %201 : vector<1x1x128x128xbf16> to vector<128x128xbf16>
    %cst_83 = arith.constant dense<0.000000e+00> : vector<64x128xf32>
    %203 = tpu.matmul %200, %202, %cst_83 {dimension_numbers = #tpu.dot_dimension_numbers<[1], [0], [0], [1], [0, 0, 1, 1], [], []>} : vector<64x128xbf16>, vector<128x128xbf16>, vector<64x128xf32> -> vector<64x128xf32>
    %204 = arith.addf %197, %203 : vector<64x128xf32>
    %205 = vector.extract_strided_slice %78 {offsets = [1, 0, 0], sizes = [8, 8, 128], strides = [1, 1, 1]} : vector<9x9x128xf32> to vector<8x8x128xf32>
    %206 = vector.shape_cast %205 : vector<8x8x128xf32> to vector<64x128xf32>
    %207 = arith.truncf %206 : vector<64x128xf32> to vector<64x128xbf16>
    %c2_84 = arith.constant 2 : index
    %c1_85 = arith.constant 1 : index
    %c0_86 = arith.constant 0 : index
    %c0_87 = arith.constant 0 : index
    %208 = vector.load %arg6[%c2_84, %c1_85, %c0_86, %c0_87] : memref<3x3x128x128xbf16, #tpu.memory_space<vmem>>, vector<1x1x128x128xbf16>
    %209 = vector.shape_cast %208 : vector<1x1x128x128xbf16> to vector<128x128xbf16>
    %cst_88 = arith.constant dense<0.000000e+00> : vector<64x128xf32>
    %210 = tpu.matmul %207, %209, %cst_88 {dimension_numbers = #tpu.dot_dimension_numbers<[1], [0], [0], [1], [0, 0, 1, 1], [], []>} : vector<64x128xbf16>, vector<128x128xbf16>, vector<64x128xf32> -> vector<64x128xf32>
    %211 = arith.addf %204, %210 : vector<64x128xf32>
    %212 = vector.extract_strided_slice %40 {offsets = [1, 1, 0], sizes = [8, 8, 128], strides = [1, 1, 1]} : vector<9x9x128xf32> to vector<8x8x128xf32>
    %213 = vector.shape_cast %212 : vector<8x8x128xf32> to vector<64x128xf32>
    %214 = arith.truncf %213 : vector<64x128xf32> to vector<64x128xbf16>
    %c2_89 = arith.constant 2 : index
    %c2_90 = arith.constant 2 : index
    %c0_91 = arith.constant 0 : index
    %c0_92 = arith.constant 0 : index
    %215 = vector.load %arg6[%c2_89, %c2_90, %c0_91, %c0_92] : memref<3x3x128x128xbf16, #tpu.memory_space<vmem>>, vector<1x1x128x128xbf16>
    %216 = vector.shape_cast %215 : vector<1x1x128x128xbf16> to vector<128x128xbf16>
    %cst_93 = arith.constant dense<0.000000e+00> : vector<64x128xf32>
    %217 = tpu.matmul %214, %216, %cst_93 {dimension_numbers = #tpu.dot_dimension_numbers<[1], [0], [0], [1], [0, 0, 1, 1], [], []>} : vector<64x128xbf16>, vector<128x128xbf16>, vector<64x128xf32> -> vector<64x128xf32>
    %218 = arith.addf %211, %217 : vector<64x128xf32>
    %219 = vector.shape_cast %218 : vector<64x128xf32> to vector<8x8x128xf32>
    %c0_94 = arith.constant 0 : index
    %c0_95 = arith.constant 0 : index
    %c0_96 = arith.constant 0 : index
    %c0_97 = arith.constant 0 : index
    %220 = vector.load %arg10[%c0_94, %c0_95, %c0_96, %c0_97] : memref<1x8x8x128xf32, #tpu.memory_space<vmem>>, vector<1x8x8x128xf32>
    %221 = vector.shape_cast %220 : vector<1x8x8x128xf32> to vector<8x8x128xf32>
    %222 = vector.shape_cast %219 : vector<8x8x128xf32> to vector<1x8x8x128xf32>
    tpu.vector_store %arg10[%c0_94, %c0_95, %c0_96, %c0_97], %222 {strides = array<i32>} : memref<1x8x8x128xf32, #tpu.memory_space<vmem>>, vector<1x8x8x128xf32>,
    %223 = vector.extract_strided_slice %154 {offsets = [0, 0, 0], sizes = [8, 8, 128], strides = [1, 1, 1]} : vector<8x9x128xf32> to vector<8x8x128xf32>
    %224 = vector.shape_cast %223 : vector<8x8x128xf32> to vector<64x128xf32>
    %225 = arith.truncf %224 : vector<64x128xf32> to vector<64x128xbf16>
    %c0_98 = arith.constant 0 : index
    %c0_99 = arith.constant 0 : index
    %226 = vector.load %arg9[%c0_98, %c0_99] : memref<128x128xbf16, #tpu.memory_space<vmem>>, vector<128x128xbf16>
    %cst_100 = arith.constant dense<0.000000e+00> : vector<64x128xf32>
    %227 = tpu.matmul %225, %226, %cst_100 {dimension_numbers = #tpu.dot_dimension_numbers<[1], [0], [0], [1], [0, 0, 1, 1], [], []>} : vector<64x128xbf16>, vector<128x128xbf16>, vector<64x128xf32> -> vector<64x128xf32>
    %228 = vector.shape_cast %227 : vector<64x128xf32> to vector<8x8x128xf32>
    %c0_101 = arith.constant 0 : index
    %c0_102 = arith.constant 0 : index
    %c0_103 = arith.constant 0 : index
    %c0_104 = arith.constant 0 : index
    %229 = vector.load %arg11[%c0_101, %c0_102, %c0_103, %c0_104] : memref<1x8x8x128xf32, #tpu.memory_space<vmem>>, vector<1x8x8x128xf32>
    %230 = vector.shape_cast %229 : vector<1x8x8x128xf32> to vector<8x8x128xf32>
    %231 = vector.shape_cast %228 : vector<8x8x128xf32> to vector<1x8x8x128xf32>
    tpu.vector_store %arg11[%c0_101, %c0_102, %c0_103, %c0_104], %231 {strides = array<i32>} : memref<1x8x8x128xf32, #tpu.memory_space<vmem>>, vector<1x8x8x128xf32>,
    return
  }
  func.func @transform_0(%arg0: i32, %arg1: i32) -> (i32, i32, i32, i32) {
    %c0_i32 = arith.constant 0 : i32
    %c0_i32_0 = arith.constant 0 : i32
    %c0_i32_1 = arith.constant 0 : i32
    %c0_i32_2 = arith.constant 0 : i32
    return %arg0, %c0_i32, %c0_i32_0, %c0_i32_1 : i32, i32, i32, i32
  }
  func.func @transform_1(%arg0: i32, %arg1: i32) -> (i32, i32, i32, i32) {
    %c0_i32 = arith.constant 0 : i32
    %c0_i32_0 = arith.constant 0 : i32
    %c0_i32_1 = arith.constant 0 : i32
    %c0_i32_2 = arith.constant 0 : i32
    return %arg0, %c0_i32, %c0_i32_0, %c0_i32_1 : i32, i32, i32, i32
  }
  func.func @transform_2(%arg0: i32, %arg1: i32) -> (i32, i32, i32, i32) {
    %c0_i32 = arith.constant 0 : i32
    %c0_i32_0 = arith.constant 0 : i32
    %c0_i32_1 = arith.constant 0 : i32
    %c0_i32_2 = arith.constant 0 : i32
    return %arg0, %c0_i32, %c0_i32_0, %c0_i32_1 : i32, i32, i32, i32
  }
  func.func @transform_3(%arg0: i32, %arg1: i32) -> (i32, i32, i32, i32) {
    %c0_i32 = arith.constant 0 : i32
    %c0_i32_0 = arith.constant 0 : i32
    %c0_i32_1 = arith.constant 0 : i32
    %c0_i32_2 = arith.constant 0 : i32
    return %arg0, %c0_i32, %c0_i32_0, %c0_i32_1 : i32, i32, i32, i32
  }
  func.func @transform_4(%arg0: i32, %arg1: i32) -> (i32, i32, i32, i32) {
    %c0_i32 = arith.constant 0 : i32
    %c0_i32_0 = arith.constant 0 : i32
    %c0_i32_1 = arith.constant 0 : i32
    %c0_i32_2 = arith.constant 0 : i32
    %c0_i32_3 = arith.constant 0 : i32
    return %c0_i32, %c0_i32_0, %c0_i32_1, %c0_i32_2 : i32, i32, i32, i32
  }
  func.func @transform_5(%arg0: i32, %arg1: i32) -> (i32, i32) {
    %c0_i32 = arith.constant 0 : i32
    %c0_i32_0 = arith.constant 0 : i32
    %c0_i32_1 = arith.constant 0 : i32
    return %c0_i32, %c0_i32_0 : i32, i32
  }
  func.func @transform_6(%arg0: i32, %arg1: i32) -> (i32, i32) {
    %c0_i32 = arith.constant 0 : i32
    %c0_i32_0 = arith.constant 0 : i32
    %c0_i32_1 = arith.constant 0 : i32
    return %c0_i32, %c0_i32_0 : i32, i32
  }
  func.func @transform_7(%arg0: i32, %arg1: i32) -> (i32, i32) {
    %c0_i32 = arith.constant 0 : i32
    %c0_i32_0 = arith.constant 0 : i32
    %c0_i32_1 = arith.constant 0 : i32
    return %c0_i32, %c0_i32_0 : i32, i32
  }
  func.func @transform_8(%arg0: i32, %arg1: i32) -> (i32, i32, i32, i32) {
    %c0_i32 = arith.constant 0 : i32
    %c0_i32_0 = arith.constant 0 : i32
    %c0_i32_1 = arith.constant 0 : i32
    return %arg0, %arg1, %c0_i32, %c0_i32_0 : i32, i32, i32, i32
  }
  func.func @transform_9(%arg0: i32, %arg1: i32) -> (i32, i32, i32, i32) {
    %c0_i32 = arith.constant 0 : i32
    %c0_i32_0 = arith.constant 0 : i32
    %c0_i32_1 = arith.constant 0 : i32
    return %arg0, %arg1, %c0_i32, %c0_i32_0 : i32, i32, i32, i32
  }
}

module attributes {stable_mosaic.version = 11 : i64} {
  func.func @kernel(%arg0: i32, %arg1: i32, %arg2: memref<1x10x10x128xf32, #tpu.memory_space<vmem>>, %arg3: memref<3x3x128x128xbf16, #tpu.memory_space<vmem>>, %arg4: memref<1x128xf32, #tpu.memory_space<vmem>>, %arg5: memref<1x128xf32, #tpu.memory_space<vmem>>, %arg6: memref<1x8x8x128xf32, #tpu.memory_space<vmem>>, %arg7: memref<1x8x8x128xf32, #tpu.memory_space<vmem>>) attributes {dimension_semantics = [#tpu.dimension_semantics<parallel>, #tpu.dimension_semantics<parallel>], iteration_bounds = array<i64: 2, 1>, scalar_prefetch = 0 : i64, scratch_operands = 0 : i64, tpu.core_type = #tpu.core_type<tc>, window_params = [{transform_indices = @transform_0, window_bounds = array<i64: 1, 10, 10, 128>}, {pipeline_mode = #tpu.pipeline_mode<synchronous>, transform_indices = @transform_1, window_bounds = array<i64: 3, 3, 128, 128>}, {pipeline_mode = #tpu.pipeline_mode<synchronous>, transform_indices = @transform_2, window_bounds = array<i64: 1, 128>}, {pipeline_mode = #tpu.pipeline_mode<synchronous>, transform_indices = @transform_3, window_bounds = array<i64: 1, 128>}, {transform_indices = @transform_4, window_bounds = array<i64: 1, 8, 8, 128>}, {transform_indices = @transform_5, window_bounds = array<i64: 1, 8, 8, 128>}]} {
    %c8_i32 = arith.constant 8 : i32
    %0 = arith.muli %arg1, %c8_i32 : i32
    %c0 = arith.constant 0 : index
    %c0_0 = arith.constant 0 : index
    %1 = vector.load %arg4[%c0, %c0_0] : memref<1x128xf32, #tpu.memory_space<vmem>>, vector<1x128xf32>
    %c0_1 = arith.constant 0 : index
    %c0_2 = arith.constant 0 : index
    %2 = vector.load %arg5[%c0_1, %c0_2] : memref<1x128xf32, #tpu.memory_space<vmem>>, vector<1x128xf32>
    %c0_3 = arith.constant 0 : index
    %3 = arith.index_cast %0 : i32 to index
    %c0_4 = arith.constant 0 : index
    %c0_5 = arith.constant 0 : index
    %4 = vector.load %arg2[%c0_3, %3, %c0_4, %c0_5] : memref<1x10x10x128xf32, #tpu.memory_space<vmem>>, vector<1x10x10x128xf32>
    %5 = vector.shape_cast %4 : vector<1x10x10x128xf32> to vector<10x10x128xf32>
    %6 = vector.shape_cast %1 : vector<1x128xf32> to vector<1x1x128xf32>
    %7 = vector.broadcast %6 : vector<1x1x128xf32> to vector<10x10x128xf32>
    %8 = arith.mulf %5, %7 : vector<10x10x128xf32>
    %9 = vector.shape_cast %2 : vector<1x128xf32> to vector<1x1x128xf32>
    %10 = vector.broadcast %9 : vector<1x1x128xf32> to vector<10x10x128xf32>
    %11 = arith.addf %8, %10 : vector<10x10x128xf32>
    %cst = arith.constant 0.000000e+00 : f32
    %12 = vector.broadcast %cst : f32 to vector<10x10x128xf32>
    %13 = arith.maximumf %11, %12 : vector<10x10x128xf32>
    %14 = tpu.iota {dimensions = array<i32: 0>} : vector<10x10x1xi32>
    %15 = tpu.iota {dimensions = array<i32: 1>} : vector<10x10x1xi32>
    %16 = vector.broadcast %0 : i32 to vector<10x10x1xi32>
    %17 = arith.addi %16, %14 : vector<10x10x1xi32>
    %c1_i32 = arith.constant 1 : i32
    %18 = vector.broadcast %c1_i32 : i32 to vector<10x10x1xi32>
    %19 = arith.muli %17, %18 : vector<10x10x1xi32>
    %c0_i32 = arith.constant 0 : i32
    %20 = vector.broadcast %c0_i32 : i32 to vector<10x10x1xi32>
    %21 = arith.addi %19, %20 : vector<10x10x1xi32>
    %c1_i32_6 = arith.constant 1 : i32
    %22 = vector.broadcast %c1_i32_6 : i32 to vector<10x10x1xi32>
    %23 = arith.muli %15, %22 : vector<10x10x1xi32>
    %c0_i32_7 = arith.constant 0 : i32
    %24 = vector.broadcast %c0_i32_7 : i32 to vector<10x10x1xi32>
    %25 = arith.addi %23, %24 : vector<10x10x1xi32>
    %c0_i32_8 = arith.constant 0 : i32
    %26 = vector.broadcast %c0_i32_8 : i32 to vector<10x10x1xi32>
    %27 = arith.cmpi sgt, %21, %26 : vector<10x10x1xi32>
    %c9_i32 = arith.constant 9 : i32
    %28 = vector.broadcast %c9_i32 : i32 to vector<10x10x1xi32>
    %29 = arith.cmpi slt, %21, %28 : vector<10x10x1xi32>
    %30 = arith.andi %27, %29 : vector<10x10x1xi1>
    %c0_i32_9 = arith.constant 0 : i32
    %31 = vector.broadcast %c0_i32_9 : i32 to vector<10x10x1xi32>
    %32 = arith.cmpi sgt, %25, %31 : vector<10x10x1xi32>
    %33 = arith.andi %30, %32 : vector<10x10x1xi1>
    %c9_i32_10 = arith.constant 9 : i32
    %34 = vector.broadcast %c9_i32_10 : i32 to vector<10x10x1xi32>
    %35 = arith.cmpi slt, %25, %34 : vector<10x10x1xi32>
    %36 = arith.andi %33, %35 : vector<10x10x1xi1>
    %cst_11 = arith.constant 0.000000e+00 : f32
    %37 = vector.shape_cast %36 : vector<10x10x1xi1> to vector<10x10x1xi1>
    %38 = vector.broadcast %37 : vector<10x10x1xi1> to vector<10x10x128xi1>
    %39 = vector.broadcast %cst_11 : f32 to vector<10x10x128xf32>
    %40 = arith.select %38, %13, %39 : vector<10x10x128xi1>, vector<10x10x128xf32>
    %cst_12 = arith.constant 0.000000e+00 : f32
    %41 = vector.broadcast %cst_12 : f32 to vector<64x128xf32>
    %42 = vector.extract_strided_slice %40 {offsets = [0, 0, 0], sizes = [8, 8, 128], strides = [1, 1, 1]} : vector<10x10x128xf32> to vector<8x8x128xf32>
    %43 = vector.shape_cast %42 : vector<8x8x128xf32> to vector<64x128xf32>
    %44 = arith.truncf %43 : vector<64x128xf32> to vector<64x128xbf16>
    %c0_13 = arith.constant 0 : index
    %c0_14 = arith.constant 0 : index
    %c0_15 = arith.constant 0 : index
    %c0_16 = arith.constant 0 : index
    %45 = vector.load %arg3[%c0_13, %c0_14, %c0_15, %c0_16] : memref<3x3x128x128xbf16, #tpu.memory_space<vmem>>, vector<1x1x128x128xbf16>
    %46 = vector.shape_cast %45 : vector<1x1x128x128xbf16> to vector<128x128xbf16>
    %cst_17 = arith.constant dense<0.000000e+00> : vector<64x128xf32>
    %47 = tpu.matmul %44, %46, %cst_17 {dimension_numbers = #tpu.dot_dimension_numbers<[1], [0], [0], [1], [0, 0, 1, 1], [], []>} : vector<64x128xbf16>, vector<128x128xbf16>, vector<64x128xf32> -> vector<64x128xf32>
    %48 = arith.addf %41, %47 : vector<64x128xf32>
    %49 = vector.extract_strided_slice %40 {offsets = [0, 1, 0], sizes = [8, 8, 128], strides = [1, 1, 1]} : vector<10x10x128xf32> to vector<8x8x128xf32>
    %50 = vector.shape_cast %49 : vector<8x8x128xf32> to vector<64x128xf32>
    %51 = arith.truncf %50 : vector<64x128xf32> to vector<64x128xbf16>
    %c0_18 = arith.constant 0 : index
    %c1 = arith.constant 1 : index
    %c0_19 = arith.constant 0 : index
    %c0_20 = arith.constant 0 : index
    %52 = vector.load %arg3[%c0_18, %c1, %c0_19, %c0_20] : memref<3x3x128x128xbf16, #tpu.memory_space<vmem>>, vector<1x1x128x128xbf16>
    %53 = vector.shape_cast %52 : vector<1x1x128x128xbf16> to vector<128x128xbf16>
    %cst_21 = arith.constant dense<0.000000e+00> : vector<64x128xf32>
    %54 = tpu.matmul %51, %53, %cst_21 {dimension_numbers = #tpu.dot_dimension_numbers<[1], [0], [0], [1], [0, 0, 1, 1], [], []>} : vector<64x128xbf16>, vector<128x128xbf16>, vector<64x128xf32> -> vector<64x128xf32>
    %55 = arith.addf %48, %54 : vector<64x128xf32>
    %56 = vector.extract_strided_slice %40 {offsets = [0, 2, 0], sizes = [8, 8, 128], strides = [1, 1, 1]} : vector<10x10x128xf32> to vector<8x8x128xf32>
    %57 = vector.shape_cast %56 : vector<8x8x128xf32> to vector<64x128xf32>
    %58 = arith.truncf %57 : vector<64x128xf32> to vector<64x128xbf16>
    %c0_22 = arith.constant 0 : index
    %c2 = arith.constant 2 : index
    %c0_23 = arith.constant 0 : index
    %c0_24 = arith.constant 0 : index
    %59 = vector.load %arg3[%c0_22, %c2, %c0_23, %c0_24] : memref<3x3x128x128xbf16, #tpu.memory_space<vmem>>, vector<1x1x128x128xbf16>
    %60 = vector.shape_cast %59 : vector<1x1x128x128xbf16> to vector<128x128xbf16>
    %cst_25 = arith.constant dense<0.000000e+00> : vector<64x128xf32>
    %61 = tpu.matmul %58, %60, %cst_25 {dimension_numbers = #tpu.dot_dimension_numbers<[1], [0], [0], [1], [0, 0, 1, 1], [], []>} : vector<64x128xbf16>, vector<128x128xbf16>, vector<64x128xf32> -> vector<64x128xf32>
    %62 = arith.addf %55, %61 : vector<64x128xf32>
    %63 = vector.extract_strided_slice %40 {offsets = [1, 0, 0], sizes = [8, 8, 128], strides = [1, 1, 1]} : vector<10x10x128xf32> to vector<8x8x128xf32>
    %64 = vector.shape_cast %63 : vector<8x8x128xf32> to vector<64x128xf32>
    %65 = arith.truncf %64 : vector<64x128xf32> to vector<64x128xbf16>
    %c1_26 = arith.constant 1 : index
    %c0_27 = arith.constant 0 : index
    %c0_28 = arith.constant 0 : index
    %c0_29 = arith.constant 0 : index
    %66 = vector.load %arg3[%c1_26, %c0_27, %c0_28, %c0_29] : memref<3x3x128x128xbf16, #tpu.memory_space<vmem>>, vector<1x1x128x128xbf16>
    %67 = vector.shape_cast %66 : vector<1x1x128x128xbf16> to vector<128x128xbf16>
    %cst_30 = arith.constant dense<0.000000e+00> : vector<64x128xf32>
    %68 = tpu.matmul %65, %67, %cst_30 {dimension_numbers = #tpu.dot_dimension_numbers<[1], [0], [0], [1], [0, 0, 1, 1], [], []>} : vector<64x128xbf16>, vector<128x128xbf16>, vector<64x128xf32> -> vector<64x128xf32>
    %69 = arith.addf %62, %68 : vector<64x128xf32>
    %70 = vector.extract_strided_slice %40 {offsets = [1, 1, 0], sizes = [8, 8, 128], strides = [1, 1, 1]} : vector<10x10x128xf32> to vector<8x8x128xf32>
    %71 = vector.shape_cast %70 : vector<8x8x128xf32> to vector<64x128xf32>
    %72 = arith.truncf %71 : vector<64x128xf32> to vector<64x128xbf16>
    %c1_31 = arith.constant 1 : index
    %c1_32 = arith.constant 1 : index
    %c0_33 = arith.constant 0 : index
    %c0_34 = arith.constant 0 : index
    %73 = vector.load %arg3[%c1_31, %c1_32, %c0_33, %c0_34] : memref<3x3x128x128xbf16, #tpu.memory_space<vmem>>, vector<1x1x128x128xbf16>
    %74 = vector.shape_cast %73 : vector<1x1x128x128xbf16> to vector<128x128xbf16>
    %cst_35 = arith.constant dense<0.000000e+00> : vector<64x128xf32>
    %75 = tpu.matmul %72, %74, %cst_35 {dimension_numbers = #tpu.dot_dimension_numbers<[1], [0], [0], [1], [0, 0, 1, 1], [], []>} : vector<64x128xbf16>, vector<128x128xbf16>, vector<64x128xf32> -> vector<64x128xf32>
    %76 = arith.addf %69, %75 : vector<64x128xf32>
    %77 = vector.extract_strided_slice %40 {offsets = [1, 2, 0], sizes = [8, 8, 128], strides = [1, 1, 1]} : vector<10x10x128xf32> to vector<8x8x128xf32>
    %78 = vector.shape_cast %77 : vector<8x8x128xf32> to vector<64x128xf32>
    %79 = arith.truncf %78 : vector<64x128xf32> to vector<64x128xbf16>
    %c1_36 = arith.constant 1 : index
    %c2_37 = arith.constant 2 : index
    %c0_38 = arith.constant 0 : index
    %c0_39 = arith.constant 0 : index
    %80 = vector.load %arg3[%c1_36, %c2_37, %c0_38, %c0_39] : memref<3x3x128x128xbf16, #tpu.memory_space<vmem>>, vector<1x1x128x128xbf16>
    %81 = vector.shape_cast %80 : vector<1x1x128x128xbf16> to vector<128x128xbf16>
    %cst_40 = arith.constant dense<0.000000e+00> : vector<64x128xf32>
    %82 = tpu.matmul %79, %81, %cst_40 {dimension_numbers = #tpu.dot_dimension_numbers<[1], [0], [0], [1], [0, 0, 1, 1], [], []>} : vector<64x128xbf16>, vector<128x128xbf16>, vector<64x128xf32> -> vector<64x128xf32>
    %83 = arith.addf %76, %82 : vector<64x128xf32>
    %84 = vector.extract_strided_slice %40 {offsets = [2, 0, 0], sizes = [8, 8, 128], strides = [1, 1, 1]} : vector<10x10x128xf32> to vector<8x8x128xf32>
    %85 = vector.shape_cast %84 : vector<8x8x128xf32> to vector<64x128xf32>
    %86 = arith.truncf %85 : vector<64x128xf32> to vector<64x128xbf16>
    %c2_41 = arith.constant 2 : index
    %c0_42 = arith.constant 0 : index
    %c0_43 = arith.constant 0 : index
    %c0_44 = arith.constant 0 : index
    %87 = vector.load %arg3[%c2_41, %c0_42, %c0_43, %c0_44] : memref<3x3x128x128xbf16, #tpu.memory_space<vmem>>, vector<1x1x128x128xbf16>
    %88 = vector.shape_cast %87 : vector<1x1x128x128xbf16> to vector<128x128xbf16>
    %cst_45 = arith.constant dense<0.000000e+00> : vector<64x128xf32>
    %89 = tpu.matmul %86, %88, %cst_45 {dimension_numbers = #tpu.dot_dimension_numbers<[1], [0], [0], [1], [0, 0, 1, 1], [], []>} : vector<64x128xbf16>, vector<128x128xbf16>, vector<64x128xf32> -> vector<64x128xf32>
    %90 = arith.addf %83, %89 : vector<64x128xf32>
    %91 = vector.extract_strided_slice %40 {offsets = [2, 1, 0], sizes = [8, 8, 128], strides = [1, 1, 1]} : vector<10x10x128xf32> to vector<8x8x128xf32>
    %92 = vector.shape_cast %91 : vector<8x8x128xf32> to vector<64x128xf32>
    %93 = arith.truncf %92 : vector<64x128xf32> to vector<64x128xbf16>
    %c2_46 = arith.constant 2 : index
    %c1_47 = arith.constant 1 : index
    %c0_48 = arith.constant 0 : index
    %c0_49 = arith.constant 0 : index
    %94 = vector.load %arg3[%c2_46, %c1_47, %c0_48, %c0_49] : memref<3x3x128x128xbf16, #tpu.memory_space<vmem>>, vector<1x1x128x128xbf16>
    %95 = vector.shape_cast %94 : vector<1x1x128x128xbf16> to vector<128x128xbf16>
    %cst_50 = arith.constant dense<0.000000e+00> : vector<64x128xf32>
    %96 = tpu.matmul %93, %95, %cst_50 {dimension_numbers = #tpu.dot_dimension_numbers<[1], [0], [0], [1], [0, 0, 1, 1], [], []>} : vector<64x128xbf16>, vector<128x128xbf16>, vector<64x128xf32> -> vector<64x128xf32>
    %97 = arith.addf %90, %96 : vector<64x128xf32>
    %98 = vector.extract_strided_slice %40 {offsets = [2, 2, 0], sizes = [8, 8, 128], strides = [1, 1, 1]} : vector<10x10x128xf32> to vector<8x8x128xf32>
    %99 = vector.shape_cast %98 : vector<8x8x128xf32> to vector<64x128xf32>
    %100 = arith.truncf %99 : vector<64x128xf32> to vector<64x128xbf16>
    %c2_51 = arith.constant 2 : index
    %c2_52 = arith.constant 2 : index
    %c0_53 = arith.constant 0 : index
    %c0_54 = arith.constant 0 : index
    %101 = vector.load %arg3[%c2_51, %c2_52, %c0_53, %c0_54] : memref<3x3x128x128xbf16, #tpu.memory_space<vmem>>, vector<1x1x128x128xbf16>
    %102 = vector.shape_cast %101 : vector<1x1x128x128xbf16> to vector<128x128xbf16>
    %cst_55 = arith.constant dense<0.000000e+00> : vector<64x128xf32>
    %103 = tpu.matmul %100, %102, %cst_55 {dimension_numbers = #tpu.dot_dimension_numbers<[1], [0], [0], [1], [0, 0, 1, 1], [], []>} : vector<64x128xbf16>, vector<128x128xbf16>, vector<64x128xf32> -> vector<64x128xf32>
    %104 = arith.addf %97, %103 : vector<64x128xf32>
    %105 = vector.shape_cast %104 : vector<64x128xf32> to vector<8x8x128xf32>
    %c0_56 = arith.constant 0 : index
    %c0_57 = arith.constant 0 : index
    %c0_58 = arith.constant 0 : index
    %c0_59 = arith.constant 0 : index
    %106 = vector.load %arg6[%c0_56, %c0_57, %c0_58, %c0_59] : memref<1x8x8x128xf32, #tpu.memory_space<vmem>>, vector<1x8x8x128xf32>
    %107 = vector.shape_cast %106 : vector<1x8x8x128xf32> to vector<8x8x128xf32>
    %108 = arith.addf %105, %107 : vector<8x8x128xf32>
    %c0_60 = arith.constant 0 : index
    %c0_61 = arith.constant 0 : index
    %c0_62 = arith.constant 0 : index
    %c0_63 = arith.constant 0 : index
    %109 = vector.load %arg7[%c0_60, %c0_61, %c0_62, %c0_63] : memref<1x8x8x128xf32, #tpu.memory_space<vmem>>, vector<1x8x8x128xf32>
    %110 = vector.shape_cast %109 : vector<1x8x8x128xf32> to vector<8x8x128xf32>
    %111 = vector.shape_cast %108 : vector<8x8x128xf32> to vector<1x8x8x128xf32>
    tpu.vector_store %arg7[%c0_60, %c0_61, %c0_62, %c0_63], %111 {strides = array<i32>} : memref<1x8x8x128xf32, #tpu.memory_space<vmem>>, vector<1x8x8x128xf32>,
    return
  }
  func.func @transform_0(%arg0: i32, %arg1: i32) -> (i32, i32, i32, i32) {
    %c0_i32 = arith.constant 0 : i32
    %c0_i32_0 = arith.constant 0 : i32
    %c0_i32_1 = arith.constant 0 : i32
    %c0_i32_2 = arith.constant 0 : i32
    return %arg0, %c0_i32, %c0_i32_0, %c0_i32_1 : i32, i32, i32, i32
  }
  func.func @transform_1(%arg0: i32, %arg1: i32) -> (i32, i32, i32, i32) {
    %c0_i32 = arith.constant 0 : i32
    %c0_i32_0 = arith.constant 0 : i32
    %c0_i32_1 = arith.constant 0 : i32
    %c0_i32_2 = arith.constant 0 : i32
    %c0_i32_3 = arith.constant 0 : i32
    return %c0_i32, %c0_i32_0, %c0_i32_1, %c0_i32_2 : i32, i32, i32, i32
  }
  func.func @transform_2(%arg0: i32, %arg1: i32) -> (i32, i32) {
    %c0_i32 = arith.constant 0 : i32
    %c0_i32_0 = arith.constant 0 : i32
    %c0_i32_1 = arith.constant 0 : i32
    return %c0_i32, %c0_i32_0 : i32, i32
  }
  func.func @transform_3(%arg0: i32, %arg1: i32) -> (i32, i32) {
    %c0_i32 = arith.constant 0 : i32
    %c0_i32_0 = arith.constant 0 : i32
    %c0_i32_1 = arith.constant 0 : i32
    return %c0_i32, %c0_i32_0 : i32, i32
  }
  func.func @transform_4(%arg0: i32, %arg1: i32) -> (i32, i32, i32, i32) {
    %c0_i32 = arith.constant 0 : i32
    %c0_i32_0 = arith.constant 0 : i32
    %c0_i32_1 = arith.constant 0 : i32
    return %arg0, %arg1, %c0_i32, %c0_i32_0 : i32, i32, i32, i32
  }
  func.func @transform_5(%arg0: i32, %arg1: i32) -> (i32, i32, i32, i32) {
    %c0_i32 = arith.constant 0 : i32
    %c0_i32_0 = arith.constant 0 : i32
    %c0_i32_1 = arith.constant 0 : i32
    return %arg0, %arg1, %c0_i32, %c0_i32_0 : i32, i32, i32, i32
  }
}

</mosaic_0001>

<llo_original>
// kernel: base_block_forward.2
$region0: #{base_block_forward.2}
  #allocation0 [shape = 'u32[]', space=smem, size = 0x4, offset = 0x4, fixed_abs, tag = 'smem constant byte address 0x4 - core index']
  #allocation1 [shape = 'u32[144,128]{1,0:T(1,128)}', space=vmem, size = 0x12000, scoped, tag = 'internal scratch']
  %s0 = inlined_call_operand.vmem [shape: f32[2,9,9,128], index: 0, kind: input, shape index: {}]
  %s1 = inlined_call_operand.vmem [shape: f32[2,9,9,128], index: 1, kind: input, shape index: {}]
  %s2 = inlined_call_operand.vmem [shape: f32[2,9,9,128], index: 2, kind: input, shape index: {}]
  %s3 = inlined_call_operand.vmem [shape: f32[2,9,9,128], index: 3, kind: input, shape index: {}]
  %s4 = inlined_call_operand.vmem [shape: bf16[3,3,128,128], index: 4, kind: input, shape index: {}]
  %s5 = inlined_call_operand.vmem [shape: f32[1,128], index: 5, kind: input, shape index: {}]
  %s6 = inlined_call_operand.vmem [shape: f32[1,128], index: 6, kind: input, shape index: {}]
  %s7 = inlined_call_operand.vmem [shape: bf16[128,128], index: 7, kind: input, shape index: {}]
  %s8 = inlined_call_operand.vmem [shape: f32[2,8,8,128], index: 8, kind: output, shape index: {0}]
  %s9 = inlined_call_operand.vmem [shape: f32[2,8,8,128], index: 9, kind: output, shape index: {1}]
  %10 = xla_tuple %s8, %s9
  %s11 = sld [smem:[#allocation0]]
  $region73: #{base_block_forward.2} parent=0
    _
  %s13 = ssub.s32 1, %s11
  %s14 = scalar_select 0, %s13, %s11
  loop: start=0, step=1, limit=4
  $region2: #{base_block_forward.2} parent=0 // loop_pre_header
    _
  $region3: #{base_block_forward.2} parent=0 // loop_header
    %s16 = sphi 0, %s20
    %p17 = scmp.ge.s32.totalorder %s16, 4
    %s23 = sphi 0, %s35
    %s24 = sphi 0, %s31
    %s25 = sphi 0, %s23
    %s26 = sphi 0, %s24
    %s27 = sphi 0, %s25
    %s28 = sphi 0, %s26
    %s38 = sphi 0, %s40
    %s41 = sphi 0, %s38
    %s42 = sphi 0, %s41
    %s58 = sphi 0, %s42
    %s64 = sphi 0, %s66
    %s67 = sphi 0, %s64
    %s68 = sphi 0, %s67
    %s84 = sphi 0, %s68
    %s90 = sphi 0, %s92
    %s93 = sphi 0, %s90
    %s94 = sphi 0, %s93
    %s110 = sphi 0, %s94
    %s116 = sphi 0, %s118
    %s119 = sphi 0, %s116
    %s120 = sphi 0, %s119
    %s136 = sphi 0, %s120
    %s140 = sphi 0, %s140
    %s142 = sphi 0, %s140
    %s143 = sphi 0, %s142
    %s157 = sphi 0, %s143
    %s161 = sphi 0, %s161
    %s163 = sphi 0, %s161
    %s164 = sphi 0, %s163
    %s178 = sphi 0, %s164
    %s182 = sphi 0, %s182
    %s184 = sphi 0, %s182
    %s185 = sphi 0, %s184
    %s199 = sphi 0, %s185
    %s203 = sphi 0, %s203
    %s205 = sphi 0, %s203
    %s206 = sphi 0, %s205
    %s220 = sphi 0, %s206
    %s228 = sphi 0, %s230
    %s231 = sphi 0, %s228
    %s232 = sphi 0, %s231
    %s248 = sphi 0, %s232
    %s256 = sphi 0, %s258
    %s259 = sphi 0, %s256
    %s260 = sphi 0, %s259
    %s276 = sphi 0, %s260
  $region4: #{base_block_forward.2} parent=0 // loop_header_branch
    %19 = sbr.rel (%p17) target = $region8
  $region5: #{base_block_forward.2} parent=0 // loop_body
    %s21 = ssub.s32 %s16, 1
    %s22 = ssub.s32 %s16, 2
    %s29 = sadd.s32 1, %s24
    %p30 = scmp.ge.s32.totalorder %s29, 1
    %s31 = scalar_select %p30, 0, %s29
    %s32 = sadd.s32 1, %s23
    %s33 = scalar_select %p30, %s32, %s23
    %p34 = scmp.ge.s32.totalorder %s33, 2
    %s35 = scalar_select %p34, 0, %s33
    %s36 = ssub.s32 %s23, %s35
    %p37 = scmp.eq.s32.totalorder %s36, 0
    %s39 = sadd.s32 %s38, 1
    %s40 = scalar_select %p37, %s38, %s39
    %p43 = pneg %p37
    %p44 = scmp.eq.s32.totalorder %s16, 1
    %p45 = por %p43, %p44
    %p46 = scmp.ne.s32.totalorder %s38, %s41
    %p47 = scmp.eq.s32.totalorder %s16, 0
    %p48 = por %p46, %p47
    %p49 = scmp.ne.s32.totalorder %s38, %s41
    %p50 = scmp.eq.s32.totalorder %s21, 1
    %p51 = por %p49, %p50
    %p52 = scmp.ne.s32.totalorder %s41, %s42
    %p53 = scmp.eq.s32.totalorder %s21, 0
    %p54 = por %p52, %p53
    %p55 = scmp.ne.s32.totalorder %s41, %s42
    %p56 = scmp.eq.s32.totalorder %s22, 1
    %p57 = por %p55, %p56
    %p59 = scmp.ne.s32.totalorder %s42, %s58
    %p60 = scmp.eq.s32.totalorder %s22, 0
    %p61 = por %p59, %p60
    %s62 = ssub.s32 %s23, %s35
    %p63 = scmp.eq.s32.totalorder %s62, 0
    %s65 = sadd.s32 %s64, 1
    %s66 = scalar_select %p63, %s64, %s65
    %p69 = pneg %p63
    %p70 = scmp.eq.s32.totalorder %s16, 1
    %p71 = por %p69, %p70
    %p72 = scmp.ne.s32.totalorder %s64, %s67
    %p73 = scmp.eq.s32.totalorder %s16, 0
    %p74 = por %p72, %p73
    %p75 = scmp.ne.s32.totalorder %s64, %s67
    %p76 = scmp.eq.s32.totalorder %s21, 1
    %p77 = por %p75, %p76
    %p78 = scmp.ne.s32.totalorder %s67, %s68
    %p79 = scmp.eq.s32.totalorder %s21, 0
    %p80 = por %p78, %p79
    %p81 = scmp.ne.s32.totalorder %s67, %s68
    %p82 = scmp.eq.s32.totalorder %s22, 1
    %p83 = por %p81, %p82
    %p85 = scmp.ne.s32.totalorder %s68, %s84
    %p86 = scmp.eq.s32.totalorder %s22, 0
    %p87 = por %p85, %p86
    %s88 = ssub.s32 %s23, %s35
    %p89 = scmp.eq.s32.totalorder %s88, 0
    %s91 = sadd.s32 %s90, 1
    %s92 = scalar_select %p89, %s90, %s91
    %p95 = pneg %p89
    %p96 = scmp.eq.s32.totalorder %s16, 1
    %p97 = por %p95, %p96
    %p98 = scmp.ne.s32.totalorder %s90, %s93
    %p99 = scmp.eq.s32.totalorder %s16, 0
    %p100 = por %p98, %p99
    %p101 = scmp.ne.s32.totalorder %s90, %s93
    %p102 = scmp.eq.s32.totalorder %s21, 1
    %p103 = por %p101, %p102
    %p104 = scmp.ne.s32.totalorder %s93, %s94
    %p105 = scmp.eq.s32.totalorder %s21, 0
    %p106 = por %p104, %p105
    %p107 = scmp.ne.s32.totalorder %s93, %s94
    %p108 = scmp.eq.s32.totalorder %s22, 1
    %p109 = por %p107, %p108
    %p111 = scmp.ne.s32.totalorder %s94, %s110
    %p112 = scmp.eq.s32.totalorder %s22, 0
    %p113 = por %p111, %p112
    %s114 = ssub.s32 %s23, %s35
    %p115 = scmp.eq.s32.totalorder %s114, 0
    %s117 = sadd.s32 %s116, 1
    %s118 = scalar_select %p115, %s116, %s117
    %p121 = pneg %p115
    %p122 = scmp.eq.s32.totalorder %s16, 1
    %p123 = por %p121, %p122
    %p124 = scmp.ne.s32.totalorder %s116, %s119
    %p125 = scmp.eq.s32.totalorder %s16, 0
    %p126 = por %p124, %p125
    %p127 = scmp.ne.s32.totalorder %s116, %s119
    %p128 = scmp.eq.s32.totalorder %s21, 1
    %p129 = por %p127, %p128
    %p130 = scmp.ne.s32.totalorder %s119, %s120
    %p131 = scmp.eq.s32.totalorder %s21, 0
    %p132 = por %p130, %p131
    %p133 = scmp.ne.s32.totalorder %s119, %s120
    %p134 = scmp.eq.s32.totalorder %s22, 1
    %p135 = por %p133, %p134
    %p137 = scmp.ne.s32.totalorder %s120, %s136
    %p138 = scmp.eq.s32.totalorder %s22, 0
    %p139 = por %p137, %p138
    %s141 = sadd.s32 %s140, 1
    %p144 = scmp.eq.s32.totalorder %s16, 1
    %p145 = scmp.ne.s32.totalorder %s140, %s142
    %p146 = scmp.eq.s32.totalorder %s16, 0
    %p147 = por %p145, %p146
    %p148 = scmp.ne.s32.totalorder %s140, %s142
    %p149 = scmp.eq.s32.totalorder %s21, 1
    %p150 = por %p148, %p149
    %p151 = scmp.ne.s32.totalorder %s142, %s143
    %p152 = scmp.eq.s32.totalorder %s21, 0
    %p153 = por %p151, %p152
    %p154 = scmp.ne.s32.totalorder %s142, %s143
    %p155 = scmp.eq.s32.totalorder %s22, 1
    %p156 = por %p154, %p155
    %p158 = scmp.ne.s32.totalorder %s143, %s157
    %p159 = scmp.eq.s32.totalorder %s22, 0
    %p160 = por %p158, %p159
    %s162 = sadd.s32 %s161, 1
    %p165 = scmp.eq.s32.totalorder %s16, 1
    %p166 = scmp.ne.s32.totalorder %s161, %s163
    %p167 = scmp.eq.s32.totalorder %s16, 0
    %p168 = por %p166, %p167
    %p169 = scmp.ne.s32.totalorder %s161, %s163
    %p170 = scmp.eq.s32.totalorder %s21, 1
    %p171 = por %p169, %p170
    %p172 = scmp.ne.s32.totalorder %s163, %s164
    %p173 = scmp.eq.s32.totalorder %s21, 0
    %p174 = por %p172, %p173
    %p175 = scmp.ne.s32.totalorder %s163, %s164
    %p176 = scmp.eq.s32.totalorder %s22, 1
    %p177 = por %p175, %p176
    %p179 = scmp.ne.s32.totalorder %s164, %s178
    %p180 = scmp.eq.s32.totalorder %s22, 0
    %p181 = por %p179, %p180
    %s183 = sadd.s32 %s182, 1
    %p186 = scmp.eq.s32.totalorder %s16, 1
    %p187 = scmp.ne.s32.totalorder %s182, %s184
    %p188 = scmp.eq.s32.totalorder %s16, 0
    %p189 = por %p187, %p188
    %p190 = scmp.ne.s32.totalorder %s182, %s184
    %p191 = scmp.eq.s32.totalorder %s21, 1
    %p192 = por %p190, %p191
    %p193 = scmp.ne.s32.totalorder %s184, %s185
    %p194 = scmp.eq.s32.totalorder %s21, 0
    %p195 = por %p193, %p194
    %p196 = scmp.ne.s32.totalorder %s184, %s185
    %p197 = scmp.eq.s32.totalorder %s22, 1
    %p198 = por %p196, %p197
    %p200 = scmp.ne.s32.totalorder %s185, %s199
    %p201 = scmp.eq.s32.totalorder %s22, 0
    %p202 = por %p200, %p201
    %s204 = sadd.s32 %s203, 1
    %p207 = scmp.eq.s32.totalorder %s16, 1
    %p208 = scmp.ne.s32.totalorder %s203, %s205
    %p209 = scmp.eq.s32.totalorder %s16, 0
    %p210 = por %p208, %p209
    %p211 = scmp.ne.s32.totalorder %s203, %s205
    %p212 = scmp.eq.s32.totalorder %s21, 1
    %p213 = por %p211, %p212
    %p214 = scmp.ne.s32.totalorder %s205, %s206
    %p215 = scmp.eq.s32.totalorder %s21, 0
    %p216 = por %p214, %p215
    %p217 = scmp.ne.s32.totalorder %s205, %s206
    %p218 = scmp.eq.s32.totalorder %s22, 1
    %p219 = por %p217, %p218
    %p221 = scmp.ne.s32.totalorder %s206, %s220
    %p222 = scmp.eq.s32.totalorder %s22, 0
    %p223 = por %p221, %p222
    %s224 = ssub.s32 %s23, %s35
    %s225 = ssub.s32 %s24, %s31
    %s226 = sor.u32 %s224, %s225
    %p227 = scmp.eq.s32.totalorder %s226, 0
    %s229 = sadd.s32 %s228, 1
    %s230 = scalar_select %p227, %s228, %s229
    %p233 = pneg %p227
    %p234 = scmp.eq.s32.totalorder %s16, 1
    %p235 = por %p233, %p234
    %p236 = scmp.ne.s32.totalorder %s228, %s231
    %p237 = scmp.eq.s32.totalorder %s16, 0
    %p238 = por %p236, %p237
    %p239 = scmp.ne.s32.totalorder %s228, %s231
    %p240 = scmp.eq.s32.totalorder %s21, 1
    %p241 = por %p239, %p240
    %p242 = scmp.ne.s32.totalorder %s231, %s232
    %p243 = scmp.eq.s32.totalorder %s21, 0
    %p244 = por %p242, %p243
    %p245 = scmp.ne.s32.totalorder %s231, %s232
    %p246 = scmp.eq.s32.totalorder %s22, 1
    %p247 = por %p245, %p246
    %p249 = scmp.ne.s32.totalorder %s232, %s248
    %p250 = scmp.eq.s32.totalorder %s22, 0
    %p251 = por %p249, %p250
    %s252 = ssub.s32 %s23, %s35
    %s253 = ssub.s32 %s24, %s31
    %s254 = sor.u32 %s252, %s253
    %p255 = scmp.eq.s32.totalorder %s254, 0
    %s257 = sadd.s32 %s256, 1
    %s258 = scalar_select %p255, %s256, %s257
    %p261 = pneg %p255
    %p262 = scmp.eq.s32.totalorder %s16, 1
    %p263 = por %p261, %p262
    %p264 = scmp.ne.s32.totalorder %s256, %s259
    %p265 = scmp.eq.s32.totalorder %s16, 0
    %p266 = por %p264, %p265
    %p267 = scmp.ne.s32.totalorder %s256, %s259
    %p268 = scmp.eq.s32.totalorder %s21, 1
    %p269 = por %p267, %p268
    %p270 = scmp.ne.s32.totalorder %s259, %s260
    %p271 = scmp.eq.s32.totalorder %s21, 0
    %p272 = por %p270, %p271
    %p273 = scmp.ne.s32.totalorder %s259, %s260
    %p274 = scmp.eq.s32.totalorder %s22, 1
    %p275 = por %p273, %p274
    %p277 = scmp.ne.s32.totalorder %s260, %s276
    %p278 = scmp.eq.s32.totalorder %s22, 0
    %p279 = por %p277, %p278
    %p280 = scmp.le.s32.totalorder 1, %s16
    %p281 = scmp.lt.s32.totalorder %s16, 3
    %p282 = pnand %p280, %p281
    %p283 = pneg %p282
    // Predicated region
    $region9: #{base_block_forward.2} parent=5 // pred_check
      _
    $region10: #{base_block_forward.2} parent=5 // pred_check_branch
      %285 = sbr.rel (%p282) target = $region12
    $region11: #{base_block_forward.2} parent=5 // pred_region
      %s286 = ssub.s32 %s16, 1
      // Predicated region
      $region13: #{base_block_forward.2} parent=11 // pred_check
        %p287 = pneg %p153
      $region14: #{base_block_forward.2} parent=11 // pred_check_branch
        %289 = sbr.rel (%p287) target = $region16
      $region15: #{base_block_forward.2} parent=11 // pred_region
        _
      $region16: #{base_block_forward.2} parent=11 // pred_fallthru
        _
      // Predicated region
      $region17: #{base_block_forward.2} parent=11 // pred_check
        %p290 = pneg %p174
      $region18: #{base_block_forward.2} parent=11 // pred_check_branch
        %292 = sbr.rel (%p290) target = $region20
      $region19: #{base_block_forward.2} parent=11 // pred_region
        _
      $region20: #{base_block_forward.2} parent=11 // pred_fallthru
        _
      // Predicated region
      $region21: #{base_block_forward.2} parent=11 // pred_check
        %p293 = pneg %p195
      $region22: #{base_block_forward.2} parent=11 // pred_check_branch
        %295 = sbr.rel (%p293) target = $region24
      $region23: #{base_block_forward.2} parent=11 // pred_region
        _
      $region24: #{base_block_forward.2} parent=11 // pred_fallthru
        _
      // Predicated region
      $region25: #{base_block_forward.2} parent=11 // pred_check
        %p296 = pneg %p216
      $region26: #{base_block_forward.2} parent=11 // pred_check_branch
        %298 = sbr.rel (%p296) target = $region28
      $region27: #{base_block_forward.2} parent=11 // pred_region
        _
      $region28: #{base_block_forward.2} parent=11 // pred_fallthru
        _
    $region12: #{base_block_forward.2} parent=5 // pred_fallthru
      _
    %p299 = scmp.lt.s32.totalorder %s16, 2
    // Predicated region
    $region29: #{base_block_forward.2} parent=5 // pred_check
      %p300 = pneg %p299
    $region30: #{base_block_forward.2} parent=5 // pred_check_branch
      %302 = sbr.rel (%p300) target = $region32
    $region31: #{base_block_forward.2} parent=5 // pred_region
      // Predicated region
      $region33: #{base_block_forward.2} parent=31 // pred_check
        %p303 = pneg %p48
      $region34: #{base_block_forward.2} parent=31 // pred_check_branch
        %305 = sbr.rel (%p303) target = $region36
      $region35: #{base_block_forward.2} parent=31 // pred_region
        %p306 = scmp.lt.s32.totalorder %s23, 1
        %s307 = scalar_select %p306, %s23, 1
        %s308 = smul.addr %s307, 18
        %s309 = smul.addr %s308, 8
        %s310 = scalar_lea.vmem %s0, %s309
      $region36: #{base_block_forward.2} parent=31 // pred_fallthru
        _
      // Predicated region
      $region37: #{base_block_forward.2} parent=31 // pred_check
        %p311 = pneg %p74
      $region38: #{base_block_forward.2} parent=31 // pred_check_branch
        %313 = sbr.rel (%p311) target = $region40
      $region39: #{base_block_forward.2} parent=31 // pred_region
        %p314 = scmp.lt.s32.totalorder %s23, 1
        %s315 = scalar_select %p314, %s23, 1
        %s316 = smul.addr %s315, 18
        %s317 = smul.addr %s316, 8
        %s318 = scalar_lea.vmem %s1, %s317
      $region40: #{base_block_forward.2} parent=31 // pred_fallthru
        _
      // Predicated region
      $region41: #{base_block_forward.2} parent=31 // pred_check
        %p319 = pneg %p100
      $region42: #{base_block_forward.2} parent=31 // pred_check_branch
        %321 = sbr.rel (%p319) target = $region44
      $region43: #{base_block_forward.2} parent=31 // pred_region
        %p322 = scmp.lt.s32.totalorder %s23, 1
        %s323 = scalar_select %p322, %s23, 1
        %s324 = smul.addr %s323, 18
        %s325 = smul.addr %s324, 8
        %s326 = scalar_lea.vmem %s2, %s325
      $region44: #{base_block_forward.2} parent=31 // pred_fallthru
        _
      // Predicated region
      $region45: #{base_block_forward.2} parent=31 // pred_check
        %p327 = pneg %p126
      $region46: #{base_block_forward.2} parent=31 // pred_check_branch
        %329 = sbr.rel (%p327) target = $region48
      $region47: #{base_block_forward.2} parent=31 // pred_region
        %p330 = scmp.lt.s32.totalorder %s23, 1
        %s331 = scalar_select %p330, %s23, 1
        %s332 = smul.addr %s331, 18
        %s333 = smul.addr %s332, 8
        %s334 = scalar_lea.vmem %s3, %s333
      $region48: #{base_block_forward.2} parent=31 // pred_fallthru
        _
    $region32: #{base_block_forward.2} parent=5 // pred_fallthru
      _
    %p335 = scmp.le.s32.totalorder 1, %s16
    %p336 = scmp.lt.s32.totalorder %s16, 3
    %p337 = pnand %p335, %p336
    %p338 = pneg %p337
    // Predicated region
    $region49: #{base_block_forward.2} parent=5 // pred_check
      _
    $region50: #{base_block_forward.2} parent=5 // pred_check_branch
      %340 = sbr.rel (%p337) target = $region52
    $region51: #{base_block_forward.2} parent=5 // pred_region
      %s341 = ssub.s32 %s16, 1
      %p342 = scmp.lt.s32.totalorder %s25, 1
      %s343 = scalar_select %p342, %s25, 1
      %s344 = smul.addr %s343, 18
      %s345 = smul.addr %s344, 8
      %s346 = scalar_lea.vmem %s0, %s345
      %p347 = pneg %p54
      %p348 = pneg %p51
      %p349 = scmp.lt.s32.totalorder %s25, 1
      %s350 = scalar_select %p349, %s25, 1
      %s351 = smul.addr %s350, 18
      %s352 = smul.addr %s351, 8
      %s353 = scalar_lea.vmem %s1, %s352
      %p354 = pneg %p80
      %p355 = pneg %p77
      %p356 = scmp.lt.s32.totalorder %s25, 1
      %s357 = scalar_select %p356, %s25, 1
      %s358 = smul.addr %s357, 18
      %s359 = smul.addr %s358, 8
      %s360 = scalar_lea.vmem %s2, %s359
      %p361 = pneg %p106
      %p362 = pneg %p103
      %p363 = scmp.lt.s32.totalorder %s25, 1
      %s364 = scalar_select %p363, %s25, 1
      %s365 = smul.addr %s364, 18
      %s366 = smul.addr %s365, 8
      %s367 = scalar_lea.vmem %s3, %s366
      %p368 = pneg %p132
      %p369 = pneg %p129
      %p370 = pneg %p153
      %p371 = pneg %p150
      %p372 = pneg %p174
      %p373 = pneg %p171
      %p374 = pneg %p195
      %p375 = pneg %p192
      %p376 = pneg %p216
      %p377 = pneg %p213
      %p378 = pneg %p244
      %p379 = pneg %p241
      %s380 = smul.u32 8, %s26
      %p381 = scmp.lt.s32.totalorder %s25, 1
      %s382 = scalar_select %p381, %s25, 1
      %p383 = scmp.lt.s32.totalorder %s380, 7
      %s384 = scalar_select %p383, %s380, 7
      %s385 = smul.addr %s382, 8
      %s386 = sadd.s32 %s384, %s385
      %s387 = smul.addr %s386, 8
      %s388 = scalar_lea.vmem %s8, %s387
      %p389 = pneg %p272
      %p390 = pneg %p269
      %s391 = smul.u32 8, %s26
      %p392 = scmp.lt.s32.totalorder %s25, 1
      %s393 = scalar_select %p392, %s25, 1
      %p394 = scmp.lt.s32.totalorder %s391, 7
      %s395 = scalar_select %p394, %s391, 7
      %s396 = smul.addr %s393, 8
      %s397 = sadd.s32 %s395, %s396
      %s398 = smul.addr %s397, 8
      %s399 = scalar_lea.vmem %s9, %s398
      %p400 = scmp.lt.s32.totalorder %s25, 1
      %s401 = scalar_select %p400, %s25, 1
      %s402 = smul.addr %s401, 18
      %s403 = smul.addr %s402, 8
      %s404 = scalar_lea.vmem %s0, %s403
      %p405 = scmp.lt.s32.totalorder %s25, 1
      %s406 = scalar_select %p405, %s25, 1
      %s407 = smul.addr %s406, 18
      %s408 = smul.addr %s407, 8
      %s409 = scalar_lea.vmem %s1, %s408
      %p410 = scmp.lt.s32.totalorder %s25, 1
      %s411 = scalar_select %p410, %s25, 1
      %s412 = smul.addr %s411, 18
      %s413 = smul.addr %s412, 8
      %s414 = scalar_lea.vmem %s2, %s413
      %p415 = scmp.lt.s32.totalorder %s25, 1
      %s416 = scalar_select %p415, %s25, 1
      %s417 = smul.addr %s416, 18
      %s418 = smul.addr %s417, 8
      %s419 = scalar_lea.vmem %s3, %s418
      %s420 = smul.u32 8, %s26
      %p421 = scmp.lt.s32.totalorder %s25, 1
      %s422 = scalar_select %p421, %s25, 1
      %p423 = scmp.lt.s32.totalorder %s420, 7
      %s424 = scalar_select %p423, %s420, 7
      %s425 = smul.addr %s422, 8
      %s426 = sadd.s32 %s424, %s425
      %s427 = smul.addr %s426, 8
      %s428 = scalar_lea.vmem %s8, %s427
      %s429 = smul.u32 8, %s26
      %s430 = smul.u32 8, %s26
      %p431 = scmp.lt.s32.totalorder %s25, 1
      %s432 = scalar_select %p431, %s25, 1
      %p433 = scmp.lt.s32.totalorder %s430, 7
      %s434 = scalar_select %p433, %s430, 7
      %s435 = smul.addr %s432, 8
      %s436 = sadd.s32 %s434, %s435
      %s437 = smul.addr %s436, 8
      %s438 = scalar_lea.vmem %s9, %s437
      %s439 = smul.u32 8, %s26
      %s441 = smul.u32 %s26, 8
      %v442 = vld [vmem:[%s5] sm:$0x1]
      %v443 = vld [vmem:[%s6] sm:$0x1]
      %s444 = smul.u32 %s441, 16
      %s445 = scalar_lea.vmem %s404, %s444
      %v446 = vld [vmem:[%s445] sm:$0xff]
      %v447 = vld [vmem:[%s445 + $0x8] sm:$0x1]
      %v448 = vld [vmem:[%s445 + $0x10] sm:$0xff]
      %v449 = vld [vmem:[%s445 + $0x18] sm:$0x1]
      %v450 = vld [vmem:[%s445 + $0x20] sm:$0xff]
      %v451 = vld [vmem:[%s445 + $0x28] sm:$0x1]
      %v452 = vld [vmem:[%s445 + $0x30] sm:$0xff]
      %v453 = vld [vmem:[%s445 + $0x38] sm:$0x1]
      %v454 = vld [vmem:[%s445 + $0x40] sm:$0xff]
      %v455 = vld [vmem:[%s445 + $0x48] sm:$0x1]
      %v456 = vld [vmem:[%s445 + $0x50] sm:$0xff]
      %v457 = vld [vmem:[%s445 + $0x58] sm:$0x1]
      %v458 = vld [vmem:[%s445 + $0x60] sm:$0xff]
      %v459 = vld [vmem:[%s445 + $0x68] sm:$0x1]
      %v460 = vld [vmem:[%s445 + $0x70] sm:$0xff]
      %v461 = vld [vmem:[%s445 + $0x78] sm:$0x1]
      %v462 = vld [vmem:[%s445 + $0x80] sm:$0xff]
      %v463 = vld [vmem:[%s445 + $0x88] sm:$0x1]
      %v465 = vlaneseq
      %v466 = vshrl.u32 %v465, 7
      %v467 = vsub.s32 0, %v466
      %v468 = vrot.slane %v442, %v467
      %v470 = vmul.f32 %v446, %v468
      %v471 = vmul.f32 %v447, %v468
      %v472 = vmul.f32 %v448, %v468
      %v473 = vmul.f32 %v449, %v468
      %v474 = vmul.f32 %v450, %v468
      %v475 = vmul.f32 %v451, %v468
      %v476 = vmul.f32 %v452, %v468
      %v477 = vmul.f32 %v453, %v468
      %v478 = vmul.f32 %v454, %v468
      %v479 = vmul.f32 %v455, %v468
      %v480 = vmul.f32 %v456, %v468
      %v481 = vmul.f32 %v457, %v468
      %v482 = vmul.f32 %v458, %v468
      %v483 = vmul.f32 %v459, %v468
      %v484 = vmul.f32 %v460, %v468
      %v485 = vmul.f32 %v461, %v468
      %v486 = vmul.f32 %v462, %v468
      %v487 = vmul.f32 %v463, %v468
      %v489 = vlaneseq
      %v490 = vshrl.u32 %v489, 7
      %v491 = vsub.s32 0, %v490
      %v492 = vrot.slane %v443, %v491
      %v494 = vadd.f32 %v470, %v492
      %v495 = vadd.f32 %v471, %v492
      %v496 = vadd.f32 %v472, %v492
      %v497 = vadd.f32 %v473, %v492
      %v498 = vadd.f32 %v474, %v492
      %v499 = vadd.f32 %v475, %v492
      %v500 = vadd.f32 %v476, %v492
      %v501 = vadd.f32 %v477, %v492
      %v502 = vadd.f32 %v478, %v492
      %v503 = vadd.f32 %v479, %v492
      %v504 = vadd.f32 %v480, %v492
      %v505 = vadd.f32 %v481, %v492
      %v506 = vadd.f32 %v482, %v492
      %v507 = vadd.f32 %v483, %v492
      %v508 = vadd.f32 %v484, %v492
      %v509 = vadd.f32 %v485, %v492
      %v510 = vadd.f32 %v486, %v492
      %v511 = vadd.f32 %v487, %v492
      %v512 = vmax.f32 %v494, 0.0
      %v513 = vmax.f32 %v495, 0.0
      %v514 = vmax.f32 %v496, 0.0
      %v515 = vmax.f32 %v497, 0.0
      %v516 = vmax.f32 %v498, 0.0
      %v517 = vmax.f32 %v499, 0.0
      %v518 = vmax.f32 %v500, 0.0
      %v519 = vmax.f32 %v501, 0.0
      %v520 = vmax.f32 %v502, 0.0
      %v521 = vmax.f32 %v503, 0.0
      %v522 = vmax.f32 %v504, 0.0
      %v523 = vmax.f32 %v505, 0.0
      %v524 = vmax.f32 %v506, 0.0
      %v525 = vmax.f32 %v507, 0.0
      %v526 = vmax.f32 %v508, 0.0
      %v527 = vmax.f32 %v509, 0.0
      %v528 = vmax.f32 %v510, 0.0
      %v529 = vmax.f32 %v511, 0.0
      %v530 = vlaneseq
      %v531 = vshrl.u32 %v530, 7
      %v532 = vadd.s32 %v531, 8
      %v533 = vstv %s441
      %v534 = vadd.s32 %v533, 1
      %v535 = vadd.s32 %v533, 2
      %v536 = vadd.s32 %v533, 3
      %v537 = vadd.s32 %v533, 4
      %v538 = vadd.s32 %v533, 5
      %v539 = vadd.s32 %v533, 6
      %v540 = vadd.s32 %v533, 7
      %v541 = vadd.s32 %v533, 8
      %v542 = vmul.u32 %v533, 2
      %v543 = vmul.u32 %v534, 2
      %v544 = vmul.u32 %v535, 2
      %v545 = vmul.u32 %v536, 2
      %v546 = vmul.u32 %v537, 2
      %v547 = vmul.u32 %v538, 2
      %v548 = vmul.u32 %v539, 2
      %v549 = vmul.u32 %v540, 2
      %v550 = vmul.u32 %v541, 2
      %v551 = vmul.u32 %v531, 2
      %v552 = vmul.u32 %v532, 2
      %vm553 = vcmp.gt.s32.totalorder %v542, 0
      %vm554 = vcmp.gt.s32.totalorder %v543, 0
      %vm555 = vcmp.gt.s32.totalorder %v544, 0
      %vm556 = vcmp.gt.s32.totalorder %v545, 0
      %vm557 = vcmp.gt.s32.totalorder %v546, 0
      %vm558 = vcmp.gt.s32.totalorder %v547, 0
      %vm559 = vcmp.gt.s32.totalorder %v548, 0
      %vm560 = vcmp.gt.s32.totalorder %v549, 0
      %vm561 = vcmp.gt.s32.totalorder %v550, 0
      %vm562 = vcmp.lt.s32.totalorder %v542, 17
      %vm563 = vcmp.lt.s32.totalorder %v543, 17
      %vm564 = vcmp.lt.s32.totalorder %v544, 17
      %vm565 = vcmp.lt.s32.totalorder %v545, 17
      %vm566 = vcmp.lt.s32.totalorder %v546, 17
      %vm567 = vcmp.lt.s32.totalorder %v547, 17
      %vm568 = vcmp.lt.s32.totalorder %v548, 17
      %vm569 = vcmp.lt.s32.totalorder %v549, 17
      %vm570 = vcmp.lt.s32.totalorder %v550, 17
      %vm571 = vmand %vm553, %vm562
      %vm572 = vmand %vm554, %vm563
      %vm573 = vmand %vm555, %vm564
      %vm574 = vmand %vm556, %vm565
      %vm575 = vmand %vm557, %vm566
      %vm576 = vmand %vm558, %vm567
      %vm577 = vmand %vm559, %vm568
      %vm578 = vmand %vm560, %vm569
      %vm579 = vmand %vm561, %vm570
      %vm580 = vcmp.gt.s32.totalorder %v551, 0
      %vm581 = vcmp.gt.s32.totalorder %v552, 0
      %vm582 = vmand %vm571, %vm580
      %vm583 = vmand %vm571, %vm581
      %vm584 = vmand %vm572, %vm580
      %vm585 = vmand %vm572, %vm581
      %vm586 = vmand %vm573, %vm580
      %vm587 = vmand %vm573, %vm581
      %vm588 = vmand %vm574, %vm580
      %vm589 = vmand %vm574, %vm581
      %vm590 = vmand %vm575, %vm580
      %vm591 = vmand %vm575, %vm581
      %vm592 = vmand %vm576, %vm580
      %vm593 = vmand %vm576, %vm581
      %vm594 = vmand %vm577, %vm580
      %vm595 = vmand %vm577, %vm581
      %vm596 = vmand %vm578, %vm580
      %vm597 = vmand %vm578, %vm581
      %vm598 = vmand %vm579, %vm580
      %vm599 = vmand %vm579, %vm581
      %vm600 = vcmp.lt.s32.totalorder %v551, 17
      %vm601 = vcmp.lt.s32.totalorder %v552, 17
      %vm602 = vmand %vm582, %vm600
      %vm603 = vmand %vm583, %vm601
      %vm604 = vmand %vm584, %vm600
      %vm605 = vmand %vm585, %vm601
      %vm606 = vmand %vm586, %vm600
      %vm607 = vmand %vm587, %vm601
      %vm608 = vmand %vm588, %vm600
      %vm609 = vmand %vm589, %vm601
      %vm610 = vmand %vm590, %vm600
      %vm611 = vmand %vm591, %vm601
      %vm612 = vmand %vm592, %vm600
      %vm613 = vmand %vm593, %vm601
      %vm614 = vmand %vm594, %vm600
      %vm615 = vmand %vm595, %vm601
      %vm616 = vmand %vm596, %vm600
      %vm617 = vmand %vm597, %vm601
      %vm618 = vmand %vm598, %vm600
      %vm619 = vmand %vm599, %vm601
      %v620 = vsel %vm602, 1, 0
      %v621 = vsel %vm603, 1, 0
      %v622 = vsel %vm604, 1, 0
      %v623 = vsel %vm605, 1, 0
      %v624 = vsel %vm606, 1, 0
      %v625 = vsel %vm607, 1, 0
      %v626 = vsel %vm608, 1, 0
      %v627 = vsel %vm609, 1, 0
      %v628 = vsel %vm610, 1, 0
      %v629 = vsel %vm611, 1, 0
      %v630 = vsel %vm612, 1, 0
      %v631 = vsel %vm613, 1, 0
      %v632 = vsel %vm614, 1, 0
      %v633 = vsel %vm615, 1, 0
      %v634 = vsel %vm616, 1, 0
      %v635 = vsel %vm617, 1, 0
      %v636 = vsel %vm618, 1, 0
      %v637 = vsel %vm619, 1, 0
      %vm638 = vcmp.eq.s32.totalorder %v620, 1
      %vm639 = vcmp.eq.s32.totalorder %v621, 1
      %vm640 = vcmp.eq.s32.totalorder %v622, 1
      %vm641 = vcmp.eq.s32.totalorder %v623, 1
      %vm642 = vcmp.eq.s32.totalorder %v624, 1
      %vm643 = vcmp.eq.s32.totalorder %v625, 1
      %vm644 = vcmp.eq.s32.totalorder %v626, 1
      %vm645 = vcmp.eq.s32.totalorder %v627, 1
      %vm646 = vcmp.eq.s32.totalorder %v628, 1
      %vm647 = vcmp.eq.s32.totalorder %v629, 1
      %vm648 = vcmp.eq.s32.totalorder %v630, 1
      %vm649 = vcmp.eq.s32.totalorder %v631, 1
      %vm650 = vcmp.eq.s32.totalorder %v632, 1
      %vm651 = vcmp.eq.s32.totalorder %v633, 1
      %vm652 = vcmp.eq.s32.totalorder %v634, 1
      %vm653 = vcmp.eq.s32.totalorder %v635, 1
      %vm654 = vcmp.eq.s32.totalorder %v636, 1
      %vm655 = vcmp.eq.s32.totalorder %v637, 1
      %v656 = vsel %vm638, %v512, 0.0
      %v657 = vsel %vm639, %v513, 0.0
      %v658 = vsel %vm640, %v514, 0.0
      %v659 = vsel %vm641, %v515, 0.0
      %v660 = vsel %vm642, %v516, 0.0
      %v661 = vsel %vm643, %v517, 0.0
      %v662 = vsel %vm644, %v518, 0.0
      %v663 = vsel %vm645, %v519, 0.0
      %v664 = vsel %vm646, %v520, 0.0
      %v665 = vsel %vm647, %v521, 0.0
      %v666 = vsel %vm648, %v522, 0.0
      %v667 = vsel %vm649, %v523, 0.0
      %v668 = vsel %vm650, %v524, 0.0
      %v669 = vsel %vm651, %v525, 0.0
      %v670 = vsel %vm652, %v526, 0.0
      %v671 = vsel %vm653, %v527, 0.0
      %v672 = vsel %vm654, %v528, 0.0
      %v673 = vsel %vm655, %v529, 0.0
      %s674 = scalar_lea.vmem %s409, %s444
      %v675 = vld [vmem:[%s674] sm:$0xff]
      %v676 = vld [vmem:[%s674 + $0x10] sm:$0xff]
      %v677 = vld [vmem:[%s674 + $0x20] sm:$0xff]
      %v678 = vld [vmem:[%s674 + $0x30] sm:$0xff]
      %v679 = vld [vmem:[%s674 + $0x40] sm:$0xff]
      %v680 = vld [vmem:[%s674 + $0x50] sm:$0xff]
      %v681 = vld [vmem:[%s674 + $0x60] sm:$0xff]
      %v682 = vld [vmem:[%s674 + $0x70] sm:$0xff]
      %v683 = vld [vmem:[%s674 + $0x80] sm:$0xff]
      %v684 = vmul.f32 %v675, %v468
      %v685 = vmul.f32 %v676, %v468
      %v686 = vmul.f32 %v677, %v468
      %v687 = vmul.f32 %v678, %v468
      %v688 = vmul.f32 %v679, %v468
      %v689 = vmul.f32 %v680, %v468
      %v690 = vmul.f32 %v681, %v468
      %v691 = vmul.f32 %v682, %v468
      %v692 = vmul.f32 %v683, %v468
      %v693 = vadd.f32 %v684, %v492
      %v694 = vadd.f32 %v685, %v492
      %v695 = vadd.f32 %v686, %v492
      %v696 = vadd.f32 %v687, %v492
      %v697 = vadd.f32 %v688, %v492
      %v698 = vadd.f32 %v689, %v492
      %v699 = vadd.f32 %v690, %v492
      %v700 = vadd.f32 %v691, %v492
      %v701 = vadd.f32 %v692, %v492
      %v702 = vmax.f32 %v693, 0.0
      %v703 = vmax.f32 %v694, 0.0
      %v704 = vmax.f32 %v695, 0.0
      %v705 = vmax.f32 %v696, 0.0
      %v706 = vmax.f32 %v697, 0.0
      %v707 = vmax.f32 %v698, 0.0
      %v708 = vmax.f32 %v699, 0.0
      %v709 = vmax.f32 %v700, 0.0
      %v710 = vmax.f32 %v701, 0.0
      %v711 = vadd.s32 %v551, 1
      %vm712 = vcmp.gt.s32.totalorder %v711, 0
      %vm713 = vmand %vm571, %vm712
      %vm714 = vmand %vm572, %vm712
      %vm715 = vmand %vm573, %vm712
      %vm716 = vmand %vm574, %vm712
      %vm717 = vmand %vm575, %vm712
      %vm718 = vmand %vm576, %vm712
      %vm719 = vmand %vm577, %vm712
      %vm720 = vmand %vm578, %vm712
      %vm721 = vmand %vm579, %vm712
      %vm722 = vcmp.lt.s32.totalorder %v711, 17
      %vm723 = vmand %vm713, %vm722
      %vm724 = vmand %vm714, %vm722
      %vm725 = vmand %vm715, %vm722
      %vm726 = vmand %vm716, %vm722
      %vm727 = vmand %vm717, %vm722
      %vm728 = vmand %vm718, %vm722
      %vm729 = vmand %vm719, %vm722
      %vm730 = vmand %vm720, %vm722
      %vm731 = vmand %vm721, %vm722
      %v732 = vsel %vm723, 1, 0
      %v733 = vsel %vm724, 1, 0
      %v734 = vsel %vm725, 1, 0
      %v735 = vsel %vm726, 1, 0
      %v736 = vsel %vm727, 1, 0
      %v737 = vsel %vm728, 1, 0
      %v738 = vsel %vm729, 1, 0
      %v739 = vsel %vm730, 1, 0
      %v740 = vsel %vm731, 1, 0
      %vm741 = vcmp.eq.s32.totalorder %v732, 1
      %vm742 = vcmp.eq.s32.totalorder %v733, 1
      %vm743 = vcmp.eq.s32.totalorder %v734, 1
      %vm744 = vcmp.eq.s32.totalorder %v735, 1
      %vm745 = vcmp.eq.s32.totalorder %v736, 1
      %vm746 = vcmp.eq.s32.totalorder %v737, 1
      %vm747 = vcmp.eq.s32.totalorder %v738, 1
      %vm748 = vcmp.eq.s32.totalorder %v739, 1
      %vm749 = vcmp.eq.s32.totalorder %v740, 1
      %v750 = vsel %vm741, %v702, 0.0
      %v751 = vsel %vm742, %v703, 0.0
      %v752 = vsel %vm743, %v704, 0.0
      %v753 = vsel %vm744, %v705, 0.0
      %v754 = vsel %vm745, %v706, 0.0
      %v755 = vsel %vm746, %v707, 0.0
      %v756 = vsel %vm747, %v708, 0.0
      %v757 = vsel %vm748, %v709, 0.0
      %v758 = vsel %vm749, %v710, 0.0
      %s759 = scalar_lea.vmem %s414, %s444
      %v760 = vld [vmem:[%s759] sm:$0xff]
      %v761 = vld [vmem:[%s759 + $0x8] sm:$0x1]
      %v762 = vld [vmem:[%s759 + $0x10] sm:$0xff]
      %v763 = vld [vmem:[%s759 + $0x18] sm:$0x1]
      %v764 = vld [vmem:[%s759 + $0x20] sm:$0xff]
      %v765 = vld [vmem:[%s759 + $0x28] sm:$0x1]
      %v766 = vld [vmem:[%s759 + $0x30] sm:$0xff]
      %v767 = vld [vmem:[%s759 + $0x38] sm:$0x1]
      %v768 = vld [vmem:[%s759 + $0x40] sm:$0xff]
      %v769 = vld [vmem:[%s759 + $0x48] sm:$0x1]
      %v770 = vld [vmem:[%s759 + $0x50] sm:$0xff]
      %v771 = vld [vmem:[%s759 + $0x58] sm:$0x1]
      %v772 = vld [vmem:[%s759 + $0x60] sm:$0xff]
      %v773 = vld [vmem:[%s759 + $0x68] sm:$0x1]
      %v774 = vld [vmem:[%s759 + $0x70] sm:$0xff]
      %v775 = vld [vmem:[%s759 + $0x78] sm:$0x1]
      %v776 = vmul.f32 %v760, %v468
      %v777 = vmul.f32 %v761, %v468
      %v778 = vmul.f32 %v762, %v468
      %v779 = vmul.f32 %v763, %v468
      %v780 = vmul.f32 %v764, %v468
      %v781 = vmul.f32 %v765, %v468
      %v782 = vmul.f32 %v766, %v468
      %v783 = vmul.f32 %v767, %v468
      %v784 = vmul.f32 %v768, %v468
      %v785 = vmul.f32 %v769, %v468
      %v786 = vmul.f32 %v770, %v468
      %v787 = vmul.f32 %v771, %v468
      %v788 = vmul.f32 %v772, %v468
      %v789 = vmul.f32 %v773, %v468
      %v790 = vmul.f32 %v774, %v468
      %v791 = vmul.f32 %v775, %v468
      %v792 = vadd.f32 %v776, %v492
      %v793 = vadd.f32 %v777, %v492
      %v794 = vadd.f32 %v778, %v492
      %v795 = vadd.f32 %v779, %v492
      %v796 = vadd.f32 %v780, %v492
      %v797 = vadd.f32 %v781, %v492
      %v798 = vadd.f32 %v782, %v492
      %v799 = vadd.f32 %v783, %v492
      %v800 = vadd.f32 %v784, %v492
      %v801 = vadd.f32 %v785, %v492
      %v802 = vadd.f32 %v786, %v492
      %v803 = vadd.f32 %v787, %v492
      %v804 = vadd.f32 %v788, %v492
      %v805 = vadd.f32 %v789, %v492
      %v806 = vadd.f32 %v790, %v492
      %v807 = vadd.f32 %v791, %v492
      %v808 = vmax.f32 %v792, 0.0
      %v809 = vmax.f32 %v793, 0.0
      %v810 = vmax.f32 %v794, 0.0
      %v811 = vmax.f32 %v795, 0.0
      %v812 = vmax.f32 %v796, 0.0
      %v813 = vmax.f32 %v797, 0.0
      %v814 = vmax.f32 %v798, 0.0
      %v815 = vmax.f32 %v799, 0.0
      %v816 = vmax.f32 %v800, 0.0
      %v817 = vmax.f32 %v801, 0.0
      %v818 = vmax.f32 %v802, 0.0
      %v819 = vmax.f32 %v803, 0.0
      %v820 = vmax.f32 %v804, 0.0
      %v821 = vmax.f32 %v805, 0.0
      %v822 = vmax.f32 %v806, 0.0
      %v823 = vmax.f32 %v807, 0.0
      %v824 = vadd.s32 %v542, 1
      %v825 = vadd.s32 %v543, 1
      %v826 = vadd.s32 %v544, 1
      %v827 = vadd.s32 %v545, 1
      %v828 = vadd.s32 %v546, 1
      %v829 = vadd.s32 %v547, 1
      %v830 = vadd.s32 %v548, 1
      %v831 = vadd.s32 %v549, 1
      %vm832 = vcmp.gt.s32.totalorder %v824, 0
      %vm833 = vcmp.gt.s32.totalorder %v825, 0
      %vm834 = vcmp.gt.s32.totalorder %v826, 0
      %vm835 = vcmp.gt.s32.totalorder %v827, 0
      %vm836 = vcmp.gt.s32.totalorder %v828, 0
      %vm837 = vcmp.gt.s32.totalorder %v829, 0
      %vm838 = vcmp.gt.s32.totalorder %v830, 0
      %vm839 = vcmp.gt.s32.totalorder %v831, 0
      %vm840 = vcmp.lt.s32.totalorder %v824, 17
      %vm841 = vcmp.lt.s32.totalorder %v825, 17
      %vm842 = vcmp.lt.s32.totalorder %v826, 17
      %vm843 = vcmp.lt.s32.totalorder %v827, 17
      %vm844 = vcmp.lt.s32.totalorder %v828, 17
      %vm845 = vcmp.lt.s32.totalorder %v829, 17
      %vm846 = vcmp.lt.s32.totalorder %v830, 17
      %vm847 = vcmp.lt.s32.totalorder %v831, 17
      %vm848 = vmand %vm832, %vm840
      %vm849 = vmand %vm833, %vm841
      %vm850 = vmand %vm834, %vm842
      %vm851 = vmand %vm835, %vm843
      %vm852 = vmand %vm836, %vm844
      %vm853 = vmand %vm837, %vm845
      %vm854 = vmand %vm838, %vm846
      %vm855 = vmand %vm839, %vm847
      %vm856 = vmand %vm848, %vm580
      %vm857 = vmand %vm848, %vm581
      %vm858 = vmand %vm849, %vm580
      %vm859 = vmand %vm849, %vm581
      %vm860 = vmand %vm850, %vm580
      %vm861 = vmand %vm850, %vm581
      %vm862 = vmand %vm851, %vm580
      %vm863 = vmand %vm851, %vm581
      %vm864 = vmand %vm852, %vm580
      %vm865 = vmand %vm852, %vm581
      %vm866 = vmand %vm853, %vm580
      %vm867 = vmand %vm853, %vm581
      %vm868 = vmand %vm854, %vm580
      %vm869 = vmand %vm854, %vm581
      %vm870 = vmand %vm855, %vm580
      %vm871 = vmand %vm855, %vm581
      %vm872 = vmand %vm856, %vm600
      %vm873 = vmand %vm857, %vm601
      %vm874 = vmand %vm858, %vm600
      %vm875 = vmand %vm859, %vm601
      %vm876 = vmand %vm860, %vm600
      %vm877 = vmand %vm861, %vm601
      %vm878 = vmand %vm862, %vm600
      %vm879 = vmand %vm863, %vm601
      %vm880 = vmand %vm864, %vm600
      %vm881 = vmand %vm865, %vm601
      %vm882 = vmand %vm866, %vm600
      %vm883 = vmand %vm867, %vm601
      %vm884 = vmand %vm868, %vm600
      %vm885 = vmand %vm869, %vm601
      %vm886 = vmand %vm870, %vm600
      %vm887 = vmand %vm871, %vm601
      %v888 = vsel %vm872, 1, 0
      %v889 = vsel %vm873, 1, 0
      %v890 = vsel %vm874, 1, 0
      %v891 = vsel %vm875, 1, 0
      %v892 = vsel %vm876, 1, 0
      %v893 = vsel %vm877, 1, 0
      %v894 = vsel %vm878, 1, 0
      %v895 = vsel %vm879, 1, 0
      %v896 = vsel %vm880, 1, 0
      %v897 = vsel %vm881, 1, 0
      %v898 = vsel %vm882, 1, 0
      %v899 = vsel %vm883, 1, 0
      %v900 = vsel %vm884, 1, 0
      %v901 = vsel %vm885, 1, 0
      %v902 = vsel %vm886, 1, 0
      %v903 = vsel %vm887, 1, 0
      %vm904 = vcmp.eq.s32.totalorder %v888, 1
      %vm905 = vcmp.eq.s32.totalorder %v889, 1
      %vm906 = vcmp.eq.s32.totalorder %v890, 1
      %vm907 = vcmp.eq.s32.totalorder %v891, 1
      %vm908 = vcmp.eq.s32.totalorder %v892, 1
      %vm909 = vcmp.eq.s32.totalorder %v893, 1
      %vm910 = vcmp.eq.s32.totalorder %v894, 1
      %vm911 = vcmp.eq.s32.totalorder %v895, 1
      %vm912 = vcmp.eq.s32.totalorder %v896, 1
      %vm913 = vcmp.eq.s32.totalorder %v897, 1
      %vm914 = vcmp.eq.s32.totalorder %v898, 1
      %vm915 = vcmp.eq.s32.totalorder %v899, 1
      %vm916 = vcmp.eq.s32.totalorder %v900, 1
      %vm917 = vcmp.eq.s32.totalorder %v901, 1
      %vm918 = vcmp.eq.s32.totalorder %v902, 1
      %vm919 = vcmp.eq.s32.totalorder %v903, 1
      %v920 = vsel %vm904, %v808, 0.0
      %v921 = vsel %vm905, %v809, 0.0
      %v922 = vsel %vm906, %v810, 0.0
      %v923 = vsel %vm907, %v811, 0.0
      %v924 = vsel %vm908, %v812, 0.0
      %v925 = vsel %vm909, %v813, 0.0
      %v926 = vsel %vm910, %v814, 0.0
      %v927 = vsel %vm911, %v815, 0.0
      %v928 = vsel %vm912, %v816, 0.0
      %v929 = vsel %vm913, %v817, 0.0
      %v930 = vsel %vm914, %v818, 0.0
      %v931 = vsel %vm915, %v819, 0.0
      %v932 = vsel %vm916, %v820, 0.0
      %v933 = vsel %vm917, %v821, 0.0
      %v934 = vsel %vm918, %v822, 0.0
      %v935 = vsel %vm919, %v823, 0.0
      %s936 = scalar_lea.vmem %s419, %s444
      %v937 = vld [vmem:[%s936] sm:$0xff]
      %v938 = vld [vmem:[%s936 + $0x10] sm:$0xff]
      %v939 = vld [vmem:[%s936 + $0x20] sm:$0xff]
      %v940 = vld [vmem:[%s936 + $0x30] sm:$0xff]
      %v941 = vld [vmem:[%s936 + $0x40] sm:$0xff]
      %v942 = vld [vmem:[%s936 + $0x50] sm:$0xff]
      %v943 = vld [vmem:[%s936 + $0x60] sm:$0xff]
      %v944 = vld [vmem:[%s936 + $0x70] sm:$0xff]
      %v945 = vmul.f32 %v937, %v468
      %v946 = vmul.f32 %v938, %v468
      %v947 = vmul.f32 %v939, %v468
      %v948 = vmul.f32 %v940, %v468
      %v949 = vmul.f32 %v941, %v468
      %v950 = vmul.f32 %v942, %v468
      %v951 = vmul.f32 %v943, %v468
      %v952 = vmul.f32 %v944, %v468
      %v953 = vadd.f32 %v945, %v492
      %v954 = vadd.f32 %v946, %v492
      %v955 = vadd.f32 %v947, %v492
      %v956 = vadd.f32 %v948, %v492
      %v957 = vadd.f32 %v949, %v492
      %v958 = vadd.f32 %v950, %v492
      %v959 = vadd.f32 %v951, %v492
      %v960 = vadd.f32 %v952, %v492
      %v961 = vmax.f32 %v953, 0.0
      %v962 = vmax.f32 %v954, 0.0
      %v963 = vmax.f32 %v955, 0.0
      %v964 = vmax.f32 %v956, 0.0
      %v965 = vmax.f32 %v957, 0.0
      %v966 = vmax.f32 %v958, 0.0
      %v967 = vmax.f32 %v959, 0.0
      %v968 = vmax.f32 %v960, 0.0
      %vm969 = vmand %vm848, %vm712
      %vm970 = vmand %vm849, %vm712
      %vm971 = vmand %vm850, %vm712
      %vm972 = vmand %vm851, %vm712
      %vm973 = vmand %vm852, %vm712
      %vm974 = vmand %vm853, %vm712
      %vm975 = vmand %vm854, %vm712
      %vm976 = vmand %vm855, %vm712
      %vm977 = vmand %vm969, %vm722
      %vm978 = vmand %vm970, %vm722
      %vm979 = vmand %vm971, %vm722
      %vm980 = vmand %vm972, %vm722
      %vm981 = vmand %vm973, %vm722
      %vm982 = vmand %vm974, %vm722
      %vm983 = vmand %vm975, %vm722
      %vm984 = vmand %vm976, %vm722
      %v985 = vsel %vm977, 1, 0
      %v986 = vsel %vm978, 1, 0
      %v987 = vsel %vm979, 1, 0
      %v988 = vsel %vm980, 1, 0
      %v989 = vsel %vm981, 1, 0
      %v990 = vsel %vm982, 1, 0
      %v991 = vsel %vm983, 1, 0
      %v992 = vsel %vm984, 1, 0
      %vm993 = vcmp.eq.s32.totalorder %v985, 1
      %vm994 = vcmp.eq.s32.totalorder %v986, 1
      %vm995 = vcmp.eq.s32.totalorder %v987, 1
      %vm996 = vcmp.eq.s32.totalorder %v988, 1
      %vm997 = vcmp.eq.s32.totalorder %v989, 1
      %vm998 = vcmp.eq.s32.totalorder %v990, 1
      %vm999 = vcmp.eq.s32.totalorder %v991, 1
      %vm1000 = vcmp.eq.s32.totalorder %v992, 1
      %v1001 = vsel %vm993, %v961, 0.0
      %v1002 = vsel %vm994, %v962, 0.0
      %v1003 = vsel %vm995, %v963, 0.0
      %v1004 = vsel %vm996, %v964, 0.0
      %v1005 = vsel %vm997, %v965, 0.0
      %v1006 = vsel %vm998, %v966, 0.0
      %v1007 = vsel %vm999, %v967, 0.0
      %v1008 = vsel %vm1000, %v968, 0.0
      %v1009 = vpack.c.bf16 %v658, %v656
      %v1010 = vpack.c.bf16 %v662, %v660
      %v1011 = vpack.c.bf16 %v666, %v664
      %v1012 = vpack.c.bf16 %v670, %v668
      %v1013 = vld [vmem:[%s4] sm:$0xf]
      %v1014 = vld [vmem:[%s4 + $0x4] sm:$0xf]
      %v1015 = vld [vmem:[%s4 + $0x8] sm:$0xf]
      %v1016 = vld [vmem:[%s4 + $0xc] sm:$0xf]
      %v1017 = vld [vmem:[%s4 + $0x10] sm:$0xf]
      %v1018 = vld [vmem:[%s4 + $0x14] sm:$0xf]
      %v1019 = vld [vmem:[%s4 + $0x18] sm:$0xf]
      %v1020 = vld [vmem:[%s4 + $0x1c] sm:$0xf]
      %v1021 = vld [vmem:[%s4 + $0x20] sm:$0xf]
      %v1022 = vld [vmem:[%s4 + $0x24] sm:$0xf]
      %v1023 = vld [vmem:[%s4 + $0x28] sm:$0xf]
      %v1024 = vld [vmem:[%s4 + $0x2c] sm:$0xf]
      %v1025 = vld [vmem:[%s4 + $0x30] sm:$0xf]
      %v1026 = vld [vmem:[%s4 + $0x34] sm:$0xf]
      %v1027 = vld [vmem:[%s4 + $0x38] sm:$0xf]
      %v1028 = vld [vmem:[%s4 + $0x3c] sm:$0xf]
      %v1029 = vpack.c.bf16 %v751, %v750
      %v1030 = vpack.c.bf16 %v753, %v752
      %v1031 = vpack.c.bf16 %v755, %v754
      %v1032 = vpack.c.bf16 %v757, %v756
      %s1033 = scalar_lea.vmem %s4, 64
      %v1034 = vld [vmem:[%s1033] sm:$0xf]
      %v1035 = vld [vmem:[%s1033 + $0x4] sm:$0xf]
      %v1036 = vld [vmem:[%s1033 + $0x8] sm:$0xf]
      %v1037 = vld [vmem:[%s1033 + $0xc] sm:$0xf]
      %v1038 = vld [vmem:[%s1033 + $0x10] sm:$0xf]
      %v1039 = vld [vmem:[%s1033 + $0x14] sm:$0xf]
      %v1040 = vld [vmem:[%s1033 + $0x18] sm:$0xf]
      %v1041 = vld [vmem:[%s1033 + $0x1c] sm:$0xf]
      %v1042 = vld [vmem:[%s1033 + $0x20] sm:$0xf]
      %v1043 = vld [vmem:[%s1033 + $0x24] sm:$0xf]
      %v1044 = vld [vmem:[%s1033 + $0x28] sm:$0xf]
      %v1045 = vld [vmem:[%s1033 + $0x2c] sm:$0xf]
      %v1046 = vld [vmem:[%s1033 + $0x30] sm:$0xf]
      %v1047 = vld [vmem:[%s1033 + $0x34] sm:$0xf]
      %v1048 = vld [vmem:[%s1033 + $0x38] sm:$0xf]
      %v1049 = vld [vmem:[%s1033 + $0x3c] sm:$0xf]
      %v1066 = vunpack.c.l.b16 %v1034
      %v1067 = vunpack.c.l.b16 %v1035
      %v1068 = vunpack.c.l.b16 %v1036
      %v1069 = vunpack.c.l.b16 %v1037
      %v1070 = vunpack.c.l.b16 %v1038
      %v1071 = vunpack.c.l.b16 %v1039
      %v1072 = vunpack.c.l.b16 %v1040
      %v1073 = vunpack.c.l.b16 %v1041
      %v1074 = vunpack.c.l.b16 %v1042
      %v1075 = vunpack.c.l.b16 %v1043
      %v1076 = vunpack.c.l.b16 %v1044
      %v1077 = vunpack.c.l.b16 %v1045
      %v1078 = vunpack.c.l.b16 %v1046
      %v1079 = vunpack.c.l.b16 %v1047
      %v1080 = vunpack.c.l.b16 %v1048
      %v1081 = vunpack.c.l.b16 %v1049
      %v1082 = vpack.c.b16 %v1067, %v1066
      %v1083 = vpack.c.b16 %v1069, %v1068
      %v1084 = vpack.c.b16 %v1071, %v1070
      %v1085 = vpack.c.b16 %v1073, %v1072
      %v1086 = vpack.c.b16 %v1075, %v1074
      %v1087 = vpack.c.b16 %v1077, %v1076
      %v1088 = vpack.c.b16 %v1079, %v1078
      %v1089 = vpack.c.b16 %v1081, %v1080
      %1098 = vmatprep.subr.bf16.mxu0 0
      %1099 = vmatpush1.bf16.msra.mxu0 %v1082
      %1100 = vmatprep.subr.bf16.mxu0 0
      %1101 = vmatpush1.bf16.msra.mxu0 %v1083
      %1102 = vmatprep.subr.bf16.mxu0 0
      %1103 = vmatpush1.bf16.msra.mxu0 %v1084
      %1104 = vmatprep.subr.bf16.mxu0 0
      %1105 = vmatpush1.bf16.msra.mxu0 %v1085
      %1106 = vmatprep.subr.bf16.mxu0 0
      %1107 = vmatpush1.bf16.msra.mxu0 %v1086
      %1108 = vmatprep.subr.bf16.mxu0 0
      %1109 = vmatpush1.bf16.msra.mxu0 %v1087
      %1110 = vmatprep.subr.bf16.mxu0 0
      %1111 = vmatpush1.bf16.msra.mxu0 %v1088
      %1112 = vmatprep.subr.bf16.mxu0 0
      %1113 = vmatpush1.bf16.msra.mxu0 %v1089
      %1114 = vmatprep.subr.bf16.mxu0 0
      %1115 = vmatpush1.bf16.msra.mxu0 0
      %1116 = vmatprep.subr.bf16.mxu0 0
      %1117 = vmatpush1.bf16.msra.mxu0 0
      %1118 = vmatprep.subr.bf16.mxu0 0
      %1119 = vmatpush1.bf16.msra.mxu0 0
      %1120 = vmatprep.subr.bf16.mxu0 0
      %1121 = vmatpush1.bf16.msra.mxu0 0
      %1122 = vmatprep.subr.bf16.mxu0 0
      %1123 = vmatpush1.bf16.msra.mxu0 0
      %1124 = vmatprep.subr.bf16.mxu0 0
      %1125 = vmatpush1.bf16.msra.mxu0 0
      %1126 = vmatprep.subr.bf16.mxu0 0
      %1127 = vmatpush1.bf16.msra.mxu0 0
      %1128 = vmatprep.subr.bf16.mxu0 0
      %1129 = vmatpush1.bf16.msra.mxu0 0
      %1130 = vmatprep.mubr.bf16.mxu0 0
      %1131 = vmatmul.mubr.bf16.gmra.mrb[0].mxu0 %v1029
      %v1132 = vpop.f32.mrb[0].mxu0
      %v1133 = vadd.f32 0.0, %v1132
      %v1134 = vpop.f32.mrb[0].mxu0
      %v1135 = vpop.f32.mrb[0].mxu0
      %v1136 = vadd.f32 0.0, %v1135
      %v1137 = vpop.f32.mrb[0].mxu0
      %1138 = vmatprep.mubr.bf16.mxu0 0
      %1139 = vmatmul.mubr.bf16.gmra.mrb[0].mxu0 %v1030
      %v1140 = vpop.f32.mrb[0].mxu0
      %v1141 = vadd.f32 0.0, %v1140
      %v1142 = vpop.f32.mrb[0].mxu0
      %v1143 = vpop.f32.mrb[0].mxu0
      %v1144 = vadd.f32 0.0, %v1143
      %v1145 = vpop.f32.mrb[0].mxu0
      %1146 = vmatprep.mubr.bf16.mxu0 0
      %1147 = vmatmul.mubr.bf16.gmra.mrb[0].mxu0 %v1031
      %v1148 = vpop.f32.mrb[0].mxu0
      %v1149 = vadd.f32 0.0, %v1148
      %v1150 = vpop.f32.mrb[0].mxu0
      %v1151 = vpop.f32.mrb[0].mxu0
      %v1152 = vadd.f32 0.0, %v1151
      %v1153 = vpop.f32.mrb[0].mxu0
      %1154 = vmatprep.mubr.bf16.mxu0 0
      %1155 = vmatmul.mubr.bf16.gmra.mrb[0].mxu0 %v1032
      %v1156 = vpop.f32.mrb[0].mxu0
      %v1157 = vadd.f32 0.0, %v1156
      %v1158 = vpop.f32.mrb[0].mxu0
      %v1159 = vpop.f32.mrb[0].mxu0
      %v1160 = vadd.f32 0.0, %v1159
      %v1161 = vpop.f32.mrb[0].mxu0
      %1162 = vdwg.mxu0
      %v1179 = vunpack.c.l.b16 %v1013
      %v1180 = vunpack.c.l.b16 %v1014
      %v1181 = vunpack.c.l.b16 %v1015
      %v1182 = vunpack.c.l.b16 %v1016
      %v1183 = vunpack.c.l.b16 %v1017
      %v1184 = vunpack.c.l.b16 %v1018
      %v1185 = vunpack.c.l.b16 %v1019
      %v1186 = vunpack.c.l.b16 %v1020
      %v1187 = vunpack.c.l.b16 %v1021
      %v1188 = vunpack.c.l.b16 %v1022
      %v1189 = vunpack.c.l.b16 %v1023
      %v1190 = vunpack.c.l.b16 %v1024
      %v1191 = vunpack.c.l.b16 %v1025
      %v1192 = vunpack.c.l.b16 %v1026
      %v1193 = vunpack.c.l.b16 %v1027
      %v1194 = vunpack.c.l.b16 %v1028
      %v1195 = vpack.c.b16 %v1180, %v1179
      %v1196 = vpack.c.b16 %v1182, %v1181
      %v1197 = vpack.c.b16 %v1184, %v1183
      %v1198 = vpack.c.b16 %v1186, %v1185
      %v1199 = vpack.c.b16 %v1188, %v1187
      %v1200 = vpack.c.b16 %v1190, %v1189
      %v1201 = vpack.c.b16 %v1192, %v1191
      %v1202 = vpack.c.b16 %v1194, %v1193
      %1211 = vmatprep.subr.bf16.mxu0 0
      %1212 = vmatpush1.bf16.msra.mxu0 %v1195
      %1213 = vmatprep.subr.bf16.mxu0 0
      %1214 = vmatpush1.bf16.msra.mxu0 %v1196
      %1215 = vmatprep.subr.bf16.mxu0 0
      %1216 = vmatpush1.bf16.msra.mxu0 %v1197
      %1217 = vmatprep.subr.bf16.mxu0 0
      %1218 = vmatpush1.bf16.msra.mxu0 %v1198
      %1219 = vmatprep.subr.bf16.mxu0 0
      %1220 = vmatpush1.bf16.msra.mxu0 %v1199
      %1221 = vmatprep.subr.bf16.mxu0 0
      %1222 = vmatpush1.bf16.msra.mxu0 %v1200
      %1223 = vmatprep.subr.bf16.mxu0 0
      %1224 = vmatpush1.bf16.msra.mxu0 %v1201
      %1225 = vmatprep.subr.bf16.mxu0 0
      %1226 = vmatpush1.bf16.msra.mxu0 %v1202
      %1227 = vmatprep.subr.bf16.mxu0 0
      %1228 = vmatpush1.bf16.msra.mxu0 0
      %1229 = vmatprep.subr.bf16.mxu0 0
      %1230 = vmatpush1.bf16.msra.mxu0 0
      %1231 = vmatprep.subr.bf16.mxu0 0
      %1232 = vmatpush1.bf16.msra.mxu0 0
      %1233 = vmatprep.subr.bf16.mxu0 0
      %1234 = vmatpush1.bf16.msra.mxu0 0
      %1235 = vmatprep.subr.bf16.mxu0 0
      %1236 = vmatpush1.bf16.msra.mxu0 0
      %1237 = vmatprep.subr.bf16.mxu0 0
      %1238 = vmatpush1.bf16.msra.mxu0 0
      %1239 = vmatprep.subr.bf16.mxu0 0
      %1240 = vmatpush1.bf16.msra.mxu0 0
      %1241 = vmatprep.subr.bf16.mxu0 0
      %1242 = vmatpush1.bf16.msra.mxu0 0
      %1243 = vmatprep.mubr.bf16.mxu0 0
      %1244 = vmatmul.mubr.bf16.gmra.mrb[0].mxu0 %v1009
      %v1245 = vpop.f32.mrb[0].mxu0
      %v1246 = vadd.f32 %v1133, %v1245
      %v1247 = vpop.f32.mrb[0].mxu0
      %v1248 = vpop.f32.mrb[0].mxu0
      %v1249 = vadd.f32 %v1136, %v1248
      %v1250 = vpop.f32.mrb[0].mxu0
      %1251 = vmatprep.mubr.bf16.mxu0 0
      %1252 = vmatmul.mubr.bf16.gmra.mrb[0].mxu0 %v1010
      %v1253 = vpop.f32.mrb[0].mxu0
      %v1254 = vadd.f32 %v1141, %v1253
      %v1255 = vpop.f32.mrb[0].mxu0
      %v1256 = vpop.f32.mrb[0].mxu0
      %v1257 = vadd.f32 %v1144, %v1256
      %v1258 = vpop.f32.mrb[0].mxu0
      %1259 = vmatprep.mubr.bf16.mxu0 0
      %1260 = vmatmul.mubr.bf16.gmra.mrb[0].mxu0 %v1011
      %v1261 = vpop.f32.mrb[0].mxu0
      %v1262 = vadd.f32 %v1149, %v1261
      %v1263 = vpop.f32.mrb[0].mxu0
      %v1264 = vpop.f32.mrb[0].mxu0
      %v1265 = vadd.f32 %v1152, %v1264
      %v1266 = vpop.f32.mrb[0].mxu0
      %1267 = vmatprep.mubr.bf16.mxu0 0
      %1268 = vmatmul.mubr.bf16.gmra.mrb[0].mxu0 %v1012
      %v1269 = vpop.f32.mrb[0].mxu0
      %v1270 = vadd.f32 %v1157, %v1269
      %v1271 = vpop.f32.mrb[0].mxu0
      %v1272 = vpop.f32.mrb[0].mxu0
      %v1273 = vadd.f32 %v1160, %v1272
      %v1274 = vpop.f32.mrb[0].mxu0
      %1275 = vdwg.mxu0
      %vm1292 = vcmask 1046528
      %v1293 = vrot.slane %v656, 1
      %v1294 = vrot.slane %v657, 1
      %v1295 = vsel %vm1292, %v1293, %v1294
      %v1296 = vrot.slane %v658, 1
      %v1297 = vrot.slane %v659, 1
      %v1298 = vsel %vm1292, %v1296, %v1297
      %v1299 = vrot.slane %v660, 1
      %v1300 = vrot.slane %v661, 1
      %v1301 = vsel %vm1292, %v1299, %v1300
      %v1302 = vrot.slane %v662, 1
      %v1303 = vrot.slane %v663, 1
      %v1304 = vsel %vm1292, %v1302, %v1303
      %v1305 = vrot.slane %v664, 1
      %v1306 = vrot.slane %v665, 1
      %v1307 = vsel %vm1292, %v1305, %v1306
      %v1308 = vrot.slane %v666, 1
      %v1309 = vrot.slane %v667, 1
      %v1310 = vsel %vm1292, %v1308, %v1309
      %v1311 = vrot.slane %v668, 1
      %v1312 = vrot.slane %v669, 1
      %v1313 = vsel %vm1292, %v1311, %v1312
      %v1314 = vrot.slane %v670, 1
      %v1315 = vrot.slane %v671, 1
      %v1316 = vsel %vm1292, %v1314, %v1315
      %v1325 = vpack.c.bf16 %v1298, %v1295
      %v1326 = vpack.c.bf16 %v1304, %v1301
      %v1327 = vpack.c.bf16 %v1310, %v1307
      %v1328 = vpack.c.bf16 %v1316, %v1313
      %s1329 = scalar_lea.vmem %s4, 128
      %v1330 = vld [vmem:[%s1329] sm:$0xf]
      %v1331 = vld [vmem:[%s1329 + $0x4] sm:$0xf]
      %v1332 = vld [vmem:[%s1329 + $0x8] sm:$0xf]
      %v1333 = vld [vmem:[%s1329 + $0xc] sm:$0xf]
      %v1334 = vld [vmem:[%s1329 + $0x10] sm:$0xf]
      %v1335 = vld [vmem:[%s1329 + $0x14] sm:$0xf]
      %v1336 = vld [vmem:[%s1329 + $0x18] sm:$0xf]
      %v1337 = vld [vmem:[%s1329 + $0x1c] sm:$0xf]
      %v1338 = vld [vmem:[%s1329 + $0x20] sm:$0xf]
      %v1339 = vld [vmem:[%s1329 + $0x24] sm:$0xf]
      %v1340 = vld [vmem:[%s1329 + $0x28] sm:$0xf]
      %v1341 = vld [vmem:[%s1329 + $0x2c] sm:$0xf]
      %v1342 = vld [vmem:[%s1329 + $0x30] sm:$0xf]
      %v1343 = vld [vmem:[%s1329 + $0x34] sm:$0xf]
      %v1344 = vld [vmem:[%s1329 + $0x38] sm:$0xf]
      %v1345 = vld [vmem:[%s1329 + $0x3c] sm:$0xf]
      %v1362 = vunpack.c.l.b16 %v1330
      %v1363 = vunpack.c.l.b16 %v1331
      %v1364 = vunpack.c.l.b16 %v1332
      %v1365 = vunpack.c.l.b16 %v1333
      %v1366 = vunpack.c.l.b16 %v1334
      %v1367 = vunpack.c.l.b16 %v1335
      %v1368 = vunpack.c.l.b16 %v1336
      %v1369 = vunpack.c.l.b16 %v1337
      %v1370 = vunpack.c.l.b16 %v1338
      %v1371 = vunpack.c.l.b16 %v1339
      %v1372 = vunpack.c.l.b16 %v1340
      %v1373 = vunpack.c.l.b16 %v1341
      %v1374 = vunpack.c.l.b16 %v1342
      %v1375 = vunpack.c.l.b16 %v1343
      %v1376 = vunpack.c.l.b16 %v1344
      %v1377 = vunpack.c.l.b16 %v1345
      %v1378 = vpack.c.b16 %v1363, %v1362
      %v1379 = vpack.c.b16 %v1365, %v1364
      %v1380 = vpack.c.b16 %v1367, %v1366
      %v1381 = vpack.c.b16 %v1369, %v1368
      %v1382 = vpack.c.b16 %v1371, %v1370
      %v1383 = vpack.c.b16 %v1373, %v1372
      %v1384 = vpack.c.b16 %v1375, %v1374
      %v1385 = vpack.c.b16 %v1377, %v1376
      %1394 = vmatprep.subr.bf16.mxu0 0
      %1395 = vmatpush1.bf16.msra.mxu0 %v1378
      %1396 = vmatprep.subr.bf16.mxu0 0
      %1397 = vmatpush1.bf16.msra.mxu0 %v1379
      %1398 = vmatprep.subr.bf16.mxu0 0
      %1399 = vmatpush1.bf16.msra.mxu0 %v1380
      %1400 = vmatprep.subr.bf16.mxu0 0
      %1401 = vmatpush1.bf16.msra.mxu0 %v1381
      %1402 = vmatprep.subr.bf16.mxu0 0
      %1403 = vmatpush1.bf16.msra.mxu0 %v1382
      %1404 = vmatprep.subr.bf16.mxu0 0
      %1405 = vmatpush1.bf16.msra.mxu0 %v1383
      %1406 = vmatprep.subr.bf16.mxu0 0
      %1407 = vmatpush1.bf16.msra.mxu0 %v1384
      %1408 = vmatprep.subr.bf16.mxu0 0
      %1409 = vmatpush1.bf16.msra.mxu0 %v1385
      %1410 = vmatprep.subr.bf16.mxu0 0
      %1411 = vmatpush1.bf16.msra.mxu0 0
      %1412 = vmatprep.subr.bf16.mxu0 0
      %1413 = vmatpush1.bf16.msra.mxu0 0
      %1414 = vmatprep.subr.bf16.mxu0 0
      %1415 = vmatpush1.bf16.msra.mxu0 0
      %1416 = vmatprep.subr.bf16.mxu0 0
      %1417 = vmatpush1.bf16.msra.mxu0 0
      %1418 = vmatprep.subr.bf16.mxu0 0
      %1419 = vmatpush1.bf16.msra.mxu0 0
      %1420 = vmatprep.subr.bf16.mxu0 0
      %1421 = vmatpush1.bf16.msra.mxu0 0
      %1422 = vmatprep.subr.bf16.mxu0 0
      %1423 = vmatpush1.bf16.msra.mxu0 0
      %1424 = vmatprep.subr.bf16.mxu0 0
      %1425 = vmatpush1.bf16.msra.mxu0 0
      %1426 = vmatprep.mubr.bf16.mxu0 0
      %1427 = vmatmul.mubr.bf16.gmra.mrb[0].mxu0 %v1325
      %v1428 = vpop.f32.mrb[0].mxu0
      %v1429 = vadd.f32 0.0, %v1428
      %v1430 = vpop.f32.mrb[0].mxu0
      %v1431 = vpop.f32.mrb[0].mxu0
      %v1432 = vadd.f32 0.0, %v1431
      %v1433 = vpop.f32.mrb[0].mxu0
      %1434 = vmatprep.mubr.bf16.mxu0 0
      %1435 = vmatmul.mubr.bf16.gmra.mrb[0].mxu0 %v1326
      %v1436 = vpop.f32.mrb[0].mxu0
      %v1437 = vadd.f32 0.0, %v1436
      %v1438 = vpop.f32.mrb[0].mxu0
      %v1439 = vpop.f32.mrb[0].mxu0
      %v1440 = vadd.f32 0.0, %v1439
      %v1441 = vpop.f32.mrb[0].mxu0
      %1442 = vmatprep.mubr.bf16.mxu0 0
      %1443 = vmatmul.mubr.bf16.gmra.mrb[0].mxu0 %v1327
      %v1444 = vpop.f32.mrb[0].mxu0
      %v1445 = vadd.f32 0.0, %v1444
      %v1446 = vpop.f32.mrb[0].mxu0
      %v1447 = vpop.f32.mrb[0].mxu0
      %v1448 = vadd.f32 0.0, %v1447
      %v1449 = vpop.f32.mrb[0].mxu0
      %1450 = vmatprep.mubr.bf16.mxu0 0
      %1451 = vmatmul.mubr.bf16.gmra.mrb[0].mxu0 %v1328
      %v1452 = vpop.f32.mrb[0].mxu0
      %v1453 = vadd.f32 0.0, %v1452
      %v1454 = vpop.f32.mrb[0].mxu0
      %v1455 = vpop.f32.mrb[0].mxu0
      %v1456 = vadd.f32 0.0, %v1455
      %v1457 = vpop.f32.mrb[0].mxu0
      %1458 = vdwg.mxu0
      %v1459 = vadd.f32 %v1246, %v1429
      %v1460 = vadd.f32 %v1249, %v1432
      %v1461 = vadd.f32 %v1254, %v1437
      %v1462 = vadd.f32 %v1257, %v1440
      %v1463 = vadd.f32 %v1262, %v1445
      %v1464 = vadd.f32 %v1265, %v1448
      %v1465 = vadd.f32 %v1270, %v1453
      %v1466 = vadd.f32 %v1273, %v1456
      %v1467 = vpack.c.bf16 %v922, %v920
      %v1468 = vpack.c.bf16 %v926, %v924
      %v1469 = vpack.c.bf16 %v930, %v928
      %v1470 = vpack.c.bf16 %v934, %v932
      %s1471 = scalar_lea.vmem %s4, 192
      %v1472 = vld [vmem:[%s1471] sm:$0xf]
      %v1473 = vld [vmem:[%s1471 + $0x4] sm:$0xf]
      %v1474 = vld [vmem:[%s1471 + $0x8] sm:$0xf]
      %v1475 = vld [vmem:[%s1471 + $0xc] sm:$0xf]
      %v1476 = vld [vmem:[%s1471 + $0x10] sm:$0xf]
      %v1477 = vld [vmem:[%s1471 + $0x14] sm:$0xf]
      %v1478 = vld [vmem:[%s1471 + $0x18] sm:$0xf]
      %v1479 = vld [vmem:[%s1471 + $0x1c] sm:$0xf]
      %v1480 = vld [vmem:[%s1471 + $0x20] sm:$0xf]
      %v1481 = vld [vmem:[%s1471 + $0x24] sm:$0xf]
      %v1482 = vld [vmem:[%s1471 + $0x28] sm:$0xf]
      %v1483 = vld [vmem:[%s1471 + $0x2c] sm:$0xf]
      %v1484 = vld [vmem:[%s1471 + $0x30] sm:$0xf]
      %v1485 = vld [vmem:[%s1471 + $0x34] sm:$0xf]
      %v1486 = vld [vmem:[%s1471 + $0x38] sm:$0xf]
      %v1487 = vld [vmem:[%s1471 + $0x3c] sm:$0xf]
      %v1504 = vunpack.c.l.b16 %v1472
      %v1505 = vunpack.c.l.b16 %v1473
      %v1506 = vunpack.c.l.b16 %v1474
      %v1507 = vunpack.c.l.b16 %v1475
      %v1508 = vunpack.c.l.b16 %v1476
      %v1509 = vunpack.c.l.b16 %v1477
      %v1510 = vunpack.c.l.b16 %v1478
      %v1511 = vunpack.c.l.b16 %v1479
      %v1512 = vunpack.c.l.b16 %v1480
      %v1513 = vunpack.c.l.b16 %v1481
      %v1514 = vunpack.c.l.b16 %v1482
      %v1515 = vunpack.c.l.b16 %v1483
      %v1516 = vunpack.c.l.b16 %v1484
      %v1517 = vunpack.c.l.b16 %v1485
      %v1518 = vunpack.c.l.b16 %v1486
      %v1519 = vunpack.c.l.b16 %v1487
      %v1520 = vpack.c.b16 %v1505, %v1504
      %v1521 = vpack.c.b16 %v1507, %v1506
      %v1522 = vpack.c.b16 %v1509, %v1508
      %v1523 = vpack.c.b16 %v1511, %v1510
      %v1524 = vpack.c.b16 %v1513, %v1512
      %v1525 = vpack.c.b16 %v1515, %v1514
      %v1526 = vpack.c.b16 %v1517, %v1516
      %v1527 = vpack.c.b16 %v1519, %v1518
      %1536 = vmatprep.subr.bf16.mxu0 0
      %1537 = vmatpush1.bf16.msra.mxu0 %v1520
      %1538 = vmatprep.subr.bf16.mxu0 0
      %1539 = vmatpush1.bf16.msra.mxu0 %v1521
      %1540 = vmatprep.subr.bf16.mxu0 0
      %1541 = vmatpush1.bf16.msra.mxu0 %v1522
      %1542 = vmatprep.subr.bf16.mxu0 0
      %1543 = vmatpush1.bf16.msra.mxu0 %v1523
      %1544 = vmatprep.subr.bf16.mxu0 0
      %1545 = vmatpush1.bf16.msra.mxu0 %v1524
      %1546 = vmatprep.subr.bf16.mxu0 0
      %1547 = vmatpush1.bf16.msra.mxu0 %v1525
      %1548 = vmatprep.subr.bf16.mxu0 0
      %1549 = vmatpush1.bf16.msra.mxu0 %v1526
      %1550 = vmatprep.subr.bf16.mxu0 0
      %1551 = vmatpush1.bf16.msra.mxu0 %v1527
      %1552 = vmatprep.subr.bf16.mxu0 0
      %1553 = vmatpush1.bf16.msra.mxu0 0
      %1554 = vmatprep.subr.bf16.mxu0 0
      %1555 = vmatpush1.bf16.msra.mxu0 0
      %1556 = vmatprep.subr.bf16.mxu0 0
      %1557 = vmatpush1.bf16.msra.mxu0 0
      %1558 = vmatprep.subr.bf16.mxu0 0
      %1559 = vmatpush1.bf16.msra.mxu0 0
      %1560 = vmatprep.subr.bf16.mxu0 0
      %1561 = vmatpush1.bf16.msra.mxu0 0
      %1562 = vmatprep.subr.bf16.mxu0 0
      %1563 = vmatpush1.bf16.msra.mxu0 0
      %1564 = vmatprep.subr.bf16.mxu0 0
      %1565 = vmatpush1.bf16.msra.mxu0 0
      %1566 = vmatprep.subr.bf16.mxu0 0
      %1567 = vmatpush1.bf16.msra.mxu0 0
      %1568 = vmatprep.mubr.bf16.mxu0 0
      %1569 = vmatmul.mubr.bf16.gmra.mrb[0].mxu0 %v1467
      %v1570 = vpop.f32.mrb[0].mxu0
      %v1571 = vadd.f32 0.0, %v1570
      %v1572 = vpop.f32.mrb[0].mxu0
      %v1573 = vpop.f32.mrb[0].mxu0
      %v1574 = vadd.f32 0.0, %v1573
      %v1575 = vpop.f32.mrb[0].mxu0
      %1576 = vmatprep.mubr.bf16.mxu0 0
      %1577 = vmatmul.mubr.bf16.gmra.mrb[0].mxu0 %v1468
      %v1578 = vpop.f32.mrb[0].mxu0
      %v1579 = vadd.f32 0.0, %v1578
      %v1580 = vpop.f32.mrb[0].mxu0
      %v1581 = vpop.f32.mrb[0].mxu0
      %v1582 = vadd.f32 0.0, %v1581
      %v1583 = vpop.f32.mrb[0].mxu0
      %1584 = vmatprep.mubr.bf16.mxu0 0
      %1585 = vmatmul.mubr.bf16.gmra.mrb[0].mxu0 %v1469
      %v1586 = vpop.f32.mrb[0].mxu0
      %v1587 = vadd.f32 0.0, %v1586
      %v1588 = vpop.f32.mrb[0].mxu0
      %v1589 = vpop.f32.mrb[0].mxu0
      %v1590 = vadd.f32 0.0, %v1589
      %v1591 = vpop.f32.mrb[0].mxu0
      %1592 = vmatprep.mubr.bf16.mxu0 0
      %1593 = vmatmul.mubr.bf16.gmra.mrb[0].mxu0 %v1470
      %v1594 = vpop.f32.mrb[0].mxu0
      %v1595 = vadd.f32 0.0, %v1594
      %v1596 = vpop.f32.mrb[0].mxu0
      %v1597 = vpop.f32.mrb[0].mxu0
      %v1598 = vadd.f32 0.0, %v1597
      %v1599 = vpop.f32.mrb[0].mxu0
      %1600 = vdwg.mxu0
      %v1601 = vadd.f32 %v1459, %v1571
      %v1602 = vadd.f32 %v1460, %v1574
      %v1603 = vadd.f32 %v1461, %v1579
      %v1604 = vadd.f32 %v1462, %v1582
      %v1605 = vadd.f32 %v1463, %v1587
      %v1606 = vadd.f32 %v1464, %v1590
      %v1607 = vadd.f32 %v1465, %v1595
      %v1608 = vadd.f32 %v1466, %v1598
      %v1609 = vpack.c.bf16 %v1002, %v1001
      %v1610 = vpack.c.bf16 %v1004, %v1003
      %v1611 = vpack.c.bf16 %v1006, %v1005
      %v1612 = vpack.c.bf16 %v1008, %v1007
      %s1613 = scalar_lea.vmem %s4, 256
      %v1614 = vld [vmem:[%s1613] sm:$0xf]
      %v1615 = vld [vmem:[%s1613 + $0x4] sm:$0xf]
      %v1616 = vld [vmem:[%s1613 + $0x8] sm:$0xf]
      %v1617 = vld [vmem:[%s1613 + $0xc] sm:$0xf]
      %v1618 = vld [vmem:[%s1613 + $0x10] sm:$0xf]
      %v1619 = vld [vmem:[%s1613 + $0x14] sm:$0xf]
      %v1620 = vld [vmem:[%s1613 + $0x18] sm:$0xf]
      %v1621 = vld [vmem:[%s1613 + $0x1c] sm:$0xf]
      %v1622 = vld [vmem:[%s1613 + $0x20] sm:$0xf]
      %v1623 = vld [vmem:[%s1613 + $0x24] sm:$0xf]
      %v1624 = vld [vmem:[%s1613 + $0x28] sm:$0xf]
      %v1625 = vld [vmem:[%s1613 + $0x2c] sm:$0xf]
      %v1626 = vld [vmem:[%s1613 + $0x30] sm:$0xf]
      %v1627 = vld [vmem:[%s1613 + $0x34] sm:$0xf]
      %v1628 = vld [vmem:[%s1613 + $0x38] sm:$0xf]
      %v1629 = vld [vmem:[%s1613 + $0x3c] sm:$0xf]
      %v1646 = vunpack.c.l.b16 %v1614
      %v1647 = vunpack.c.l.b16 %v1615
      %v1648 = vunpack.c.l.b16 %v1616
      %v1649 = vunpack.c.l.b16 %v1617
      %v1650 = vunpack.c.l.b16 %v1618
      %v1651 = vunpack.c.l.b16 %v1619
      %v1652 = vunpack.c.l.b16 %v1620
      %v1653 = vunpack.c.l.b16 %v1621
      %v1654 = vunpack.c.l.b16 %v1622
      %v1655 = vunpack.c.l.b16 %v1623
      %v1656 = vunpack.c.l.b16 %v1624
      %v1657 = vunpack.c.l.b16 %v1625
      %v1658 = vunpack.c.l.b16 %v1626
      %v1659 = vunpack.c.l.b16 %v1627
      %v1660 = vunpack.c.l.b16 %v1628
      %v1661 = vunpack.c.l.b16 %v1629
      %v1662 = vpack.c.b16 %v1647, %v1646
      %v1663 = vpack.c.b16 %v1649, %v1648
      %v1664 = vpack.c.b16 %v1651, %v1650
      %v1665 = vpack.c.b16 %v1653, %v1652
      %v1666 = vpack.c.b16 %v1655, %v1654
      %v1667 = vpack.c.b16 %v1657, %v1656
      %v1668 = vpack.c.b16 %v1659, %v1658
      %v1669 = vpack.c.b16 %v1661, %v1660
      %1678 = vmatprep.subr.bf16.mxu0 0
      %1679 = vmatpush1.bf16.msra.mxu0 %v1662
      %1680 = vmatprep.subr.bf16.mxu0 0
      %1681 = vmatpush1.bf16.msra.mxu0 %v1663
      %1682 = vmatprep.subr.bf16.mxu0 0
      %1683 = vmatpush1.bf16.msra.mxu0 %v1664
      %1684 = vmatprep.subr.bf16.mxu0 0
      %1685 = vmatpush1.bf16.msra.mxu0 %v1665
      %1686 = vmatprep.subr.bf16.mxu0 0
      %1687 = vmatpush1.bf16.msra.mxu0 %v1666
      %1688 = vmatprep.subr.bf16.mxu0 0
      %1689 = vmatpush1.bf16.msra.mxu0 %v1667
      %1690 = vmatprep.subr.bf16.mxu0 0
      %1691 = vmatpush1.bf16.msra.mxu0 %v1668
      %1692 = vmatprep.subr.bf16.mxu0 0
      %1693 = vmatpush1.bf16.msra.mxu0 %v1669
      %1694 = vmatprep.subr.bf16.mxu0 0
      %1695 = vmatpush1.bf16.msra.mxu0 0
      %1696 = vmatprep.subr.bf16.mxu0 0
      %1697 = vmatpush1.bf16.msra.mxu0 0
      %1698 = vmatprep.subr.bf16.mxu0 0
      %1699 = vmatpush1.bf16.msra.mxu0 0
      %1700 = vmatprep.subr.bf16.mxu0 0
      %1701 = vmatpush1.bf16.msra.mxu0 0
      %1702 = vmatprep.subr.bf16.mxu0 0
      %1703 = vmatpush1.bf16.msra.mxu0 0
      %1704 = vmatprep.subr.bf16.mxu0 0
      %1705 = vmatpush1.bf16.msra.mxu0 0
      %1706 = vmatprep.subr.bf16.mxu0 0
      %1707 = vmatpush1.bf16.msra.mxu0 0
      %1708 = vmatprep.subr.bf16.mxu0 0
      %1709 = vmatpush1.bf16.msra.mxu0 0
      %1710 = vmatprep.mubr.bf16.mxu0 0
      %1711 = vmatmul.mubr.bf16.gmra.mrb[0].mxu0 %v1609
      %v1712 = vpop.f32.mrb[0].mxu0
      %v1713 = vadd.f32 0.0, %v1712
      %v1714 = vpop.f32.mrb[0].mxu0
      %v1715 = vpop.f32.mrb[0].mxu0
      %v1716 = vadd.f32 0.0, %v1715
      %v1717 = vpop.f32.mrb[0].mxu0
      %1718 = vmatprep.mubr.bf16.mxu0 0
      %1719 = vmatmul.mubr.bf16.gmra.mrb[0].mxu0 %v1610
      %v1720 = vpop.f32.mrb[0].mxu0
      %v1721 = vadd.f32 0.0, %v1720
      %v1722 = vpop.f32.mrb[0].mxu0
      %v1723 = vpop.f32.mrb[0].mxu0
      %v1724 = vadd.f32 0.0, %v1723
      %v1725 = vpop.f32.mrb[0].mxu0
      %1726 = vmatprep.mubr.bf16.mxu0 0
      %1727 = vmatmul.mubr.bf16.gmra.mrb[0].mxu0 %v1611
      %v1728 = vpop.f32.mrb[0].mxu0
      %v1729 = vadd.f32 0.0, %v1728
      %v1730 = vpop.f32.mrb[0].mxu0
      %v1731 = vpop.f32.mrb[0].mxu0
      %v1732 = vadd.f32 0.0, %v1731
      %v1733 = vpop.f32.mrb[0].mxu0
      %1734 = vmatprep.mubr.bf16.mxu0 0
      %1735 = vmatmul.mubr.bf16.gmra.mrb[0].mxu0 %v1612
      %v1736 = vpop.f32.mrb[0].mxu0
      %v1737 = vadd.f32 0.0, %v1736
      %v1738 = vpop.f32.mrb[0].mxu0
      %v1739 = vpop.f32.mrb[0].mxu0
      %v1740 = vadd.f32 0.0, %v1739
      %v1741 = vpop.f32.mrb[0].mxu0
      %1742 = vdwg.mxu0
      %v1743 = vadd.f32 %v1601, %v1713
      %v1744 = vadd.f32 %v1602, %v1716
      %v1745 = vadd.f32 %v1603, %v1721
      %v1746 = vadd.f32 %v1604, %v1724
      %v1747 = vadd.f32 %v1605, %v1729
      %v1748 = vadd.f32 %v1606, %v1732
      %v1749 = vadd.f32 %v1607, %v1737
      %v1750 = vadd.f32 %v1608, %v1740
      %v1767 = vrot.slane %v920, 1
      %v1768 = vrot.slane %v921, 1
      %v1769 = vsel %vm1292, %v1767, %v1768
      %v1770 = vrot.slane %v922, 1
      %v1771 = vrot.slane %v923, 1
      %v1772 = vsel %vm1292, %v1770, %v1771
      %v1773 = vrot.slane %v924, 1
      %v1774 = vrot.slane %v925, 1
      %v1775 = vsel %vm1292, %v1773, %v1774
      %v1776 = vrot.slane %v926, 1
      %v1777 = vrot.slane %v927, 1
      %v1778 = vsel %vm1292, %v1776, %v1777
      %v1779 = vrot.slane %v928, 1
      %v1780 = vrot.slane %v929, 1
      %v1781 = vsel %vm1292, %v1779, %v1780
      %v1782 = vrot.slane %v930, 1
      %v1783 = vrot.slane %v931, 1
      %v1784 = vsel %vm1292, %v1782, %v1783
      %v1785 = vrot.slane %v932, 1
      %v1786 = vrot.slane %v933, 1
      %v1787 = vsel %vm1292, %v1785, %v1786
      %v1788 = vrot.slane %v934, 1
      %v1789 = vrot.slane %v935, 1
      %v1790 = vsel %vm1292, %v1788, %v1789
      %v1799 = vpack.c.bf16 %v1772, %v1769
      %v1800 = vpack.c.bf16 %v1778, %v1775
      %v1801 = vpack.c.bf16 %v1784, %v1781
      %v1802 = vpack.c.bf16 %v1790, %v1787
      %s1803 = scalar_lea.vmem %s4, 320
      %v1804 = vld [vmem:[%s1803] sm:$0xf]
      %v1805 = vld [vmem:[%s1803 + $0x4] sm:$0xf]
      %v1806 = vld [vmem:[%s1803 + $0x8] sm:$0xf]
      %v1807 = vld [vmem:[%s1803 + $0xc] sm:$0xf]
      %v1808 = vld [vmem:[%s1803 + $0x10] sm:$0xf]
      %v1809 = vld [vmem:[%s1803 + $0x14] sm:$0xf]
      %v1810 = vld [vmem:[%s1803 + $0x18] sm:$0xf]
      %v1811 = vld [vmem:[%s1803 + $0x1c] sm:$0xf]
      %v1812 = vld [vmem:[%s1803 + $0x20] sm:$0xf]
      %v1813 = vld [vmem:[%s1803 + $0x24] sm:$0xf]
      %v1814 = vld [vmem:[%s1803 + $0x28] sm:$0xf]
      %v1815 = vld [vmem:[%s1803 + $0x2c] sm:$0xf]
      %v1816 = vld [vmem:[%s1803 + $0x30] sm:$0xf]
      %v1817 = vld [vmem:[%s1803 + $0x34] sm:$0xf]
      %v1818 = vld [vmem:[%s1803 + $0x38] sm:$0xf]
      %v1819 = vld [vmem:[%s1803 + $0x3c] sm:$0xf]
      %v1836 = vunpack.c.l.b16 %v1804
      %v1837 = vunpack.c.l.b16 %v1805
      %v1838 = vunpack.c.l.b16 %v1806
      %v1839 = vunpack.c.l.b16 %v1807
      %v1840 = vunpack.c.l.b16 %v1808
      %v1841 = vunpack.c.l.b16 %v1809
      %v1842 = vunpack.c.l.b16 %v1810
      %v1843 = vunpack.c.l.b16 %v1811
      %v1844 = vunpack.c.l.b16 %v1812
      %v1845 = vunpack.c.l.b16 %v1813
      %v1846 = vunpack.c.l.b16 %v1814
      %v1847 = vunpack.c.l.b16 %v1815
      %v1848 = vunpack.c.l.b16 %v1816
      %v1849 = vunpack.c.l.b16 %v1817
      %v1850 = vunpack.c.l.b16 %v1818
      %v1851 = vunpack.c.l.b16 %v1819
      %v1852 = vpack.c.b16 %v1837, %v1836
      %v1853 = vpack.c.b16 %v1839, %v1838
      %v1854 = vpack.c.b16 %v1841, %v1840
      %v1855 = vpack.c.b16 %v1843, %v1842
      %v1856 = vpack.c.b16 %v1845, %v1844
      %v1857 = vpack.c.b16 %v1847, %v1846
      %v1858 = vpack.c.b16 %v1849, %v1848
      %v1859 = vpack.c.b16 %v1851, %v1850
      %1868 = vmatprep.subr.bf16.mxu0 0
      %1869 = vmatpush1.bf16.msra.mxu0 %v1852
      %1870 = vmatprep.subr.bf16.mxu0 0
      %1871 = vmatpush1.bf16.msra.mxu0 %v1853
      %1872 = vmatprep.subr.bf16.mxu0 0
      %1873 = vmatpush1.bf16.msra.mxu0 %v1854
      %1874 = vmatprep.subr.bf16.mxu0 0
      %1875 = vmatpush1.bf16.msra.mxu0 %v1855
      %1876 = vmatprep.subr.bf16.mxu0 0
      %1877 = vmatpush1.bf16.msra.mxu0 %v1856
      %1878 = vmatprep.subr.bf16.mxu0 0
      %1879 = vmatpush1.bf16.msra.mxu0 %v1857
      %1880 = vmatprep.subr.bf16.mxu0 0
      %1881 = vmatpush1.bf16.msra.mxu0 %v1858
      %1882 = vmatprep.subr.bf16.mxu0 0
      %1883 = vmatpush1.bf16.msra.mxu0 %v1859
      %1884 = vmatprep.subr.bf16.mxu0 0
      %1885 = vmatpush1.bf16.msra.mxu0 0
      %1886 = vmatprep.subr.bf16.mxu0 0
      %1887 = vmatpush1.bf16.msra.mxu0 0
      %1888 = vmatprep.subr.bf16.mxu0 0
      %1889 = vmatpush1.bf16.msra.mxu0 0
      %1890 = vmatprep.subr.bf16.mxu0 0
      %1891 = vmatpush1.bf16.msra.mxu0 0
      %1892 = vmatprep.subr.bf16.mxu0 0
      %1893 = vmatpush1.bf16.msra.mxu0 0
      %1894 = vmatprep.subr.bf16.mxu0 0
      %1895 = vmatpush1.bf16.msra.mxu0 0
      %1896 = vmatprep.subr.bf16.mxu0 0
      %1897 = vmatpush1.bf16.msra.mxu0 0
      %1898 = vmatprep.subr.bf16.mxu0 0
      %1899 = vmatpush1.bf16.msra.mxu0 0
      %1900 = vmatprep.mubr.bf16.mxu0 0
      %1901 = vmatmul.mubr.bf16.gmra.mrb[0].mxu0 %v1799
      %v1902 = vpop.f32.mrb[0].mxu0
      %v1903 = vadd.f32 0.0, %v1902
      %v1904 = vpop.f32.mrb[0].mxu0
      %v1905 = vpop.f32.mrb[0].mxu0
      %v1906 = vadd.f32 0.0, %v1905
      %v1907 = vpop.f32.mrb[0].mxu0
      %1908 = vmatprep.mubr.bf16.mxu0 0
      %1909 = vmatmul.mubr.bf16.gmra.mrb[0].mxu0 %v1800
      %v1910 = vpop.f32.mrb[0].mxu0
      %v1911 = vadd.f32 0.0, %v1910
      %v1912 = vpop.f32.mrb[0].mxu0
      %v1913 = vpop.f32.mrb[0].mxu0
      %v1914 = vadd.f32 0.0, %v1913
      %v1915 = vpop.f32.mrb[0].mxu0
      %1916 = vmatprep.mubr.bf16.mxu0 0
      %1917 = vmatmul.mubr.bf16.gmra.mrb[0].mxu0 %v1801
      %v1918 = vpop.f32.mrb[0].mxu0
      %v1919 = vadd.f32 0.0, %v1918
      %v1920 = vpop.f32.mrb[0].mxu0
      %v1921 = vpop.f32.mrb[0].mxu0
      %v1922 = vadd.f32 0.0, %v1921
      %v1923 = vpop.f32.mrb[0].mxu0
      %1924 = vmatprep.mubr.bf16.mxu0 0
      %1925 = vmatmul.mubr.bf16.gmra.mrb[0].mxu0 %v1802
      %v1926 = vpop.f32.mrb[0].mxu0
      %v1927 = vadd.f32 0.0, %v1926
      %v1928 = vpop.f32.mrb[0].mxu0
      %v1929 = vpop.f32.mrb[0].mxu0
      %v1930 = vadd.f32 0.0, %v1929
      %v1931 = vpop.f32.mrb[0].mxu0
      %1932 = vdwg.mxu0
      %v1933 = vadd.f32 %v1743, %v1903
      %v1934 = vadd.f32 %v1744, %v1906
      %v1935 = vadd.f32 %v1745, %v1911
      %v1936 = vadd.f32 %v1746, %v1914
      %v1937 = vadd.f32 %v1747, %v1919
      %v1938 = vadd.f32 %v1748, %v1922
      %v1939 = vadd.f32 %v1749, %v1927
      %v1940 = vadd.f32 %v1750, %v1930
      %v1941 = vpack.c.bf16 %v660, %v658
      %v1942 = vpack.c.bf16 %v664, %v662
      %v1943 = vpack.c.bf16 %v668, %v666
      %v1944 = vpack.c.bf16 %v672, %v670
      %s1945 = scalar_lea.vmem %s4, 384
      %v1946 = vld [vmem:[%s1945] sm:$0xf]
      %v1947 = vld [vmem:[%s1945 + $0x4] sm:$0xf]
      %v1948 = vld [vmem:[%s1945 + $0x8] sm:$0xf]
      %v1949 = vld [vmem:[%s1945 + $0xc] sm:$0xf]
      %v1950 = vld [vmem:[%s1945 + $0x10] sm:$0xf]
      %v1951 = vld [vmem:[%s1945 + $0x14] sm:$0xf]
      %v1952 = vld [vmem:[%s1945 + $0x18] sm:$0xf]
      %v1953 = vld [vmem:[%s1945 + $0x1c] sm:$0xf]
      %v1954 = vld [vmem:[%s1945 + $0x20] sm:$0xf]
      %v1955 = vld [vmem:[%s1945 + $0x24] sm:$0xf]
      %v1956 = vld [vmem:[%s1945 + $0x28] sm:$0xf]
      %v1957 = vld [vmem:[%s1945 + $0x2c] sm:$0xf]
      %v1958 = vld [vmem:[%s1945 + $0x30] sm:$0xf]
      %v1959 = vld [vmem:[%s1945 + $0x34] sm:$0xf]
      %v1960 = vld [vmem:[%s1945 + $0x38] sm:$0xf]
      %v1961 = vld [vmem:[%s1945 + $0x3c] sm:$0xf]
      %v1978 = vunpack.c.l.b16 %v1946
      %v1979 = vunpack.c.l.b16 %v1947
      %v1980 = vunpack.c.l.b16 %v1948
      %v1981 = vunpack.c.l.b16 %v1949
      %v1982 = vunpack.c.l.b16 %v1950
      %v1983 = vunpack.c.l.b16 %v1951
      %v1984 = vunpack.c.l.b16 %v1952
      %v1985 = vunpack.c.l.b16 %v1953
      %v1986 = vunpack.c.l.b16 %v1954
      %v1987 = vunpack.c.l.b16 %v1955
      %v1988 = vunpack.c.l.b16 %v1956
      %v1989 = vunpack.c.l.b16 %v1957
      %v1990 = vunpack.c.l.b16 %v1958
      %v1991 = vunpack.c.l.b16 %v1959
      %v1992 = vunpack.c.l.b16 %v1960
      %v1993 = vunpack.c.l.b16 %v1961
      %v1994 = vpack.c.b16 %v1979, %v1978
      %v1995 = vpack.c.b16 %v1981, %v1980
      %v1996 = vpack.c.b16 %v1983, %v1982
      %v1997 = vpack.c.b16 %v1985, %v1984
      %v1998 = vpack.c.b16 %v1987, %v1986
      %v1999 = vpack.c.b16 %v1989, %v1988
      %v2000 = vpack.c.b16 %v1991, %v1990
      %v2001 = vpack.c.b16 %v1993, %v1992
      %2010 = vmatprep.subr.bf16.mxu0 0
      %2011 = vmatpush1.bf16.msra.mxu0 %v1994
      %2012 = vmatprep.subr.bf16.mxu0 0
      %2013 = vmatpush1.bf16.msra.mxu0 %v1995
      %2014 = vmatprep.subr.bf16.mxu0 0
      %2015 = vmatpush1.bf16.msra.mxu0 %v1996
      %2016 = vmatprep.subr.bf16.mxu0 0
      %2017 = vmatpush1.bf16.msra.mxu0 %v1997
      %2018 = vmatprep.subr.bf16.mxu0 0
      %2019 = vmatpush1.bf16.msra.mxu0 %v1998
      %2020 = vmatprep.subr.bf16.mxu0 0
      %2021 = vmatpush1.bf16.msra.mxu0 %v1999
      %2022 = vmatprep.subr.bf16.mxu0 0
      %2023 = vmatpush1.bf16.msra.mxu0 %v2000
      %2024 = vmatprep.subr.bf16.mxu0 0
      %2025 = vmatpush1.bf16.msra.mxu0 %v2001
      %2026 = vmatprep.subr.bf16.mxu0 0
      %2027 = vmatpush1.bf16.msra.mxu0 0
      %2028 = vmatprep.subr.bf16.mxu0 0
      %2029 = vmatpush1.bf16.msra.mxu0 0
      %2030 = vmatprep.subr.bf16.mxu0 0
      %2031 = vmatpush1.bf16.msra.mxu0 0
      %2032 = vmatprep.subr.bf16.mxu0 0
      %2033 = vmatpush1.bf16.msra.mxu0 0
      %2034 = vmatprep.subr.bf16.mxu0 0
      %2035 = vmatpush1.bf16.msra.mxu0 0
      %2036 = vmatprep.subr.bf16.mxu0 0
      %2037 = vmatpush1.bf16.msra.mxu0 0
      %2038 = vmatprep.subr.bf16.mxu0 0
      %2039 = vmatpush1.bf16.msra.mxu0 0
      %2040 = vmatprep.subr.bf16.mxu0 0
      %2041 = vmatpush1.bf16.msra.mxu0 0
      %2042 = vmatprep.mubr.bf16.mxu0 0
      %2043 = vmatmul.mubr.bf16.gmra.mrb[0].mxu0 %v1941
      %v2044 = vpop.f32.mrb[0].mxu0
      %v2045 = vadd.f32 0.0, %v2044
      %v2046 = vpop.f32.mrb[0].mxu0
      %v2047 = vpop.f32.mrb[0].mxu0
      %v2048 = vadd.f32 0.0, %v2047
      %v2049 = vpop.f32.mrb[0].mxu0
      %2050 = vmatprep.mubr.bf16.mxu0 0
      %2051 = vmatmul.mubr.bf16.gmra.mrb[0].mxu0 %v1942
      %v2052 = vpop.f32.mrb[0].mxu0
      %v2053 = vadd.f32 0.0, %v2052
      %v2054 = vpop.f32.mrb[0].mxu0
      %v2055 = vpop.f32.mrb[0].mxu0
      %v2056 = vadd.f32 0.0, %v2055
      %v2057 = vpop.f32.mrb[0].mxu0
      %2058 = vmatprep.mubr.bf16.mxu0 0
      %2059 = vmatmul.mubr.bf16.gmra.mrb[0].mxu0 %v1943
      %v2060 = vpop.f32.mrb[0].mxu0
      %v2061 = vadd.f32 0.0, %v2060
      %v2062 = vpop.f32.mrb[0].mxu0
      %v2063 = vpop.f32.mrb[0].mxu0
      %v2064 = vadd.f32 0.0, %v2063
      %v2065 = vpop.f32.mrb[0].mxu0
      %2066 = vmatprep.mubr.bf16.mxu0 0
      %2067 = vmatmul.mubr.bf16.gmra.mrb[0].mxu0 %v1944
      %v2068 = vpop.f32.mrb[0].mxu0
      %v2069 = vadd.f32 0.0, %v2068
      %v2070 = vpop.f32.mrb[0].mxu0
      %v2071 = vpop.f32.mrb[0].mxu0
      %v2072 = vadd.f32 0.0, %v2071
      %v2073 = vpop.f32.mrb[0].mxu0
      %2074 = vdwg.mxu0
      %v2075 = vadd.f32 %v1933, %v2045
      %v2076 = vadd.f32 %v1934, %v2048
      %v2077 = vadd.f32 %v1935, %v2053
      %v2078 = vadd.f32 %v1936, %v2056
      %v2079 = vadd.f32 %v1937, %v2061
      %v2080 = vadd.f32 %v1938, %v2064
      %v2081 = vadd.f32 %v1939, %v2069
      %v2082 = vadd.f32 %v1940, %v2072
      %v2083 = vpack.c.bf16 %v752, %v751
      %v2084 = vpack.c.bf16 %v754, %v753
      %v2085 = vpack.c.bf16 %v756, %v755
      %v2086 = vpack.c.bf16 %v758, %v757
      %s2087 = scalar_lea.vmem %s4, 448
      %v2088 = vld [vmem:[%s2087] sm:$0xf]
      %v2089 = vld [vmem:[%s2087 + $0x4] sm:$0xf]
      %v2090 = vld [vmem:[%s2087 + $0x8] sm:$0xf]
      %v2091 = vld [vmem:[%s2087 + $0xc] sm:$0xf]
      %v2092 = vld [vmem:[%s2087 + $0x10] sm:$0xf]
      %v2093 = vld [vmem:[%s2087 + $0x14] sm:$0xf]
      %v2094 = vld [vmem:[%s2087 + $0x18] sm:$0xf]
      %v2095 = vld [vmem:[%s2087 + $0x1c] sm:$0xf]
      %v2096 = vld [vmem:[%s2087 + $0x20] sm:$0xf]
      %v2097 = vld [vmem:[%s2087 + $0x24] sm:$0xf]
      %v2098 = vld [vmem:[%s2087 + $0x28] sm:$0xf]
      %v2099 = vld [vmem:[%s2087 + $0x2c] sm:$0xf]
      %v2100 = vld [vmem:[%s2087 + $0x30] sm:$0xf]
      %v2101 = vld [vmem:[%s2087 + $0x34] sm:$0xf]
      %v2102 = vld [vmem:[%s2087 + $0x38] sm:$0xf]
      %v2103 = vld [vmem:[%s2087 + $0x3c] sm:$0xf]
      %v2120 = vunpack.c.l.b16 %v2088
      %v2121 = vunpack.c.l.b16 %v2089
      %v2122 = vunpack.c.l.b16 %v2090
      %v2123 = vunpack.c.l.b16 %v2091
      %v2124 = vunpack.c.l.b16 %v2092
      %v2125 = vunpack.c.l.b16 %v2093
      %v2126 = vunpack.c.l.b16 %v2094
      %v2127 = vunpack.c.l.b16 %v2095
      %v2128 = vunpack.c.l.b16 %v2096
      %v2129 = vunpack.c.l.b16 %v2097
      %v2130 = vunpack.c.l.b16 %v2098
      %v2131 = vunpack.c.l.b16 %v2099
      %v2132 = vunpack.c.l.b16 %v2100
      %v2133 = vunpack.c.l.b16 %v2101
      %v2134 = vunpack.c.l.b16 %v2102
      %v2135 = vunpack.c.l.b16 %v2103
      %v2136 = vpack.c.b16 %v2121, %v2120
      %v2137 = vpack.c.b16 %v2123, %v2122
      %v2138 = vpack.c.b16 %v2125, %v2124
      %v2139 = vpack.c.b16 %v2127, %v2126
      %v2140 = vpack.c.b16 %v2129, %v2128
      %v2141 = vpack.c.b16 %v2131, %v2130
      %v2142 = vpack.c.b16 %v2133, %v2132
      %v2143 = vpack.c.b16 %v2135, %v2134
      %2152 = vmatprep.subr.bf16.mxu0 0
      %2153 = vmatpush1.bf16.msra.mxu0 %v2136
      %2154 = vmatprep.subr.bf16.mxu0 0
      %2155 = vmatpush1.bf16.msra.mxu0 %v2137
      %2156 = vmatprep.subr.bf16.mxu0 0
      %2157 = vmatpush1.bf16.msra.mxu0 %v2138
      %2158 = vmatprep.subr.bf16.mxu0 0
      %2159 = vmatpush1.bf16.msra.mxu0 %v2139
      %2160 = vmatprep.subr.bf16.mxu0 0
      %2161 = vmatpush1.bf16.msra.mxu0 %v2140
      %2162 = vmatprep.subr.bf16.mxu0 0
      %2163 = vmatpush1.bf16.msra.mxu0 %v2141
      %2164 = vmatprep.subr.bf16.mxu0 0
      %2165 = vmatpush1.bf16.msra.mxu0 %v2142
      %2166 = vmatprep.subr.bf16.mxu0 0
      %2167 = vmatpush1.bf16.msra.mxu0 %v2143
      %2168 = vmatprep.subr.bf16.mxu0 0
      %2169 = vmatpush1.bf16.msra.mxu0 0
      %2170 = vmatprep.subr.bf16.mxu0 0
      %2171 = vmatpush1.bf16.msra.mxu0 0
      %2172 = vmatprep.subr.bf16.mxu0 0
      %2173 = vmatpush1.bf16.msra.mxu0 0
      %2174 = vmatprep.subr.bf16.mxu0 0
      %2175 = vmatpush1.bf16.msra.mxu0 0
      %2176 = vmatprep.subr.bf16.mxu0 0
      %2177 = vmatpush1.bf16.msra.mxu0 0
      %2178 = vmatprep.subr.bf16.mxu0 0
      %2179 = vmatpush1.bf16.msra.mxu0 0
      %2180 = vmatprep.subr.bf16.mxu0 0
      %2181 = vmatpush1.bf16.msra.mxu0 0
      %2182 = vmatprep.subr.bf16.mxu0 0
      %2183 = vmatpush1.bf16.msra.mxu0 0
      %2184 = vmatprep.mubr.bf16.mxu0 0
      %2185 = vmatmul.mubr.bf16.gmra.mrb[0].mxu0 %v2083
      %v2186 = vpop.f32.mrb[0].mxu0
      %v2187 = vadd.f32 0.0, %v2186
      %v2188 = vpop.f32.mrb[0].mxu0
      %v2189 = vpop.f32.mrb[0].mxu0
      %v2190 = vadd.f32 0.0, %v2189
      %v2191 = vpop.f32.mrb[0].mxu0
      %2192 = vmatprep.mubr.bf16.mxu0 0
      %2193 = vmatmul.mubr.bf16.gmra.mrb[0].mxu0 %v2084
      %v2194 = vpop.f32.mrb[0].mxu0
      %v2195 = vadd.f32 0.0, %v2194
      %v2196 = vpop.f32.mrb[0].mxu0
      %v2197 = vpop.f32.mrb[0].mxu0
      %v2198 = vadd.f32 0.0, %v2197
      %v2199 = vpop.f32.mrb[0].mxu0
      %2200 = vmatprep.mubr.bf16.mxu0 0
      %2201 = vmatmul.mubr.bf16.gmra.mrb[0].mxu0 %v2085
      %v2202 = vpop.f32.mrb[0].mxu0
      %v2203 = vadd.f32 0.0, %v2202
      %v2204 = vpop.f32.mrb[0].mxu0
      %v2205 = vpop.f32.mrb[0].mxu0
      %v2206 = vadd.f32 0.0, %v2205
      %v2207 = vpop.f32.mrb[0].mxu0
      %2208 = vmatprep.mubr.bf16.mxu0 0
      %2209 = vmatmul.mubr.bf16.gmra.mrb[0].mxu0 %v2086
      %v2210 = vpop.f32.mrb[0].mxu0
      %v2211 = vadd.f32 0.0, %v2210
      %v2212 = vpop.f32.mrb[0].mxu0
      %v2213 = vpop.f32.mrb[0].mxu0
      %v2214 = vadd.f32 0.0, %v2213
      %v2215 = vpop.f32.mrb[0].mxu0
      %2216 = vdwg.mxu0
      %v2217 = vadd.f32 %v2075, %v2187
      %v2218 = vadd.f32 %v2076, %v2190
      %v2219 = vadd.f32 %v2077, %v2195
      %v2220 = vadd.f32 %v2078, %v2198
      %v2221 = vadd.f32 %v2079, %v2203
      %v2222 = vadd.f32 %v2080, %v2206
      %v2223 = vadd.f32 %v2081, %v2211
      %v2224 = vadd.f32 %v2082, %v2214
      %v2227 = vrot.slane %v672, 1
      %v2228 = vrot.slane %v673, 1
      %v2229 = vsel %vm1292, %v2227, %v2228
      %v2231 = vpack.c.bf16 %v1301, %v1298
      %v2232 = vpack.c.bf16 %v1307, %v1304
      %v2233 = vpack.c.bf16 %v1313, %v1310
      %v2234 = vpack.c.bf16 %v2229, %v1316
      %s2235 = scalar_lea.vmem %s4, 512
      %v2236 = vld [vmem:[%s2235] sm:$0xf]
      %v2237 = vld [vmem:[%s2235 + $0x4] sm:$0xf]
      %v2238 = vld [vmem:[%s2235 + $0x8] sm:$0xf]
      %v2239 = vld [vmem:[%s2235 + $0xc] sm:$0xf]
      %v2240 = vld [vmem:[%s2235 + $0x10] sm:$0xf]
      %v2241 = vld [vmem:[%s2235 + $0x14] sm:$0xf]
      %v2242 = vld [vmem:[%s2235 + $0x18] sm:$0xf]
      %v2243 = vld [vmem:[%s2235 + $0x1c] sm:$0xf]
      %v2244 = vld [vmem:[%s2235 + $0x20] sm:$0xf]
      %v2245 = vld [vmem:[%s2235 + $0x24] sm:$0xf]
      %v2246 = vld [vmem:[%s2235 + $0x28] sm:$0xf]
      %v2247 = vld [vmem:[%s2235 + $0x2c] sm:$0xf]
      %v2248 = vld [vmem:[%s2235 + $0x30] sm:$0xf]
      %v2249 = vld [vmem:[%s2235 + $0x34] sm:$0xf]
      %v2250 = vld [vmem:[%s2235 + $0x38] sm:$0xf]
      %v2251 = vld [vmem:[%s2235 + $0x3c] sm:$0xf]
      %v2268 = vunpack.c.l.b16 %v2236
      %v2269 = vunpack.c.l.b16 %v2237
      %v2270 = vunpack.c.l.b16 %v2238
      %v2271 = vunpack.c.l.b16 %v2239
      %v2272 = vunpack.c.l.b16 %v2240
      %v2273 = vunpack.c.l.b16 %v2241
      %v2274 = vunpack.c.l.b16 %v2242
      %v2275 = vunpack.c.l.b16 %v2243
      %v2276 = vunpack.c.l.b16 %v2244
      %v2277 = vunpack.c.l.b16 %v2245
      %v2278 = vunpack.c.l.b16 %v2246
      %v2279 = vunpack.c.l.b16 %v2247
      %v2280 = vunpack.c.l.b16 %v2248
      %v2281 = vunpack.c.l.b16 %v2249
      %v2282 = vunpack.c.l.b16 %v2250
      %v2283 = vunpack.c.l.b16 %v2251
      %v2284 = vpack.c.b16 %v2269, %v2268
      %v2285 = vpack.c.b16 %v2271, %v2270
      %v2286 = vpack.c.b16 %v2273, %v2272
      %v2287 = vpack.c.b16 %v2275, %v2274
      %v2288 = vpack.c.b16 %v2277, %v2276
      %v2289 = vpack.c.b16 %v2279, %v2278
      %v2290 = vpack.c.b16 %v2281, %v2280
      %v2291 = vpack.c.b16 %v2283, %v2282
      %2300 = vmatprep.subr.bf16.mxu0 0
      %2301 = vmatpush1.bf16.msra.mxu0 %v2284
      %2302 = vmatprep.subr.bf16.mxu0 0
      %2303 = vmatpush1.bf16.msra.mxu0 %v2285
      %2304 = vmatprep.subr.bf16.mxu0 0
      %2305 = vmatpush1.bf16.msra.mxu0 %v2286
      %2306 = vmatprep.subr.bf16.mxu0 0
      %2307 = vmatpush1.bf16.msra.mxu0 %v2287
      %2308 = vmatprep.subr.bf16.mxu0 0
      %2309 = vmatpush1.bf16.msra.mxu0 %v2288
      %2310 = vmatprep.subr.bf16.mxu0 0
      %2311 = vmatpush1.bf16.msra.mxu0 %v2289
      %2312 = vmatprep.subr.bf16.mxu0 0
      %2313 = vmatpush1.bf16.msra.mxu0 %v2290
      %2314 = vmatprep.subr.bf16.mxu0 0
      %2315 = vmatpush1.bf16.msra.mxu0 %v2291
      %2316 = vmatprep.subr.bf16.mxu0 0
      %2317 = vmatpush1.bf16.msra.mxu0 0
      %2318 = vmatprep.subr.bf16.mxu0 0
      %2319 = vmatpush1.bf16.msra.mxu0 0
      %2320 = vmatprep.subr.bf16.mxu0 0
      %2321 = vmatpush1.bf16.msra.mxu0 0
      %2322 = vmatprep.subr.bf16.mxu0 0
      %2323 = vmatpush1.bf16.msra.mxu0 0
      %2324 = vmatprep.subr.bf16.mxu0 0
      %2325 = vmatpush1.bf16.msra.mxu0 0
      %2326 = vmatprep.subr.bf16.mxu0 0
      %2327 = vmatpush1.bf16.msra.mxu0 0
      %2328 = vmatprep.subr.bf16.mxu0 0
      %2329 = vmatpush1.bf16.msra.mxu0 0
      %2330 = vmatprep.subr.bf16.mxu0 0
      %2331 = vmatpush1.bf16.msra.mxu0 0
      %2332 = vmatprep.mubr.bf16.mxu0 0
      %2333 = vmatmul.mubr.bf16.gmra.mrb[0].mxu0 %v2231
      %v2334 = vpop.f32.mrb[0].mxu0
      %v2335 = vadd.f32 0.0, %v2334
      %v2336 = vpop.f32.mrb[0].mxu0
      %v2337 = vpop.f32.mrb[0].mxu0
      %v2338 = vadd.f32 0.0, %v2337
      %v2339 = vpop.f32.mrb[0].mxu0
      %2340 = vmatprep.mubr.bf16.mxu0 0
      %2341 = vmatmul.mubr.bf16.gmra.mrb[0].mxu0 %v2232
      %v2342 = vpop.f32.mrb[0].mxu0
      %v2343 = vadd.f32 0.0, %v2342
      %v2344 = vpop.f32.mrb[0].mxu0
      %v2345 = vpop.f32.mrb[0].mxu0
      %v2346 = vadd.f32 0.0, %v2345
      %v2347 = vpop.f32.mrb[0].mxu0
      %2348 = vmatprep.mubr.bf16.mxu0 0
      %2349 = vmatmul.mubr.bf16.gmra.mrb[0].mxu0 %v2233
      %v2350 = vpop.f32.mrb[0].mxu0
      %v2351 = vadd.f32 0.0, %v2350
      %v2352 = vpop.f32.mrb[0].mxu0
      %v2353 = vpop.f32.mrb[0].mxu0
      %v2354 = vadd.f32 0.0, %v2353
      %v2355 = vpop.f32.mrb[0].mxu0
      %2356 = vmatprep.mubr.bf16.mxu0 0
      %2357 = vmatmul.mubr.bf16.gmra.mrb[0].mxu0 %v2234
      %v2358 = vpop.f32.mrb[0].mxu0
      %v2359 = vadd.f32 0.0, %v2358
      %v2360 = vpop.f32.mrb[0].mxu0
      %v2361 = vpop.f32.mrb[0].mxu0
      %v2362 = vadd.f32 0.0, %v2361
      %v2363 = vpop.f32.mrb[0].mxu0
      %2364 = vdwg.mxu0
      %v2365 = vadd.f32 %v2217, %v2335
      %v2366 = vadd.f32 %v2218, %v2338
      %v2367 = vadd.f32 %v2219, %v2343
      %v2368 = vadd.f32 %v2220, %v2346
      %v2369 = vadd.f32 %v2221, %v2351
      %v2370 = vadd.f32 %v2222, %v2354
      %v2371 = vadd.f32 %v2223, %v2359
      %v2372 = vadd.f32 %v2224, %v2362
      %2373 = vst [vmem:[%s428] sm:$0xff] %v2365
      %2374 = vst [vmem:[%s428 + $0x8] sm:$0xff] %v2366
      %2375 = vst [vmem:[%s428 + $0x10] sm:$0xff] %v2367
      %2376 = vst [vmem:[%s428 + $0x18] sm:$0xff] %v2368
      %2377 = vst [vmem:[%s428 + $0x20] sm:$0xff] %v2369
      %2378 = vst [vmem:[%s428 + $0x28] sm:$0xff] %v2370
      %2379 = vst [vmem:[%s428 + $0x30] sm:$0xff] %v2371
      %2380 = vst [vmem:[%s428 + $0x38] sm:$0xff] %v2372
      %v2381 = vld [vmem:[%s7] sm:$0xf]
      %v2382 = vld [vmem:[%s7 + $0x4] sm:$0xf]
      %v2383 = vld [vmem:[%s7 + $0x8] sm:$0xf]
      %v2384 = vld [vmem:[%s7 + $0xc] sm:$0xf]
      %v2385 = vld [vmem:[%s7 + $0x10] sm:$0xf]
      %v2386 = vld [vmem:[%s7 + $0x14] sm:$0xf]
      %v2387 = vld [vmem:[%s7 + $0x18] sm:$0xf]
      %v2388 = vld [vmem:[%s7 + $0x1c] sm:$0xf]
      %v2389 = vld [vmem:[%s7 + $0x20] sm:$0xf]
      %v2390 = vld [vmem:[%s7 + $0x24] sm:$0xf]
      %v2391 = vld [vmem:[%s7 + $0x28] sm:$0xf]
      %v2392 = vld [vmem:[%s7 + $0x2c] sm:$0xf]
      %v2393 = vld [vmem:[%s7 + $0x30] sm:$0xf]
      %v2394 = vld [vmem:[%s7 + $0x34] sm:$0xf]
      %v2395 = vld [vmem:[%s7 + $0x38] sm:$0xf]
      %v2396 = vld [vmem:[%s7 + $0x3c] sm:$0xf]
      %v2413 = vunpack.c.l.b16 %v2381
      %v2414 = vunpack.c.l.b16 %v2382
      %v2415 = vunpack.c.l.b16 %v2383
      %v2416 = vunpack.c.l.b16 %v2384
      %v2417 = vunpack.c.l.b16 %v2385
      %v2418 = vunpack.c.l.b16 %v2386
      %v2419 = vunpack.c.l.b16 %v2387
      %v2420 = vunpack.c.l.b16 %v2388
      %v2421 = vunpack.c.l.b16 %v2389
      %v2422 = vunpack.c.l.b16 %v2390
      %v2423 = vunpack.c.l.b16 %v2391
      %v2424 = vunpack.c.l.b16 %v2392
      %v2425 = vunpack.c.l.b16 %v2393
      %v2426 = vunpack.c.l.b16 %v2394
      %v2427 = vunpack.c.l.b16 %v2395
      %v2428 = vunpack.c.l.b16 %v2396
      %v2429 = vpack.c.b16 %v2414, %v2413
      %v2430 = vpack.c.b16 %v2416, %v2415
      %v2431 = vpack.c.b16 %v2418, %v2417
      %v2432 = vpack.c.b16 %v2420, %v2419
      %v2433 = vpack.c.b16 %v2422, %v2421
      %v2434 = vpack.c.b16 %v2424, %v2423
      %v2435 = vpack.c.b16 %v2426, %v2425
      %v2436 = vpack.c.b16 %v2428, %v2427
      %2445 = vmatprep.subr.bf16.mxu0 0
      %2446 = vmatpush1.bf16.msra.mxu0 %v2429
      %2447 = vmatprep.subr.bf16.mxu0 0
      %2448 = vmatpush1.bf16.msra.mxu0 %v2430
      %2449 = vmatprep.subr.bf16.mxu0 0
      %2450 = vmatpush1.bf16.msra.mxu0 %v2431
      %2451 = vmatprep.subr.bf16.mxu0 0
      %2452 = vmatpush1.bf16.msra.mxu0 %v2432
      %2453 = vmatprep.subr.bf16.mxu0 0
      %2454 = vmatpush1.bf16.msra.mxu0 %v2433
      %2455 = vmatprep.subr.bf16.mxu0 0
      %2456 = vmatpush1.bf16.msra.mxu0 %v2434
      %2457 = vmatprep.subr.bf16.mxu0 0
      %2458 = vmatpush1.bf16.msra.mxu0 %v2435
      %2459 = vmatprep.subr.bf16.mxu0 0
      %2460 = vmatpush1.bf16.msra.mxu0 %v2436
      %2461 = vmatprep.subr.bf16.mxu0 0
      %2462 = vmatpush1.bf16.msra.mxu0 0
      %2463 = vmatprep.subr.bf16.mxu0 0
      %2464 = vmatpush1.bf16.msra.mxu0 0
      %2465 = vmatprep.subr.bf16.mxu0 0
      %2466 = vmatpush1.bf16.msra.mxu0 0
      %2467 = vmatprep.subr.bf16.mxu0 0
      %2468 = vmatpush1.bf16.msra.mxu0 0
      %2469 = vmatprep.subr.bf16.mxu0 0
      %2470 = vmatpush1.bf16.msra.mxu0 0
      %2471 = vmatprep.subr.bf16.mxu0 0
      %2472 = vmatpush1.bf16.msra.mxu0 0
      %2473 = vmatprep.subr.bf16.mxu0 0
      %2474 = vmatpush1.bf16.msra.mxu0 0
      %2475 = vmatprep.subr.bf16.mxu0 0
      %2476 = vmatpush1.bf16.msra.mxu0 0
      %2477 = vmatprep.mubr.bf16.mxu0 0
      %2478 = vmatmul.mubr.bf16.gmra.mrb[0].mxu0 %v1609
      %v2479 = vpop.f32.mrb[0].mxu0
      %v2480 = vadd.f32 0.0, %v2479
      %v2481 = vpop.f32.mrb[0].mxu0
      %v2482 = vpop.f32.mrb[0].mxu0
      %v2483 = vadd.f32 0.0, %v2482
      %v2484 = vpop.f32.mrb[0].mxu0
      %2485 = vmatprep.mubr.bf16.mxu0 0
      %2486 = vmatmul.mubr.bf16.gmra.mrb[0].mxu0 %v1610
      %v2487 = vpop.f32.mrb[0].mxu0
      %v2488 = vadd.f32 0.0, %v2487
      %v2489 = vpop.f32.mrb[0].mxu0
      %v2490 = vpop.f32.mrb[0].mxu0
      %v2491 = vadd.f32 0.0, %v2490
      %v2492 = vpop.f32.mrb[0].mxu0
      %2493 = vmatprep.mubr.bf16.mxu0 0
      %2494 = vmatmul.mubr.bf16.gmra.mrb[0].mxu0 %v1611
      %v2495 = vpop.f32.mrb[0].mxu0
      %v2496 = vadd.f32 0.0, %v2495
      %v2497 = vpop.f32.mrb[0].mxu0
      %v2498 = vpop.f32.mrb[0].mxu0
      %v2499 = vadd.f32 0.0, %v2498
      %v2500 = vpop.f32.mrb[0].mxu0
      %2501 = vmatprep.mubr.bf16.mxu0 0
      %2502 = vmatmul.mubr.bf16.gmra.mrb[0].mxu0 %v1612
      %v2503 = vpop.f32.mrb[0].mxu0
      %v2504 = vadd.f32 0.0, %v2503
      %v2505 = vpop.f32.mrb[0].mxu0
      %v2506 = vpop.f32.mrb[0].mxu0
      %v2507 = vadd.f32 0.0, %v2506
      %v2508 = vpop.f32.mrb[0].mxu0
      %2509 = vdwg.mxu0
      %2510 = vst [vmem:[%s438] sm:$0xff] %v2480
      %2511 = vst [vmem:[%s438 + $0x8] sm:$0xff] %v2483
      %2512 = vst [vmem:[%s438 + $0x10] sm:$0xff] %v2488
      %2513 = vst [vmem:[%s438 + $0x18] sm:$0xff] %v2491
      %2514 = vst [vmem:[%s438 + $0x20] sm:$0xff] %v2496
      %2515 = vst [vmem:[%s438 + $0x28] sm:$0xff] %v2499
      %2516 = vst [vmem:[%s438 + $0x30] sm:$0xff] %v2504
      %2517 = vst [vmem:[%s438 + $0x38] sm:$0xff] %v2507
      %s2518 = smul.u32 8, %s26
      %p2519 = scmp.lt.s32.totalorder %s25, 1
      %s2520 = scalar_select %p2519, %s25, 1
      %p2521 = scmp.lt.s32.totalorder %s2518, 7
      %s2522 = scalar_select %p2521, %s2518, 7
      %s2523 = smul.addr %s2520, 8
      %s2524 = sadd.s32 %s2522, %s2523
      %s2525 = smul.addr %s2524, 8
      %s2526 = scalar_lea.vmem %s8, %s2525
      %s2527 = smul.u32 8, %s26
      %p2528 = scmp.lt.s32.totalorder %s25, 1
      %s2529 = scalar_select %p2528, %s25, 1
      %p2530 = scmp.lt.s32.totalorder %s2527, 7
      %s2531 = scalar_select %p2530, %s2527, 7
      %s2532 = smul.addr %s2529, 8
      %s2533 = sadd.s32 %s2531, %s2532
      %s2534 = smul.addr %s2533, 8
      %s2535 = scalar_lea.vmem %s9, %s2534
      // Predicated region
      $region53: #{base_block_forward.2} parent=51 // pred_check
        %p2536 = pneg %p241
      $region54: #{base_block_forward.2} parent=51 // pred_check_branch
        %2538 = sbr.rel (%p2536) target = $region56
      $region55: #{base_block_forward.2} parent=51 // pred_region
        %s2539 = smul.u32 8, %s26
      $region56: #{base_block_forward.2} parent=51 // pred_fallthru
        _
      // Predicated region
      $region57: #{base_block_forward.2} parent=51 // pred_check
        %p2540 = pneg %p269
      $region58: #{base_block_forward.2} parent=51 // pred_check_branch
        %2542 = sbr.rel (%p2540) target = $region60
      $region59: #{base_block_forward.2} parent=51 // pred_region
        %s2543 = smul.u32 8, %s26
      $region60: #{base_block_forward.2} parent=51 // pred_fallthru
        _
    $region52: #{base_block_forward.2} parent=5 // pred_fallthru
      _
    %p2544 = scmp.le.s32.totalorder 2, %s16
    // Predicated region
    $region61: #{base_block_forward.2} parent=5 // pred_check
      %p2545 = pneg %p2544
    $region62: #{base_block_forward.2} parent=5 // pred_check_branch
      %2547 = sbr.rel (%p2545) target = $region64
    $region63: #{base_block_forward.2} parent=5 // pred_region
      %s2548 = ssub.s32 %s16, 2
      // Predicated region
      $region65: #{base_block_forward.2} parent=63 // pred_check
        %p2549 = pneg %p247
      $region66: #{base_block_forward.2} parent=63 // pred_check_branch
        %2551 = sbr.rel (%p2549) target = $region68
      $region67: #{base_block_forward.2} parent=63 // pred_region
        %s2552 = smul.u32 8, %s28
        %p2553 = scmp.lt.s32.totalorder %s27, 1
        %s2554 = scalar_select %p2553, %s27, 1
        %p2555 = scmp.lt.s32.totalorder %s2552, 7
        %s2556 = scalar_select %p2555, %s2552, 7
        %s2557 = smul.addr %s2554, 8
        %s2558 = sadd.s32 %s2556, %s2557
        %s2559 = smul.addr %s2558, 8
        %s2560 = scalar_lea.vmem %s8, %s2559
      $region68: #{base_block_forward.2} parent=63 // pred_fallthru
        _
      // Predicated region
      $region69: #{base_block_forward.2} parent=63 // pred_check
        %p2561 = pneg %p275
      $region70: #{base_block_forward.2} parent=63 // pred_check_branch
        %2563 = sbr.rel (%p2561) target = $region72
      $region71: #{base_block_forward.2} parent=63 // pred_region
        %s2564 = smul.u32 8, %s28
        %p2565 = scmp.lt.s32.totalorder %s27, 1
        %s2566 = scalar_select %p2565, %s27, 1
        %p2567 = scmp.lt.s32.totalorder %s2564, 7
        %s2568 = scalar_select %p2567, %s2564, 7
        %s2569 = smul.addr %s2566, 8
        %s2570 = sadd.s32 %s2568, %s2569
        %s2571 = smul.addr %s2570, 8
        %s2572 = scalar_lea.vmem %s9, %s2571
      $region72: #{base_block_forward.2} parent=63 // pred_fallthru
        _
    $region64: #{base_block_forward.2} parent=5 // pred_fallthru
      _
  $region6: #{base_block_forward.2} parent=0 // loop_footer
    %s20 = sadd.s32 1, %s16
  $region7: #{base_block_forward.2} parent=0 // loop_footer_branch
    %15 = sbr.rel target = $region3
  $region8: #{base_block_forward.2} parent=0 // loop_exit
    _

// kernel: base_block_forward.3
$region0: #{base_block_forward.3}
  #allocation0 [shape = 'u32[]', space=smem, size = 0x4, offset = 0x4, fixed_abs, tag = 'smem constant byte address 0x4 - core index']
  #allocation1 [shape = 'u32[144,128]{1,0:T(1,128)}', space=vmem, size = 0x12000, scoped, tag = 'internal scratch']
  %s0 = inlined_call_operand.vmem [shape: f32[2,10,10,128], index: 0, kind: input, shape index: {}]
  %s1 = inlined_call_operand.vmem [shape: bf16[3,3,128,128], index: 1, kind: input, shape index: {}]
  %s2 = inlined_call_operand.vmem [shape: f32[1,128], index: 2, kind: input, shape index: {}]
  %s3 = inlined_call_operand.vmem [shape: f32[1,128], index: 3, kind: input, shape index: {}]
  %s4 = inlined_call_operand.vmem [shape: f32[2,8,8,128], index: 4, kind: input, shape index: {}]
  %s5 = inlined_call_operand.vmem [shape: f32[2,8,8,128], index: 5, kind: output, shape index: {}]
  %s6 = sld [smem:[#allocation0]]
  $region53: #{base_block_forward.3} parent=0
    _
  %s8 = ssub.s32 1, %s6
  %s9 = scalar_select 0, %s8, %s6
  loop: start=0, step=1, limit=4
  $region2: #{base_block_forward.3} parent=0 // loop_pre_header
    _
  $region3: #{base_block_forward.3} parent=0 // loop_header
    %s11 = sphi 0, %s15
    %p12 = scmp.ge.s32.totalorder %s11, 4
    %s18 = sphi 0, %s30
    %s19 = sphi 0, %s26
    %s20 = sphi 0, %s18
    %s21 = sphi 0, %s19
    %s22 = sphi 0, %s20
    %s23 = sphi 0, %s21
    %s33 = sphi 0, %s35
    %s36 = sphi 0, %s33
    %s37 = sphi 0, %s36
    %s53 = sphi 0, %s37
    %s57 = sphi 0, %s57
    %s59 = sphi 0, %s57
    %s60 = sphi 0, %s59
    %s74 = sphi 0, %s60
    %s78 = sphi 0, %s78
    %s80 = sphi 0, %s78
    %s81 = sphi 0, %s80
    %s95 = sphi 0, %s81
    %s99 = sphi 0, %s99
    %s101 = sphi 0, %s99
    %s102 = sphi 0, %s101
    %s116 = sphi 0, %s102
    %s124 = sphi 0, %s126
    %s127 = sphi 0, %s124
    %s128 = sphi 0, %s127
    %s144 = sphi 0, %s128
    %s152 = sphi 0, %s154
    %s155 = sphi 0, %s152
    %s156 = sphi 0, %s155
    %s172 = sphi 0, %s156
  $region4: #{base_block_forward.3} parent=0 // loop_header_branch
    %14 = sbr.rel (%p12) target = $region8
  $region5: #{base_block_forward.3} parent=0 // loop_body
    %s16 = ssub.s32 %s11, 1
    %s17 = ssub.s32 %s11, 2
    %s24 = sadd.s32 1, %s19
    %p25 = scmp.ge.s32.totalorder %s24, 1
    %s26 = scalar_select %p25, 0, %s24
    %s27 = sadd.s32 1, %s18
    %s28 = scalar_select %p25, %s27, %s18
    %p29 = scmp.ge.s32.totalorder %s28, 2
    %s30 = scalar_select %p29, 0, %s28
    %s31 = ssub.s32 %s18, %s30
    %p32 = scmp.eq.s32.totalorder %s31, 0
    %s34 = sadd.s32 %s33, 1
    %s35 = scalar_select %p32, %s33, %s34
    %p38 = pneg %p32
    %p39 = scmp.eq.s32.totalorder %s11, 1
    %p40 = por %p38, %p39
    %p41 = scmp.ne.s32.totalorder %s33, %s36
    %p42 = scmp.eq.s32.totalorder %s11, 0
    %p43 = por %p41, %p42
    %p44 = scmp.ne.s32.totalorder %s33, %s36
    %p45 = scmp.eq.s32.totalorder %s16, 1
    %p46 = por %p44, %p45
    %p47 = scmp.ne.s32.totalorder %s36, %s37
    %p48 = scmp.eq.s32.totalorder %s16, 0
    %p49 = por %p47, %p48
    %p50 = scmp.ne.s32.totalorder %s36, %s37
    %p51 = scmp.eq.s32.totalorder %s17, 1
    %p52 = por %p50, %p51
    %p54 = scmp.ne.s32.totalorder %s37, %s53
    %p55 = scmp.eq.s32.totalorder %s17, 0
    %p56 = por %p54, %p55
    %s58 = sadd.s32 %s57, 1
    %p61 = scmp.eq.s32.totalorder %s11, 1
    %p62 = scmp.ne.s32.totalorder %s57, %s59
    %p63 = scmp.eq.s32.totalorder %s11, 0
    %p64 = por %p62, %p63
    %p65 = scmp.ne.s32.totalorder %s57, %s59
    %p66 = scmp.eq.s32.totalorder %s16, 1
    %p67 = por %p65, %p66
    %p68 = scmp.ne.s32.totalorder %s59, %s60
    %p69 = scmp.eq.s32.totalorder %s16, 0
    %p70 = por %p68, %p69
    %p71 = scmp.ne.s32.totalorder %s59, %s60
    %p72 = scmp.eq.s32.totalorder %s17, 1
    %p73 = por %p71, %p72
    %p75 = scmp.ne.s32.totalorder %s60, %s74
    %p76 = scmp.eq.s32.totalorder %s17, 0
    %p77 = por %p75, %p76
    %s79 = sadd.s32 %s78, 1
    %p82 = scmp.eq.s32.totalorder %s11, 1
    %p83 = scmp.ne.s32.totalorder %s78, %s80
    %p84 = scmp.eq.s32.totalorder %s11, 0
    %p85 = por %p83, %p84
    %p86 = scmp.ne.s32.totalorder %s78, %s80
    %p87 = scmp.eq.s32.totalorder %s16, 1
    %p88 = por %p86, %p87
    %p89 = scmp.ne.s32.totalorder %s80, %s81
    %p90 = scmp.eq.s32.totalorder %s16, 0
    %p91 = por %p89, %p90
    %p92 = scmp.ne.s32.totalorder %s80, %s81
    %p93 = scmp.eq.s32.totalorder %s17, 1
    %p94 = por %p92, %p93
    %p96 = scmp.ne.s32.totalorder %s81, %s95
    %p97 = scmp.eq.s32.totalorder %s17, 0
    %p98 = por %p96, %p97
    %s100 = sadd.s32 %s99, 1
    %p103 = scmp.eq.s32.totalorder %s11, 1
    %p104 = scmp.ne.s32.totalorder %s99, %s101
    %p105 = scmp.eq.s32.totalorder %s11, 0
    %p106 = por %p104, %p105
    %p107 = scmp.ne.s32.totalorder %s99, %s101
    %p108 = scmp.eq.s32.totalorder %s16, 1
    %p109 = por %p107, %p108
    %p110 = scmp.ne.s32.totalorder %s101, %s102
    %p111 = scmp.eq.s32.totalorder %s16, 0
    %p112 = por %p110, %p111
    %p113 = scmp.ne.s32.totalorder %s101, %s102
    %p114 = scmp.eq.s32.totalorder %s17, 1
    %p115 = por %p113, %p114
    %p117 = scmp.ne.s32.totalorder %s102, %s116
    %p118 = scmp.eq.s32.totalorder %s17, 0
    %p119 = por %p117, %p118
    %s120 = ssub.s32 %s18, %s30
    %s121 = ssub.s32 %s19, %s26
    %s122 = sor.u32 %s120, %s121
    %p123 = scmp.eq.s32.totalorder %s122, 0
    %s125 = sadd.s32 %s124, 1
    %s126 = scalar_select %p123, %s124, %s125
    %p129 = pneg %p123
    %p130 = scmp.eq.s32.totalorder %s11, 1
    %p131 = por %p129, %p130
    %p132 = scmp.ne.s32.totalorder %s124, %s127
    %p133 = scmp.eq.s32.totalorder %s11, 0
    %p134 = por %p132, %p133
    %p135 = scmp.ne.s32.totalorder %s124, %s127
    %p136 = scmp.eq.s32.totalorder %s16, 1
    %p137 = por %p135, %p136
    %p138 = scmp.ne.s32.totalorder %s127, %s128
    %p139 = scmp.eq.s32.totalorder %s16, 0
    %p140 = por %p138, %p139
    %p141 = scmp.ne.s32.totalorder %s127, %s128
    %p142 = scmp.eq.s32.totalorder %s17, 1
    %p143 = por %p141, %p142
    %p145 = scmp.ne.s32.totalorder %s128, %s144
    %p146 = scmp.eq.s32.totalorder %s17, 0
    %p147 = por %p145, %p146
    %s148 = ssub.s32 %s18, %s30
    %s149 = ssub.s32 %s19, %s26
    %s150 = sor.u32 %s148, %s149
    %p151 = scmp.eq.s32.totalorder %s150, 0
    %s153 = sadd.s32 %s152, 1
    %s154 = scalar_select %p151, %s152, %s153
    %p157 = pneg %p151
    %p158 = scmp.eq.s32.totalorder %s11, 1
    %p159 = por %p157, %p158
    %p160 = scmp.ne.s32.totalorder %s152, %s155
    %p161 = scmp.eq.s32.totalorder %s11, 0
    %p162 = por %p160, %p161
    %p163 = scmp.ne.s32.totalorder %s152, %s155
    %p164 = scmp.eq.s32.totalorder %s16, 1
    %p165 = por %p163, %p164
    %p166 = scmp.ne.s32.totalorder %s155, %s156
    %p167 = scmp.eq.s32.totalorder %s16, 0
    %p168 = por %p166, %p167
    %p169 = scmp.ne.s32.totalorder %s155, %s156
    %p170 = scmp.eq.s32.totalorder %s17, 1
    %p171 = por %p169, %p170
    %p173 = scmp.ne.s32.totalorder %s156, %s172
    %p174 = scmp.eq.s32.totalorder %s17, 0
    %p175 = por %p173, %p174
    %p176 = scmp.le.s32.totalorder 1, %s11
    %p177 = scmp.lt.s32.totalorder %s11, 3
    %p178 = pnand %p176, %p177
    %p179 = pneg %p178
    // Predicated region
    $region9: #{base_block_forward.3} parent=5 // pred_check
      _
    $region10: #{base_block_forward.3} parent=5 // pred_check_branch
      %181 = sbr.rel (%p178) target = $region12
    $region11: #{base_block_forward.3} parent=5 // pred_region
      %s182 = ssub.s32 %s11, 1
      // Predicated region
      $region13: #{base_block_forward.3} parent=11 // pred_check
        %p183 = pneg %p70
      $region14: #{base_block_forward.3} parent=11 // pred_check_branch
        %185 = sbr.rel (%p183) target = $region16
      $region15: #{base_block_forward.3} parent=11 // pred_region
        _
      $region16: #{base_block_forward.3} parent=11 // pred_fallthru
        _
      // Predicated region
      $region17: #{base_block_forward.3} parent=11 // pred_check
        %p186 = pneg %p91
      $region18: #{base_block_forward.3} parent=11 // pred_check_branch
        %188 = sbr.rel (%p186) target = $region20
      $region19: #{base_block_forward.3} parent=11 // pred_region
        _
      $region20: #{base_block_forward.3} parent=11 // pred_fallthru
        _
      // Predicated region
      $region21: #{base_block_forward.3} parent=11 // pred_check
        %p189 = pneg %p112
      $region22: #{base_block_forward.3} parent=11 // pred_check_branch
        %191 = sbr.rel (%p189) target = $region24
      $region23: #{base_block_forward.3} parent=11 // pred_region
        _
      $region24: #{base_block_forward.3} parent=11 // pred_fallthru
        _
    $region12: #{base_block_forward.3} parent=5 // pred_fallthru
      _
    %p192 = scmp.lt.s32.totalorder %s11, 2
    // Predicated region
    $region25: #{base_block_forward.3} parent=5 // pred_check
      %p193 = pneg %p192
    $region26: #{base_block_forward.3} parent=5 // pred_check_branch
      %195 = sbr.rel (%p193) target = $region28
    $region27: #{base_block_forward.3} parent=5 // pred_region
      // Predicated region
      $region29: #{base_block_forward.3} parent=27 // pred_check
        %p196 = pneg %p43
      $region30: #{base_block_forward.3} parent=27 // pred_check_branch
        %198 = sbr.rel (%p196) target = $region32
      $region31: #{base_block_forward.3} parent=27 // pred_region
        %p199 = scmp.lt.s32.totalorder %s18, 1
        %s200 = scalar_select %p199, %s18, 1
        %s201 = smul.addr %s200, 20
        %s202 = smul.addr %s201, 8
        %s203 = scalar_lea.vmem %s0, %s202
      $region32: #{base_block_forward.3} parent=27 // pred_fallthru
        _
      // Predicated region
      $region33: #{base_block_forward.3} parent=27 // pred_check
        %p204 = pneg %p134
      $region34: #{base_block_forward.3} parent=27 // pred_check_branch
        %206 = sbr.rel (%p204) target = $region36
      $region35: #{base_block_forward.3} parent=27 // pred_region
        %s207 = smul.u32 8, %s19
        %p208 = scmp.lt.s32.totalorder %s18, 1
        %s209 = scalar_select %p208, %s18, 1
        %p210 = scmp.lt.s32.totalorder %s207, 7
        %s211 = scalar_select %p210, %s207, 7
        %s212 = smul.addr %s209, 8
        %s213 = sadd.s32 %s211, %s212
        %s214 = smul.addr %s213, 8
        %s215 = scalar_lea.vmem %s4, %s214
        %s216 = smul.u32 8, %s19
      $region36: #{base_block_forward.3} parent=27 // pred_fallthru
        _
    $region28: #{base_block_forward.3} parent=5 // pred_fallthru
      _
    %p217 = scmp.le.s32.totalorder 1, %s11
    %p218 = scmp.lt.s32.totalorder %s11, 3
    %p219 = pnand %p217, %p218
    %p220 = pneg %p219
    // Predicated region
    $region37: #{base_block_forward.3} parent=5 // pred_check
      _
    $region38: #{base_block_forward.3} parent=5 // pred_check_branch
      %222 = sbr.rel (%p219) target = $region40
    $region39: #{base_block_forward.3} parent=5 // pred_region
      %s223 = ssub.s32 %s11, 1
      %p224 = scmp.lt.s32.totalorder %s20, 1
      %s225 = scalar_select %p224, %s20, 1
      %s226 = smul.addr %s225, 20
      %s227 = smul.addr %s226, 8
      %s228 = scalar_lea.vmem %s0, %s227
      %p229 = pneg %p49
      %p230 = pneg %p46
      %p231 = pneg %p70
      %p232 = pneg %p67
      %p233 = pneg %p91
      %p234 = pneg %p88
      %p235 = pneg %p112
      %p236 = pneg %p109
      %s237 = smul.u32 8, %s21
      %p238 = scmp.lt.s32.totalorder %s20, 1
      %s239 = scalar_select %p238, %s20, 1
      %p240 = scmp.lt.s32.totalorder %s237, 7
      %s241 = scalar_select %p240, %s237, 7
      %s242 = smul.addr %s239, 8
      %s243 = sadd.s32 %s241, %s242
      %s244 = smul.addr %s243, 8
      %s245 = scalar_lea.vmem %s4, %s244
      %p246 = pneg %p140
      %p247 = pneg %p137
      %p248 = pneg %p168
      %p249 = pneg %p165
      %s250 = smul.u32 8, %s21
      %p251 = scmp.lt.s32.totalorder %s20, 1
      %s252 = scalar_select %p251, %s20, 1
      %p253 = scmp.lt.s32.totalorder %s250, 7
      %s254 = scalar_select %p253, %s250, 7
      %s255 = smul.addr %s252, 8
      %s256 = sadd.s32 %s254, %s255
      %s257 = smul.addr %s256, 8
      %s258 = scalar_lea.vmem %s5, %s257
      %p259 = scmp.lt.s32.totalorder %s20, 1
      %s260 = scalar_select %p259, %s20, 1
      %s261 = smul.addr %s260, 20
      %s262 = smul.addr %s261, 8
      %s263 = scalar_lea.vmem %s0, %s262
      %s264 = smul.u32 8, %s21
      %p265 = scmp.lt.s32.totalorder %s20, 1
      %s266 = scalar_select %p265, %s20, 1
      %p267 = scmp.lt.s32.totalorder %s264, 7
      %s268 = scalar_select %p267, %s264, 7
      %s269 = smul.addr %s266, 8
      %s270 = sadd.s32 %s268, %s269
      %s271 = smul.addr %s270, 8
      %s272 = scalar_lea.vmem %s4, %s271
      %s273 = smul.u32 8, %s21
      %s274 = smul.u32 8, %s21
      %p275 = scmp.lt.s32.totalorder %s20, 1
      %s276 = scalar_select %p275, %s20, 1
      %p277 = scmp.lt.s32.totalorder %s274, 7
      %s278 = scalar_select %p277, %s274, 7
      %s279 = smul.addr %s276, 8
      %s280 = sadd.s32 %s278, %s279
      %s281 = smul.addr %s280, 8
      %s282 = scalar_lea.vmem %s5, %s281
      %s283 = smul.u32 8, %s21
      %s285 = smul.u32 %s21, 8
      %v286 = vld [vmem:[%s2] sm:$0x1]
      %v287 = vld [vmem:[%s3] sm:$0x1]
      %s288 = smul.u32 %s285, 16
      %s289 = scalar_lea.vmem %s263, %s288
      %v290 = vld [vmem:[%s289] sm:$0xff]
      %v291 = vld [vmem:[%s289 + $0x8] sm:$0x3]
      %v292 = vld [vmem:[%s289 + $0x10] sm:$0xff]
      %v293 = vld [vmem:[%s289 + $0x18] sm:$0x3]
      %v294 = vld [vmem:[%s289 + $0x20] sm:$0xff]
      %v295 = vld [vmem:[%s289 + $0x28] sm:$0x3]
      %v296 = vld [vmem:[%s289 + $0x30] sm:$0xff]
      %v297 = vld [vmem:[%s289 + $0x38] sm:$0x3]
      %v298 = vld [vmem:[%s289 + $0x40] sm:$0xff]
      %v299 = vld [vmem:[%s289 + $0x48] sm:$0x3]
      %v300 = vld [vmem:[%s289 + $0x50] sm:$0xff]
      %v301 = vld [vmem:[%s289 + $0x58] sm:$0x3]
      %v302 = vld [vmem:[%s289 + $0x60] sm:$0xff]
      %v303 = vld [vmem:[%s289 + $0x68] sm:$0x3]
      %v304 = vld [vmem:[%s289 + $0x70] sm:$0xff]
      %v305 = vld [vmem:[%s289 + $0x78] sm:$0x3]
      %v306 = vld [vmem:[%s289 + $0x80] sm:$0xff]
      %v307 = vld [vmem:[%s289 + $0x88] sm:$0x3]
      %v308 = vld [vmem:[%s289 + $0x90] sm:$0xff]
      %v309 = vld [vmem:[%s289 + $0x98] sm:$0x3]
      %v311 = vlaneseq
      %v312 = vshrl.u32 %v311, 7
      %v313 = vsub.s32 0, %v312
      %v314 = vrot.slane %v286, %v313
      %v316 = vmul.f32 %v290, %v314
      %v317 = vmul.f32 %v291, %v314
      %v318 = vmul.f32 %v292, %v314
      %v319 = vmul.f32 %v293, %v314
      %v320 = vmul.f32 %v294, %v314
      %v321 = vmul.f32 %v295, %v314
      %v322 = vmul.f32 %v296, %v314
      %v323 = vmul.f32 %v297, %v314
      %v324 = vmul.f32 %v298, %v314
      %v325 = vmul.f32 %v299, %v314
      %v326 = vmul.f32 %v300, %v314
      %v327 = vmul.f32 %v301, %v314
      %v328 = vmul.f32 %v302, %v314
      %v329 = vmul.f32 %v303, %v314
      %v330 = vmul.f32 %v304, %v314
      %v331 = vmul.f32 %v305, %v314
      %v332 = vmul.f32 %v306, %v314
      %v333 = vmul.f32 %v307, %v314
      %v334 = vmul.f32 %v308, %v314
      %v335 = vmul.f32 %v309, %v314
      %v337 = vlaneseq
      %v338 = vshrl.u32 %v337, 7
      %v339 = vsub.s32 0, %v338
      %v340 = vrot.slane %v287, %v339
      %v342 = vadd.f32 %v316, %v340
      %v343 = vadd.f32 %v317, %v340
      %v344 = vadd.f32 %v318, %v340
      %v345 = vadd.f32 %v319, %v340
      %v346 = vadd.f32 %v320, %v340
      %v347 = vadd.f32 %v321, %v340
      %v348 = vadd.f32 %v322, %v340
      %v349 = vadd.f32 %v323, %v340
      %v350 = vadd.f32 %v324, %v340
      %v351 = vadd.f32 %v325, %v340
      %v352 = vadd.f32 %v326, %v340
      %v353 = vadd.f32 %v327, %v340
      %v354 = vadd.f32 %v328, %v340
      %v355 = vadd.f32 %v329, %v340
      %v356 = vadd.f32 %v330, %v340
      %v357 = vadd.f32 %v331, %v340
      %v358 = vadd.f32 %v332, %v340
      %v359 = vadd.f32 %v333, %v340
      %v360 = vadd.f32 %v334, %v340
      %v361 = vadd.f32 %v335, %v340
      %v362 = vmax.f32 %v342, 0.0
      %v363 = vmax.f32 %v343, 0.0
      %v364 = vmax.f32 %v344, 0.0
      %v365 = vmax.f32 %v345, 0.0
      %v366 = vmax.f32 %v346, 0.0
      %v367 = vmax.f32 %v347, 0.0
      %v368 = vmax.f32 %v348, 0.0
      %v369 = vmax.f32 %v349, 0.0
      %v370 = vmax.f32 %v350, 0.0
      %v371 = vmax.f32 %v351, 0.0
      %v372 = vmax.f32 %v352, 0.0
      %v373 = vmax.f32 %v353, 0.0
      %v374 = vmax.f32 %v354, 0.0
      %v375 = vmax.f32 %v355, 0.0
      %v376 = vmax.f32 %v356, 0.0
      %v377 = vmax.f32 %v357, 0.0
      %v378 = vmax.f32 %v358, 0.0
      %v379 = vmax.f32 %v359, 0.0
      %v380 = vmax.f32 %v360, 0.0
      %v381 = vmax.f32 %v361, 0.0
      %v382 = vlaneseq
      %v383 = vshrl.u32 %v382, 7
      %v384 = vadd.s32 %v383, 8
      %v385 = vstv %s285
      %v386 = vadd.s32 %v385, 1
      %v387 = vadd.s32 %v385, 2
      %v388 = vadd.s32 %v385, 3
      %v389 = vadd.s32 %v385, 4
      %v390 = vadd.s32 %v385, 5
      %v391 = vadd.s32 %v385, 6
      %v392 = vadd.s32 %v385, 7
      %v393 = vadd.s32 %v385, 8
      %v394 = vadd.s32 %v385, 9
      %vm395 = vcmp.gt.s32.totalorder %v385, 0
      %vm396 = vcmp.gt.s32.totalorder %v386, 0
      %vm397 = vcmp.gt.s32.totalorder %v387, 0
      %vm398 = vcmp.gt.s32.totalorder %v388, 0
      %vm399 = vcmp.gt.s32.totalorder %v389, 0
      %vm400 = vcmp.gt.s32.totalorder %v390, 0
      %vm401 = vcmp.gt.s32.totalorder %v391, 0
      %vm402 = vcmp.gt.s32.totalorder %v392, 0
      %vm403 = vcmp.gt.s32.totalorder %v393, 0
      %vm404 = vcmp.gt.s32.totalorder %v394, 0
      %vm405 = vcmp.lt.s32.totalorder %v385, 9
      %vm406 = vcmp.lt.s32.totalorder %v386, 9
      %vm407 = vcmp.lt.s32.totalorder %v387, 9
      %vm408 = vcmp.lt.s32.totalorder %v388, 9
      %vm409 = vcmp.lt.s32.totalorder %v389, 9
      %vm410 = vcmp.lt.s32.totalorder %v390, 9
      %vm411 = vcmp.lt.s32.totalorder %v391, 9
      %vm412 = vcmp.lt.s32.totalorder %v392, 9
      %vm413 = vcmp.lt.s32.totalorder %v393, 9
      %vm414 = vcmp.lt.s32.totalorder %v394, 9
      %vm415 = vmand %vm395, %vm405
      %vm416 = vmand %vm396, %vm406
      %vm417 = vmand %vm397, %vm407
      %vm418 = vmand %vm398, %vm408
      %vm419 = vmand %vm399, %vm409
      %vm420 = vmand %vm400, %vm410
      %vm421 = vmand %vm401, %vm411
      %vm422 = vmand %vm402, %vm412
      %vm423 = vmand %vm403, %vm413
      %vm424 = vmand %vm404, %vm414
      %vm425 = vcmp.gt.s32.totalorder %v383, 0
      %vm426 = vcmp.gt.s32.totalorder %v384, 0
      %vm427 = vmand %vm415, %vm425
      %vm428 = vmand %vm415, %vm426
      %vm429 = vmand %vm416, %vm425
      %vm430 = vmand %vm416, %vm426
      %vm431 = vmand %vm417, %vm425
      %vm432 = vmand %vm417, %vm426
      %vm433 = vmand %vm418, %vm425
      %vm434 = vmand %vm418, %vm426
      %vm435 = vmand %vm419, %vm425
      %vm436 = vmand %vm419, %vm426
      %vm437 = vmand %vm420, %vm425
      %vm438 = vmand %vm420, %vm426
      %vm439 = vmand %vm421, %vm425
      %vm440 = vmand %vm421, %vm426
      %vm441 = vmand %vm422, %vm425
      %vm442 = vmand %vm422, %vm426
      %vm443 = vmand %vm423, %vm425
      %vm444 = vmand %vm423, %vm426
      %vm445 = vmand %vm424, %vm425
      %vm446 = vmand %vm424, %vm426
      %vm447 = vcmp.lt.s32.totalorder %v383, 9
      %vm448 = vcmp.lt.s32.totalorder %v384, 9
      %vm449 = vmand %vm427, %vm447
      %vm450 = vmand %vm428, %vm448
      %vm451 = vmand %vm429, %vm447
      %vm452 = vmand %vm430, %vm448
      %vm453 = vmand %vm431, %vm447
      %vm454 = vmand %vm432, %vm448
      %vm455 = vmand %vm433, %vm447
      %vm456 = vmand %vm434, %vm448
      %vm457 = vmand %vm435, %vm447
      %vm458 = vmand %vm436, %vm448
      %vm459 = vmand %vm437, %vm447
      %vm460 = vmand %vm438, %vm448
      %vm461 = vmand %vm439, %vm447
      %vm462 = vmand %vm440, %vm448
      %vm463 = vmand %vm441, %vm447
      %vm464 = vmand %vm442, %vm448
      %vm465 = vmand %vm443, %vm447
      %vm466 = vmand %vm444, %vm448
      %vm467 = vmand %vm445, %vm447
      %vm468 = vmand %vm446, %vm448
      %v469 = vsel %vm449, 1, 0
      %v470 = vsel %vm450, 1, 0
      %v471 = vsel %vm451, 1, 0
      %v472 = vsel %vm452, 1, 0
      %v473 = vsel %vm453, 1, 0
      %v474 = vsel %vm454, 1, 0
      %v475 = vsel %vm455, 1, 0
      %v476 = vsel %vm456, 1, 0
      %v477 = vsel %vm457, 1, 0
      %v478 = vsel %vm458, 1, 0
      %v479 = vsel %vm459, 1, 0
      %v480 = vsel %vm460, 1, 0
      %v481 = vsel %vm461, 1, 0
      %v482 = vsel %vm462, 1, 0
      %v483 = vsel %vm463, 1, 0
      %v484 = vsel %vm464, 1, 0
      %v485 = vsel %vm465, 1, 0
      %v486 = vsel %vm466, 1, 0
      %v487 = vsel %vm467, 1, 0
      %v488 = vsel %vm468, 1, 0
      %vm489 = vcmp.eq.s32.totalorder %v469, 1
      %vm490 = vcmp.eq.s32.totalorder %v470, 1
      %vm491 = vcmp.eq.s32.totalorder %v471, 1
      %vm492 = vcmp.eq.s32.totalorder %v472, 1
      %vm493 = vcmp.eq.s32.totalorder %v473, 1
      %vm494 = vcmp.eq.s32.totalorder %v474, 1
      %vm495 = vcmp.eq.s32.totalorder %v475, 1
      %vm496 = vcmp.eq.s32.totalorder %v476, 1
      %vm497 = vcmp.eq.s32.totalorder %v477, 1
      %vm498 = vcmp.eq.s32.totalorder %v478, 1
      %vm499 = vcmp.eq.s32.totalorder %v479, 1
      %vm500 = vcmp.eq.s32.totalorder %v480, 1
      %vm501 = vcmp.eq.s32.totalorder %v481, 1
      %vm502 = vcmp.eq.s32.totalorder %v482, 1
      %vm503 = vcmp.eq.s32.totalorder %v483, 1
      %vm504 = vcmp.eq.s32.totalorder %v484, 1
      %vm505 = vcmp.eq.s32.totalorder %v485, 1
      %vm506 = vcmp.eq.s32.totalorder %v486, 1
      %vm507 = vcmp.eq.s32.totalorder %v487, 1
      %vm508 = vcmp.eq.s32.totalorder %v488, 1
      %v509 = vsel %vm489, %v362, 0.0
      %v510 = vsel %vm490, %v363, 0.0
      %v511 = vsel %vm491, %v364, 0.0
      %v512 = vsel %vm492, %v365, 0.0
      %v513 = vsel %vm493, %v366, 0.0
      %v514 = vsel %vm494, %v367, 0.0
      %v515 = vsel %vm495, %v368, 0.0
      %v516 = vsel %vm496, %v369, 0.0
      %v517 = vsel %vm497, %v370, 0.0
      %v518 = vsel %vm498, %v371, 0.0
      %v519 = vsel %vm499, %v372, 0.0
      %v520 = vsel %vm500, %v373, 0.0
      %v521 = vsel %vm501, %v374, 0.0
      %v522 = vsel %vm502, %v375, 0.0
      %v523 = vsel %vm503, %v376, 0.0
      %v524 = vsel %vm504, %v377, 0.0
      %v525 = vsel %vm505, %v378, 0.0
      %v526 = vsel %vm506, %v379, 0.0
      %v527 = vsel %vm507, %v380, 0.0
      %v528 = vsel %vm508, %v381, 0.0
      %v529 = vpack.c.bf16 %v511, %v509
      %v530 = vpack.c.bf16 %v515, %v513
      %v531 = vpack.c.bf16 %v519, %v517
      %v532 = vpack.c.bf16 %v523, %v521
      %v533 = vld [vmem:[%s1] sm:$0xf]
      %v534 = vld [vmem:[%s1 + $0x4] sm:$0xf]
      %v535 = vld [vmem:[%s1 + $0x8] sm:$0xf]
      %v536 = vld [vmem:[%s1 + $0xc] sm:$0xf]
      %v537 = vld [vmem:[%s1 + $0x10] sm:$0xf]
      %v538 = vld [vmem:[%s1 + $0x14] sm:$0xf]
      %v539 = vld [vmem:[%s1 + $0x18] sm:$0xf]
      %v540 = vld [vmem:[%s1 + $0x1c] sm:$0xf]
      %v541 = vld [vmem:[%s1 + $0x20] sm:$0xf]
      %v542 = vld [vmem:[%s1 + $0x24] sm:$0xf]
      %v543 = vld [vmem:[%s1 + $0x28] sm:$0xf]
      %v544 = vld [vmem:[%s1 + $0x2c] sm:$0xf]
      %v545 = vld [vmem:[%s1 + $0x30] sm:$0xf]
      %v546 = vld [vmem:[%s1 + $0x34] sm:$0xf]
      %v547 = vld [vmem:[%s1 + $0x38] sm:$0xf]
      %v548 = vld [vmem:[%s1 + $0x3c] sm:$0xf]
      %vm565 = vcmask 1046528
      %v566 = vrot.slane %v509, 1
      %v567 = vrot.slane %v510, 1
      %v568 = vsel %vm565, %v566, %v567
      %v569 = vrot.slane %v511, 1
      %v570 = vrot.slane %v512, 1
      %v571 = vsel %vm565, %v569, %v570
      %v572 = vrot.slane %v513, 1
      %v573 = vrot.slane %v514, 1
      %v574 = vsel %vm565, %v572, %v573
      %v575 = vrot.slane %v515, 1
      %v576 = vrot.slane %v516, 1
      %v577 = vsel %vm565, %v575, %v576
      %v578 = vrot.slane %v517, 1
      %v579 = vrot.slane %v518, 1
      %v580 = vsel %vm565, %v578, %v579
      %v581 = vrot.slane %v519, 1
      %v582 = vrot.slane %v520, 1
      %v583 = vsel %vm565, %v581, %v582
      %v584 = vrot.slane %v521, 1
      %v585 = vrot.slane %v522, 1
      %v586 = vsel %vm565, %v584, %v585
      %v587 = vrot.slane %v523, 1
      %v588 = vrot.slane %v524, 1
      %v589 = vsel %vm565, %v587, %v588
      %v598 = vpack.c.bf16 %v571, %v568
      %v599 = vpack.c.bf16 %v577, %v574
      %v600 = vpack.c.bf16 %v583, %v580
      %v601 = vpack.c.bf16 %v589, %v586
      %s602 = scalar_lea.vmem %s1, 64
      %v603 = vld [vmem:[%s602] sm:$0xf]
      %v604 = vld [vmem:[%s602 + $0x4] sm:$0xf]
      %v605 = vld [vmem:[%s602 + $0x8] sm:$0xf]
      %v606 = vld [vmem:[%s602 + $0xc] sm:$0xf]
      %v607 = vld [vmem:[%s602 + $0x10] sm:$0xf]
      %v608 = vld [vmem:[%s602 + $0x14] sm:$0xf]
      %v609 = vld [vmem:[%s602 + $0x18] sm:$0xf]
      %v610 = vld [vmem:[%s602 + $0x1c] sm:$0xf]
      %v611 = vld [vmem:[%s602 + $0x20] sm:$0xf]
      %v612 = vld [vmem:[%s602 + $0x24] sm:$0xf]
      %v613 = vld [vmem:[%s602 + $0x28] sm:$0xf]
      %v614 = vld [vmem:[%s602 + $0x2c] sm:$0xf]
      %v615 = vld [vmem:[%s602 + $0x30] sm:$0xf]
      %v616 = vld [vmem:[%s602 + $0x34] sm:$0xf]
      %v617 = vld [vmem:[%s602 + $0x38] sm:$0xf]
      %v618 = vld [vmem:[%s602 + $0x3c] sm:$0xf]
      %v635 = vunpack.c.l.b16 %v603
      %v636 = vunpack.c.l.b16 %v604
      %v637 = vunpack.c.l.b16 %v605
      %v638 = vunpack.c.l.b16 %v606
      %v639 = vunpack.c.l.b16 %v607
      %v640 = vunpack.c.l.b16 %v608
      %v641 = vunpack.c.l.b16 %v609
      %v642 = vunpack.c.l.b16 %v610
      %v643 = vunpack.c.l.b16 %v611
      %v644 = vunpack.c.l.b16 %v612
      %v645 = vunpack.c.l.b16 %v613
      %v646 = vunpack.c.l.b16 %v614
      %v647 = vunpack.c.l.b16 %v615
      %v648 = vunpack.c.l.b16 %v616
      %v649 = vunpack.c.l.b16 %v617
      %v650 = vunpack.c.l.b16 %v618
      %v651 = vpack.c.b16 %v636, %v635
      %v652 = vpack.c.b16 %v638, %v637
      %v653 = vpack.c.b16 %v640, %v639
      %v654 = vpack.c.b16 %v642, %v641
      %v655 = vpack.c.b16 %v644, %v643
      %v656 = vpack.c.b16 %v646, %v645
      %v657 = vpack.c.b16 %v648, %v647
      %v658 = vpack.c.b16 %v650, %v649
      %667 = vmatprep.subr.bf16.mxu0 0
      %668 = vmatpush1.bf16.msra.mxu0 %v651
      %669 = vmatprep.subr.bf16.mxu0 0
      %670 = vmatpush1.bf16.msra.mxu0 %v652
      %671 = vmatprep.subr.bf16.mxu0 0
      %672 = vmatpush1.bf16.msra.mxu0 %v653
      %673 = vmatprep.subr.bf16.mxu0 0
      %674 = vmatpush1.bf16.msra.mxu0 %v654
      %675 = vmatprep.subr.bf16.mxu0 0
      %676 = vmatpush1.bf16.msra.mxu0 %v655
      %677 = vmatprep.subr.bf16.mxu0 0
      %678 = vmatpush1.bf16.msra.mxu0 %v656
      %679 = vmatprep.subr.bf16.mxu0 0
      %680 = vmatpush1.bf16.msra.mxu0 %v657
      %681 = vmatprep.subr.bf16.mxu0 0
      %682 = vmatpush1.bf16.msra.mxu0 %v658
      %683 = vmatprep.subr.bf16.mxu0 0
      %684 = vmatpush1.bf16.msra.mxu0 0
      %685 = vmatprep.subr.bf16.mxu0 0
      %686 = vmatpush1.bf16.msra.mxu0 0
      %687 = vmatprep.subr.bf16.mxu0 0
      %688 = vmatpush1.bf16.msra.mxu0 0
      %689 = vmatprep.subr.bf16.mxu0 0
      %690 = vmatpush1.bf16.msra.mxu0 0
      %691 = vmatprep.subr.bf16.mxu0 0
      %692 = vmatpush1.bf16.msra.mxu0 0
      %693 = vmatprep.subr.bf16.mxu0 0
      %694 = vmatpush1.bf16.msra.mxu0 0
      %695 = vmatprep.subr.bf16.mxu0 0
      %696 = vmatpush1.bf16.msra.mxu0 0
      %697 = vmatprep.subr.bf16.mxu0 0
      %698 = vmatpush1.bf16.msra.mxu0 0
      %699 = vmatprep.mubr.bf16.mxu0 0
      %700 = vmatmul.mubr.bf16.gmra.mrb[0].mxu0 %v598
      %v701 = vpop.f32.mrb[0].mxu0
      %v702 = vadd.f32 0.0, %v701
      %v703 = vpop.f32.mrb[0].mxu0
      %v704 = vpop.f32.mrb[0].mxu0
      %v705 = vadd.f32 0.0, %v704
      %v706 = vpop.f32.mrb[0].mxu0
      %707 = vmatprep.mubr.bf16.mxu0 0
      %708 = vmatmul.mubr.bf16.gmra.mrb[0].mxu0 %v599
      %v709 = vpop.f32.mrb[0].mxu0
      %v710 = vadd.f32 0.0, %v709
      %v711 = vpop.f32.mrb[0].mxu0
      %v712 = vpop.f32.mrb[0].mxu0
      %v713 = vadd.f32 0.0, %v712
      %v714 = vpop.f32.mrb[0].mxu0
      %715 = vmatprep.mubr.bf16.mxu0 0
      %716 = vmatmul.mubr.bf16.gmra.mrb[0].mxu0 %v600
      %v717 = vpop.f32.mrb[0].mxu0
      %v718 = vadd.f32 0.0, %v717
      %v719 = vpop.f32.mrb[0].mxu0
      %v720 = vpop.f32.mrb[0].mxu0
      %v721 = vadd.f32 0.0, %v720
      %v722 = vpop.f32.mrb[0].mxu0
      %723 = vmatprep.mubr.bf16.mxu0 0
      %724 = vmatmul.mubr.bf16.gmra.mrb[0].mxu0 %v601
      %v725 = vpop.f32.mrb[0].mxu0
      %v726 = vadd.f32 0.0, %v725
      %v727 = vpop.f32.mrb[0].mxu0
      %v728 = vpop.f32.mrb[0].mxu0
      %v729 = vadd.f32 0.0, %v728
      %v730 = vpop.f32.mrb[0].mxu0
      %731 = vdwg.mxu0
      %v748 = vunpack.c.l.b16 %v533
      %v749 = vunpack.c.l.b16 %v534
      %v750 = vunpack.c.l.b16 %v535
      %v751 = vunpack.c.l.b16 %v536
      %v752 = vunpack.c.l.b16 %v537
      %v753 = vunpack.c.l.b16 %v538
      %v754 = vunpack.c.l.b16 %v539
      %v755 = vunpack.c.l.b16 %v540
      %v756 = vunpack.c.l.b16 %v541
      %v757 = vunpack.c.l.b16 %v542
      %v758 = vunpack.c.l.b16 %v543
      %v759 = vunpack.c.l.b16 %v544
      %v760 = vunpack.c.l.b16 %v545
      %v761 = vunpack.c.l.b16 %v546
      %v762 = vunpack.c.l.b16 %v547
      %v763 = vunpack.c.l.b16 %v548
      %v764 = vpack.c.b16 %v749, %v748
      %v765 = vpack.c.b16 %v751, %v750
      %v766 = vpack.c.b16 %v753, %v752
      %v767 = vpack.c.b16 %v755, %v754
      %v768 = vpack.c.b16 %v757, %v756
      %v769 = vpack.c.b16 %v759, %v758
      %v770 = vpack.c.b16 %v761, %v760
      %v771 = vpack.c.b16 %v763, %v762
      %780 = vmatprep.subr.bf16.mxu0 0
      %781 = vmatpush1.bf16.msra.mxu0 %v764
      %782 = vmatprep.subr.bf16.mxu0 0
      %783 = vmatpush1.bf16.msra.mxu0 %v765
      %784 = vmatprep.subr.bf16.mxu0 0
      %785 = vmatpush1.bf16.msra.mxu0 %v766
      %786 = vmatprep.subr.bf16.mxu0 0
      %787 = vmatpush1.bf16.msra.mxu0 %v767
      %788 = vmatprep.subr.bf16.mxu0 0
      %789 = vmatpush1.bf16.msra.mxu0 %v768
      %790 = vmatprep.subr.bf16.mxu0 0
      %791 = vmatpush1.bf16.msra.mxu0 %v769
      %792 = vmatprep.subr.bf16.mxu0 0
      %793 = vmatpush1.bf16.msra.mxu0 %v770
      %794 = vmatprep.subr.bf16.mxu0 0
      %795 = vmatpush1.bf16.msra.mxu0 %v771
      %796 = vmatprep.subr.bf16.mxu0 0
      %797 = vmatpush1.bf16.msra.mxu0 0
      %798 = vmatprep.subr.bf16.mxu0 0
      %799 = vmatpush1.bf16.msra.mxu0 0
      %800 = vmatprep.subr.bf16.mxu0 0
      %801 = vmatpush1.bf16.msra.mxu0 0
      %802 = vmatprep.subr.bf16.mxu0 0
      %803 = vmatpush1.bf16.msra.mxu0 0
      %804 = vmatprep.subr.bf16.mxu0 0
      %805 = vmatpush1.bf16.msra.mxu0 0
      %806 = vmatprep.subr.bf16.mxu0 0
      %807 = vmatpush1.bf16.msra.mxu0 0
      %808 = vmatprep.subr.bf16.mxu0 0
      %809 = vmatpush1.bf16.msra.mxu0 0
      %810 = vmatprep.subr.bf16.mxu0 0
      %811 = vmatpush1.bf16.msra.mxu0 0
      %812 = vmatprep.mubr.bf16.mxu0 0
      %813 = vmatmul.mubr.bf16.gmra.mrb[0].mxu0 %v529
      %v814 = vpop.f32.mrb[0].mxu0
      %v815 = vadd.f32 %v702, %v814
      %v816 = vpop.f32.mrb[0].mxu0
      %v817 = vpop.f32.mrb[0].mxu0
      %v818 = vadd.f32 %v705, %v817
      %v819 = vpop.f32.mrb[0].mxu0
      %820 = vmatprep.mubr.bf16.mxu0 0
      %821 = vmatmul.mubr.bf16.gmra.mrb[0].mxu0 %v530
      %v822 = vpop.f32.mrb[0].mxu0
      %v823 = vadd.f32 %v710, %v822
      %v824 = vpop.f32.mrb[0].mxu0
      %v825 = vpop.f32.mrb[0].mxu0
      %v826 = vadd.f32 %v713, %v825
      %v827 = vpop.f32.mrb[0].mxu0
      %828 = vmatprep.mubr.bf16.mxu0 0
      %829 = vmatmul.mubr.bf16.gmra.mrb[0].mxu0 %v531
      %v830 = vpop.f32.mrb[0].mxu0
      %v831 = vadd.f32 %v718, %v830
      %v832 = vpop.f32.mrb[0].mxu0
      %v833 = vpop.f32.mrb[0].mxu0
      %v834 = vadd.f32 %v721, %v833
      %v835 = vpop.f32.mrb[0].mxu0
      %836 = vmatprep.mubr.bf16.mxu0 0
      %837 = vmatmul.mubr.bf16.gmra.mrb[0].mxu0 %v532
      %v838 = vpop.f32.mrb[0].mxu0
      %v839 = vadd.f32 %v726, %v838
      %v840 = vpop.f32.mrb[0].mxu0
      %v841 = vpop.f32.mrb[0].mxu0
      %v842 = vadd.f32 %v729, %v841
      %v843 = vpop.f32.mrb[0].mxu0
      %844 = vdwg.mxu0
      %vm845 = vcmask 1045504
      %v846 = vrot.slane %v509, 2
      %v847 = vrot.slane %v510, 2
      %v848 = vsel %vm845, %v846, %v847
      %v849 = vrot.slane %v511, 2
      %v850 = vrot.slane %v512, 2
      %v851 = vsel %vm845, %v849, %v850
      %v852 = vrot.slane %v513, 2
      %v853 = vrot.slane %v514, 2
      %v854 = vsel %vm845, %v852, %v853
      %v855 = vrot.slane %v515, 2
      %v856 = vrot.slane %v516, 2
      %v857 = vsel %vm845, %v855, %v856
      %v858 = vrot.slane %v517, 2
      %v859 = vrot.slane %v518, 2
      %v860 = vsel %vm845, %v858, %v859
      %v861 = vrot.slane %v519, 2
      %v862 = vrot.slane %v520, 2
      %v863 = vsel %vm845, %v861, %v862
      %v864 = vrot.slane %v521, 2
      %v865 = vrot.slane %v522, 2
      %v866 = vsel %vm845, %v864, %v865
      %v867 = vrot.slane %v523, 2
      %v868 = vrot.slane %v524, 2
      %v869 = vsel %vm845, %v867, %v868
      %v878 = vpack.c.bf16 %v851, %v848
      %v879 = vpack.c.bf16 %v857, %v854
      %v880 = vpack.c.bf16 %v863, %v860
      %v881 = vpack.c.bf16 %v869, %v866
      %s882 = scalar_lea.vmem %s1, 128
      %v883 = vld [vmem:[%s882] sm:$0xf]
      %v884 = vld [vmem:[%s882 + $0x4] sm:$0xf]
      %v885 = vld [vmem:[%s882 + $0x8] sm:$0xf]
      %v886 = vld [vmem:[%s882 + $0xc] sm:$0xf]
      %v887 = vld [vmem:[%s882 + $0x10] sm:$0xf]
      %v888 = vld [vmem:[%s882 + $0x14] sm:$0xf]
      %v889 = vld [vmem:[%s882 + $0x18] sm:$0xf]
      %v890 = vld [vmem:[%s882 + $0x1c] sm:$0xf]
      %v891 = vld [vmem:[%s882 + $0x20] sm:$0xf]
      %v892 = vld [vmem:[%s882 + $0x24] sm:$0xf]
      %v893 = vld [vmem:[%s882 + $0x28] sm:$0xf]
      %v894 = vld [vmem:[%s882 + $0x2c] sm:$0xf]
      %v895 = vld [vmem:[%s882 + $0x30] sm:$0xf]
      %v896 = vld [vmem:[%s882 + $0x34] sm:$0xf]
      %v897 = vld [vmem:[%s882 + $0x38] sm:$0xf]
      %v898 = vld [vmem:[%s882 + $0x3c] sm:$0xf]
      %v915 = vunpack.c.l.b16 %v883
      %v916 = vunpack.c.l.b16 %v884
      %v917 = vunpack.c.l.b16 %v885
      %v918 = vunpack.c.l.b16 %v886
      %v919 = vunpack.c.l.b16 %v887
      %v920 = vunpack.c.l.b16 %v888
      %v921 = vunpack.c.l.b16 %v889
      %v922 = vunpack.c.l.b16 %v890
      %v923 = vunpack.c.l.b16 %v891
      %v924 = vunpack.c.l.b16 %v892
      %v925 = vunpack.c.l.b16 %v893
      %v926 = vunpack.c.l.b16 %v894
      %v927 = vunpack.c.l.b16 %v895
      %v928 = vunpack.c.l.b16 %v896
      %v929 = vunpack.c.l.b16 %v897
      %v930 = vunpack.c.l.b16 %v898
      %v931 = vpack.c.b16 %v916, %v915
      %v932 = vpack.c.b16 %v918, %v917
      %v933 = vpack.c.b16 %v920, %v919
      %v934 = vpack.c.b16 %v922, %v921
      %v935 = vpack.c.b16 %v924, %v923
      %v936 = vpack.c.b16 %v926, %v925
      %v937 = vpack.c.b16 %v928, %v927
      %v938 = vpack.c.b16 %v930, %v929
      %947 = vmatprep.subr.bf16.mxu0 0
      %948 = vmatpush1.bf16.msra.mxu0 %v931
      %949 = vmatprep.subr.bf16.mxu0 0
      %950 = vmatpush1.bf16.msra.mxu0 %v932
      %951 = vmatprep.subr.bf16.mxu0 0
      %952 = vmatpush1.bf16.msra.mxu0 %v933
      %953 = vmatprep.subr.bf16.mxu0 0
      %954 = vmatpush1.bf16.msra.mxu0 %v934
      %955 = vmatprep.subr.bf16.mxu0 0
      %956 = vmatpush1.bf16.msra.mxu0 %v935
      %957 = vmatprep.subr.bf16.mxu0 0
      %958 = vmatpush1.bf16.msra.mxu0 %v936
      %959 = vmatprep.subr.bf16.mxu0 0
      %960 = vmatpush1.bf16.msra.mxu0 %v937
      %961 = vmatprep.subr.bf16.mxu0 0
      %962 = vmatpush1.bf16.msra.mxu0 %v938
      %963 = vmatprep.subr.bf16.mxu0 0
      %964 = vmatpush1.bf16.msra.mxu0 0
      %965 = vmatprep.subr.bf16.mxu0 0
      %966 = vmatpush1.bf16.msra.mxu0 0
      %967 = vmatprep.subr.bf16.mxu0 0
      %968 = vmatpush1.bf16.msra.mxu0 0
      %969 = vmatprep.subr.bf16.mxu0 0
      %970 = vmatpush1.bf16.msra.mxu0 0
      %971 = vmatprep.subr.bf16.mxu0 0
      %972 = vmatpush1.bf16.msra.mxu0 0
      %973 = vmatprep.subr.bf16.mxu0 0
      %974 = vmatpush1.bf16.msra.mxu0 0
      %975 = vmatprep.subr.bf16.mxu0 0
      %976 = vmatpush1.bf16.msra.mxu0 0
      %977 = vmatprep.subr.bf16.mxu0 0
      %978 = vmatpush1.bf16.msra.mxu0 0
      %979 = vmatprep.mubr.bf16.mxu0 0
      %980 = vmatmul.mubr.bf16.gmra.mrb[0].mxu0 %v878
      %v981 = vpop.f32.mrb[0].mxu0
      %v982 = vadd.f32 0.0, %v981
      %v983 = vpop.f32.mrb[0].mxu0
      %v984 = vpop.f32.mrb[0].mxu0
      %v985 = vadd.f32 0.0, %v984
      %v986 = vpop.f32.mrb[0].mxu0
      %987 = vmatprep.mubr.bf16.mxu0 0
      %988 = vmatmul.mubr.bf16.gmra.mrb[0].mxu0 %v879
      %v989 = vpop.f32.mrb[0].mxu0
      %v990 = vadd.f32 0.0, %v989
      %v991 = vpop.f32.mrb[0].mxu0
      %v992 = vpop.f32.mrb[0].mxu0
      %v993 = vadd.f32 0.0, %v992
      %v994 = vpop.f32.mrb[0].mxu0
      %995 = vmatprep.mubr.bf16.mxu0 0
      %996 = vmatmul.mubr.bf16.gmra.mrb[0].mxu0 %v880
      %v997 = vpop.f32.mrb[0].mxu0
      %v998 = vadd.f32 0.0, %v997
      %v999 = vpop.f32.mrb[0].mxu0
      %v1000 = vpop.f32.mrb[0].mxu0
      %v1001 = vadd.f32 0.0, %v1000
      %v1002 = vpop.f32.mrb[0].mxu0
      %1003 = vmatprep.mubr.bf16.mxu0 0
      %1004 = vmatmul.mubr.bf16.gmra.mrb[0].mxu0 %v881
      %v1005 = vpop.f32.mrb[0].mxu0
      %v1006 = vadd.f32 0.0, %v1005
      %v1007 = vpop.f32.mrb[0].mxu0
      %v1008 = vpop.f32.mrb[0].mxu0
      %v1009 = vadd.f32 0.0, %v1008
      %v1010 = vpop.f32.mrb[0].mxu0
      %1011 = vdwg.mxu0
      %v1012 = vadd.f32 %v815, %v982
      %v1013 = vadd.f32 %v818, %v985
      %v1014 = vadd.f32 %v823, %v990
      %v1015 = vadd.f32 %v826, %v993
      %v1016 = vadd.f32 %v831, %v998
      %v1017 = vadd.f32 %v834, %v1001
      %v1018 = vadd.f32 %v839, %v1006
      %v1019 = vadd.f32 %v842, %v1009
      %v1020 = vpack.c.bf16 %v513, %v511
      %v1021 = vpack.c.bf16 %v517, %v515
      %v1022 = vpack.c.bf16 %v521, %v519
      %v1023 = vpack.c.bf16 %v525, %v523
      %s1024 = scalar_lea.vmem %s1, 192
      %v1025 = vld [vmem:[%s1024] sm:$0xf]
      %v1026 = vld [vmem:[%s1024 + $0x4] sm:$0xf]
      %v1027 = vld [vmem:[%s1024 + $0x8] sm:$0xf]
      %v1028 = vld [vmem:[%s1024 + $0xc] sm:$0xf]
      %v1029 = vld [vmem:[%s1024 + $0x10] sm:$0xf]
      %v1030 = vld [vmem:[%s1024 + $0x14] sm:$0xf]
      %v1031 = vld [vmem:[%s1024 + $0x18] sm:$0xf]
      %v1032 = vld [vmem:[%s1024 + $0x1c] sm:$0xf]
      %v1033 = vld [vmem:[%s1024 + $0x20] sm:$0xf]
      %v1034 = vld [vmem:[%s1024 + $0x24] sm:$0xf]
      %v1035 = vld [vmem:[%s1024 + $0x28] sm:$0xf]
      %v1036 = vld [vmem:[%s1024 + $0x2c] sm:$0xf]
      %v1037 = vld [vmem:[%s1024 + $0x30] sm:$0xf]
      %v1038 = vld [vmem:[%s1024 + $0x34] sm:$0xf]
      %v1039 = vld [vmem:[%s1024 + $0x38] sm:$0xf]
      %v1040 = vld [vmem:[%s1024 + $0x3c] sm:$0xf]
      %v1057 = vunpack.c.l.b16 %v1025
      %v1058 = vunpack.c.l.b16 %v1026
      %v1059 = vunpack.c.l.b16 %v1027
      %v1060 = vunpack.c.l.b16 %v1028
      %v1061 = vunpack.c.l.b16 %v1029
      %v1062 = vunpack.c.l.b16 %v1030
      %v1063 = vunpack.c.l.b16 %v1031
      %v1064 = vunpack.c.l.b16 %v1032
      %v1065 = vunpack.c.l.b16 %v1033
      %v1066 = vunpack.c.l.b16 %v1034
      %v1067 = vunpack.c.l.b16 %v1035
      %v1068 = vunpack.c.l.b16 %v1036
      %v1069 = vunpack.c.l.b16 %v1037
      %v1070 = vunpack.c.l.b16 %v1038
      %v1071 = vunpack.c.l.b16 %v1039
      %v1072 = vunpack.c.l.b16 %v1040
      %v1073 = vpack.c.b16 %v1058, %v1057
      %v1074 = vpack.c.b16 %v1060, %v1059
      %v1075 = vpack.c.b16 %v1062, %v1061
      %v1076 = vpack.c.b16 %v1064, %v1063
      %v1077 = vpack.c.b16 %v1066, %v1065
      %v1078 = vpack.c.b16 %v1068, %v1067
      %v1079 = vpack.c.b16 %v1070, %v1069
      %v1080 = vpack.c.b16 %v1072, %v1071
      %1089 = vmatprep.subr.bf16.mxu0 0
      %1090 = vmatpush1.bf16.msra.mxu0 %v1073
      %1091 = vmatprep.subr.bf16.mxu0 0
      %1092 = vmatpush1.bf16.msra.mxu0 %v1074
      %1093 = vmatprep.subr.bf16.mxu0 0
      %1094 = vmatpush1.bf16.msra.mxu0 %v1075
      %1095 = vmatprep.subr.bf16.mxu0 0
      %1096 = vmatpush1.bf16.msra.mxu0 %v1076
      %1097 = vmatprep.subr.bf16.mxu0 0
      %1098 = vmatpush1.bf16.msra.mxu0 %v1077
      %1099 = vmatprep.subr.bf16.mxu0 0
      %1100 = vmatpush1.bf16.msra.mxu0 %v1078
      %1101 = vmatprep.subr.bf16.mxu0 0
      %1102 = vmatpush1.bf16.msra.mxu0 %v1079
      %1103 = vmatprep.subr.bf16.mxu0 0
      %1104 = vmatpush1.bf16.msra.mxu0 %v1080
      %1105 = vmatprep.subr.bf16.mxu0 0
      %1106 = vmatpush1.bf16.msra.mxu0 0
      %1107 = vmatprep.subr.bf16.mxu0 0
      %1108 = vmatpush1.bf16.msra.mxu0 0
      %1109 = vmatprep.subr.bf16.mxu0 0
      %1110 = vmatpush1.bf16.msra.mxu0 0
      %1111 = vmatprep.subr.bf16.mxu0 0
      %1112 = vmatpush1.bf16.msra.mxu0 0
      %1113 = vmatprep.subr.bf16.mxu0 0
      %1114 = vmatpush1.bf16.msra.mxu0 0
      %1115 = vmatprep.subr.bf16.mxu0 0
      %1116 = vmatpush1.bf16.msra.mxu0 0
      %1117 = vmatprep.subr.bf16.mxu0 0
      %1118 = vmatpush1.bf16.msra.mxu0 0
      %1119 = vmatprep.subr.bf16.mxu0 0
      %1120 = vmatpush1.bf16.msra.mxu0 0
      %1121 = vmatprep.mubr.bf16.mxu0 0
      %1122 = vmatmul.mubr.bf16.gmra.mrb[0].mxu0 %v1020
      %v1123 = vpop.f32.mrb[0].mxu0
      %v1124 = vadd.f32 0.0, %v1123
      %v1125 = vpop.f32.mrb[0].mxu0
      %v1126 = vpop.f32.mrb[0].mxu0
      %v1127 = vadd.f32 0.0, %v1126
      %v1128 = vpop.f32.mrb[0].mxu0
      %1129 = vmatprep.mubr.bf16.mxu0 0
      %1130 = vmatmul.mubr.bf16.gmra.mrb[0].mxu0 %v1021
      %v1131 = vpop.f32.mrb[0].mxu0
      %v1132 = vadd.f32 0.0, %v1131
      %v1133 = vpop.f32.mrb[0].mxu0
      %v1134 = vpop.f32.mrb[0].mxu0
      %v1135 = vadd.f32 0.0, %v1134
      %v1136 = vpop.f32.mrb[0].mxu0
      %1137 = vmatprep.mubr.bf16.mxu0 0
      %1138 = vmatmul.mubr.bf16.gmra.mrb[0].mxu0 %v1022
      %v1139 = vpop.f32.mrb[0].mxu0
      %v1140 = vadd.f32 0.0, %v1139
      %v1141 = vpop.f32.mrb[0].mxu0
      %v1142 = vpop.f32.mrb[0].mxu0
      %v1143 = vadd.f32 0.0, %v1142
      %v1144 = vpop.f32.mrb[0].mxu0
      %1145 = vmatprep.mubr.bf16.mxu0 0
      %1146 = vmatmul.mubr.bf16.gmra.mrb[0].mxu0 %v1023
      %v1147 = vpop.f32.mrb[0].mxu0
      %v1148 = vadd.f32 0.0, %v1147
      %v1149 = vpop.f32.mrb[0].mxu0
      %v1150 = vpop.f32.mrb[0].mxu0
      %v1151 = vadd.f32 0.0, %v1150
      %v1152 = vpop.f32.mrb[0].mxu0
      %1153 = vdwg.mxu0
      %v1154 = vadd.f32 %v1012, %v1124
      %v1155 = vadd.f32 %v1013, %v1127
      %v1156 = vadd.f32 %v1014, %v1132
      %v1157 = vadd.f32 %v1015, %v1135
      %v1158 = vadd.f32 %v1016, %v1140
      %v1159 = vadd.f32 %v1017, %v1143
      %v1160 = vadd.f32 %v1018, %v1148
      %v1161 = vadd.f32 %v1019, %v1151
      %v1164 = vrot.slane %v525, 1
      %v1165 = vrot.slane %v526, 1
      %v1166 = vsel %vm565, %v1164, %v1165
      %v1168 = vpack.c.bf16 %v574, %v571
      %v1169 = vpack.c.bf16 %v580, %v577
      %v1170 = vpack.c.bf16 %v586, %v583
      %v1171 = vpack.c.bf16 %v1166, %v589
      %s1172 = scalar_lea.vmem %s1, 256
      %v1173 = vld [vmem:[%s1172] sm:$0xf]
      %v1174 = vld [vmem:[%s1172 + $0x4] sm:$0xf]
      %v1175 = vld [vmem:[%s1172 + $0x8] sm:$0xf]
      %v1176 = vld [vmem:[%s1172 + $0xc] sm:$0xf]
      %v1177 = vld [vmem:[%s1172 + $0x10] sm:$0xf]
      %v1178 = vld [vmem:[%s1172 + $0x14] sm:$0xf]
      %v1179 = vld [vmem:[%s1172 + $0x18] sm:$0xf]
      %v1180 = vld [vmem:[%s1172 + $0x1c] sm:$0xf]
      %v1181 = vld [vmem:[%s1172 + $0x20] sm:$0xf]
      %v1182 = vld [vmem:[%s1172 + $0x24] sm:$0xf]
      %v1183 = vld [vmem:[%s1172 + $0x28] sm:$0xf]
      %v1184 = vld [vmem:[%s1172 + $0x2c] sm:$0xf]
      %v1185 = vld [vmem:[%s1172 + $0x30] sm:$0xf]
      %v1186 = vld [vmem:[%s1172 + $0x34] sm:$0xf]
      %v1187 = vld [vmem:[%s1172 + $0x38] sm:$0xf]
      %v1188 = vld [vmem:[%s1172 + $0x3c] sm:$0xf]
      %v1205 = vunpack.c.l.b16 %v1173
      %v1206 = vunpack.c.l.b16 %v1174
      %v1207 = vunpack.c.l.b16 %v1175
      %v1208 = vunpack.c.l.b16 %v1176
      %v1209 = vunpack.c.l.b16 %v1177
      %v1210 = vunpack.c.l.b16 %v1178
      %v1211 = vunpack.c.l.b16 %v1179
      %v1212 = vunpack.c.l.b16 %v1180
      %v1213 = vunpack.c.l.b16 %v1181
      %v1214 = vunpack.c.l.b16 %v1182
      %v1215 = vunpack.c.l.b16 %v1183
      %v1216 = vunpack.c.l.b16 %v1184
      %v1217 = vunpack.c.l.b16 %v1185
      %v1218 = vunpack.c.l.b16 %v1186
      %v1219 = vunpack.c.l.b16 %v1187
      %v1220 = vunpack.c.l.b16 %v1188
      %v1221 = vpack.c.b16 %v1206, %v1205
      %v1222 = vpack.c.b16 %v1208, %v1207
      %v1223 = vpack.c.b16 %v1210, %v1209
      %v1224 = vpack.c.b16 %v1212, %v1211
      %v1225 = vpack.c.b16 %v1214, %v1213
      %v1226 = vpack.c.b16 %v1216, %v1215
      %v1227 = vpack.c.b16 %v1218, %v1217
      %v1228 = vpack.c.b16 %v1220, %v1219
      %1237 = vmatprep.subr.bf16.mxu0 0
      %1238 = vmatpush1.bf16.msra.mxu0 %v1221
      %1239 = vmatprep.subr.bf16.mxu0 0
      %1240 = vmatpush1.bf16.msra.mxu0 %v1222
      %1241 = vmatprep.subr.bf16.mxu0 0
      %1242 = vmatpush1.bf16.msra.mxu0 %v1223
      %1243 = vmatprep.subr.bf16.mxu0 0
      %1244 = vmatpush1.bf16.msra.mxu0 %v1224
      %1245 = vmatprep.subr.bf16.mxu0 0
      %1246 = vmatpush1.bf16.msra.mxu0 %v1225
      %1247 = vmatprep.subr.bf16.mxu0 0
      %1248 = vmatpush1.bf16.msra.mxu0 %v1226
      %1249 = vmatprep.subr.bf16.mxu0 0
      %1250 = vmatpush1.bf16.msra.mxu0 %v1227
      %1251 = vmatprep.subr.bf16.mxu0 0
      %1252 = vmatpush1.bf16.msra.mxu0 %v1228
      %1253 = vmatprep.subr.bf16.mxu0 0
      %1254 = vmatpush1.bf16.msra.mxu0 0
      %1255 = vmatprep.subr.bf16.mxu0 0
      %1256 = vmatpush1.bf16.msra.mxu0 0
      %1257 = vmatprep.subr.bf16.mxu0 0
      %1258 = vmatpush1.bf16.msra.mxu0 0
      %1259 = vmatprep.subr.bf16.mxu0 0
      %1260 = vmatpush1.bf16.msra.mxu0 0
      %1261 = vmatprep.subr.bf16.mxu0 0
      %1262 = vmatpush1.bf16.msra.mxu0 0
      %1263 = vmatprep.subr.bf16.mxu0 0
      %1264 = vmatpush1.bf16.msra.mxu0 0
      %1265 = vmatprep.subr.bf16.mxu0 0
      %1266 = vmatpush1.bf16.msra.mxu0 0
      %1267 = vmatprep.subr.bf16.mxu0 0
      %1268 = vmatpush1.bf16.msra.mxu0 0
      %1269 = vmatprep.mubr.bf16.mxu0 0
      %1270 = vmatmul.mubr.bf16.gmra.mrb[0].mxu0 %v1168
      %v1271 = vpop.f32.mrb[0].mxu0
      %v1272 = vadd.f32 0.0, %v1271
      %v1273 = vpop.f32.mrb[0].mxu0
      %v1274 = vpop.f32.mrb[0].mxu0
      %v1275 = vadd.f32 0.0, %v1274
      %v1276 = vpop.f32.mrb[0].mxu0
      %1277 = vmatprep.mubr.bf16.mxu0 0
      %1278 = vmatmul.mubr.bf16.gmra.mrb[0].mxu0 %v1169
      %v1279 = vpop.f32.mrb[0].mxu0
      %v1280 = vadd.f32 0.0, %v1279
      %v1281 = vpop.f32.mrb[0].mxu0
      %v1282 = vpop.f32.mrb[0].mxu0
      %v1283 = vadd.f32 0.0, %v1282
      %v1284 = vpop.f32.mrb[0].mxu0
      %1285 = vmatprep.mubr.bf16.mxu0 0
      %1286 = vmatmul.mubr.bf16.gmra.mrb[0].mxu0 %v1170
      %v1287 = vpop.f32.mrb[0].mxu0
      %v1288 = vadd.f32 0.0, %v1287
      %v1289 = vpop.f32.mrb[0].mxu0
      %v1290 = vpop.f32.mrb[0].mxu0
      %v1291 = vadd.f32 0.0, %v1290
      %v1292 = vpop.f32.mrb[0].mxu0
      %1293 = vmatprep.mubr.bf16.mxu0 0
      %1294 = vmatmul.mubr.bf16.gmra.mrb[0].mxu0 %v1171
      %v1295 = vpop.f32.mrb[0].mxu0
      %v1296 = vadd.f32 0.0, %v1295
      %v1297 = vpop.f32.mrb[0].mxu0
      %v1298 = vpop.f32.mrb[0].mxu0
      %v1299 = vadd.f32 0.0, %v1298
      %v1300 = vpop.f32.mrb[0].mxu0
      %1301 = vdwg.mxu0
      %v1302 = vadd.f32 %v1154, %v1272
      %v1303 = vadd.f32 %v1155, %v1275
      %v1304 = vadd.f32 %v1156, %v1280
      %v1305 = vadd.f32 %v1157, %v1283
      %v1306 = vadd.f32 %v1158, %v1288
      %v1307 = vadd.f32 %v1159, %v1291
      %v1308 = vadd.f32 %v1160, %v1296
      %v1309 = vadd.f32 %v1161, %v1299
      %v1310 = vrot.slane %v525, 2
      %v1311 = vrot.slane %v526, 2
      %v1312 = vsel %vm845, %v1310, %v1311
      %v1314 = vpack.c.bf16 %v854, %v851
      %v1315 = vpack.c.bf16 %v860, %v857
      %v1316 = vpack.c.bf16 %v866, %v863
      %v1317 = vpack.c.bf16 %v1312, %v869
      %s1318 = scalar_lea.vmem %s1, 320
      %v1319 = vld [vmem:[%s1318] sm:$0xf]
      %v1320 = vld [vmem:[%s1318 + $0x4] sm:$0xf]
      %v1321 = vld [vmem:[%s1318 + $0x8] sm:$0xf]
      %v1322 = vld [vmem:[%s1318 + $0xc] sm:$0xf]
      %v1323 = vld [vmem:[%s1318 + $0x10] sm:$0xf]
      %v1324 = vld [vmem:[%s1318 + $0x14] sm:$0xf]
      %v1325 = vld [vmem:[%s1318 + $0x18] sm:$0xf]
      %v1326 = vld [vmem:[%s1318 + $0x1c] sm:$0xf]
      %v1327 = vld [vmem:[%s1318 + $0x20] sm:$0xf]
      %v1328 = vld [vmem:[%s1318 + $0x24] sm:$0xf]
      %v1329 = vld [vmem:[%s1318 + $0x28] sm:$0xf]
      %v1330 = vld [vmem:[%s1318 + $0x2c] sm:$0xf]
      %v1331 = vld [vmem:[%s1318 + $0x30] sm:$0xf]
      %v1332 = vld [vmem:[%s1318 + $0x34] sm:$0xf]
      %v1333 = vld [vmem:[%s1318 + $0x38] sm:$0xf]
      %v1334 = vld [vmem:[%s1318 + $0x3c] sm:$0xf]
      %v1351 = vunpack.c.l.b16 %v1319
      %v1352 = vunpack.c.l.b16 %v1320
      %v1353 = vunpack.c.l.b16 %v1321
      %v1354 = vunpack.c.l.b16 %v1322
      %v1355 = vunpack.c.l.b16 %v1323
      %v1356 = vunpack.c.l.b16 %v1324
      %v1357 = vunpack.c.l.b16 %v1325
      %v1358 = vunpack.c.l.b16 %v1326
      %v1359 = vunpack.c.l.b16 %v1327
      %v1360 = vunpack.c.l.b16 %v1328
      %v1361 = vunpack.c.l.b16 %v1329
      %v1362 = vunpack.c.l.b16 %v1330
      %v1363 = vunpack.c.l.b16 %v1331
      %v1364 = vunpack.c.l.b16 %v1332
      %v1365 = vunpack.c.l.b16 %v1333
      %v1366 = vunpack.c.l.b16 %v1334
      %v1367 = vpack.c.b16 %v1352, %v1351
      %v1368 = vpack.c.b16 %v1354, %v1353
      %v1369 = vpack.c.b16 %v1356, %v1355
      %v1370 = vpack.c.b16 %v1358, %v1357
      %v1371 = vpack.c.b16 %v1360, %v1359
      %v1372 = vpack.c.b16 %v1362, %v1361
      %v1373 = vpack.c.b16 %v1364, %v1363
      %v1374 = vpack.c.b16 %v1366, %v1365
      %1383 = vmatprep.subr.bf16.mxu0 0
      %1384 = vmatpush1.bf16.msra.mxu0 %v1367
      %1385 = vmatprep.subr.bf16.mxu0 0
      %1386 = vmatpush1.bf16.msra.mxu0 %v1368
      %1387 = vmatprep.subr.bf16.mxu0 0
      %1388 = vmatpush1.bf16.msra.mxu0 %v1369
      %1389 = vmatprep.subr.bf16.mxu0 0
      %1390 = vmatpush1.bf16.msra.mxu0 %v1370
      %1391 = vmatprep.subr.bf16.mxu0 0
      %1392 = vmatpush1.bf16.msra.mxu0 %v1371
      %1393 = vmatprep.subr.bf16.mxu0 0
      %1394 = vmatpush1.bf16.msra.mxu0 %v1372
      %1395 = vmatprep.subr.bf16.mxu0 0
      %1396 = vmatpush1.bf16.msra.mxu0 %v1373
      %1397 = vmatprep.subr.bf16.mxu0 0
      %1398 = vmatpush1.bf16.msra.mxu0 %v1374
      %1399 = vmatprep.subr.bf16.mxu0 0
      %1400 = vmatpush1.bf16.msra.mxu0 0
      %1401 = vmatprep.subr.bf16.mxu0 0
      %1402 = vmatpush1.bf16.msra.mxu0 0
      %1403 = vmatprep.subr.bf16.mxu0 0
      %1404 = vmatpush1.bf16.msra.mxu0 0
      %1405 = vmatprep.subr.bf16.mxu0 0
      %1406 = vmatpush1.bf16.msra.mxu0 0
      %1407 = vmatprep.subr.bf16.mxu0 0
      %1408 = vmatpush1.bf16.msra.mxu0 0
      %1409 = vmatprep.subr.bf16.mxu0 0
      %1410 = vmatpush1.bf16.msra.mxu0 0
      %1411 = vmatprep.subr.bf16.mxu0 0
      %1412 = vmatpush1.bf16.msra.mxu0 0
      %1413 = vmatprep.subr.bf16.mxu0 0
      %1414 = vmatpush1.bf16.msra.mxu0 0
      %1415 = vmatprep.mubr.bf16.mxu0 0
      %1416 = vmatmul.mubr.bf16.gmra.mrb[0].mxu0 %v1314
      %v1417 = vpop.f32.mrb[0].mxu0
      %v1418 = vadd.f32 0.0, %v1417
      %v1419 = vpop.f32.mrb[0].mxu0
      %v1420 = vpop.f32.mrb[0].mxu0
      %v1421 = vadd.f32 0.0, %v1420
      %v1422 = vpop.f32.mrb[0].mxu0
      %1423 = vmatprep.mubr.bf16.mxu0 0
      %1424 = vmatmul.mubr.bf16.gmra.mrb[0].mxu0 %v1315
      %v1425 = vpop.f32.mrb[0].mxu0
      %v1426 = vadd.f32 0.0, %v1425
      %v1427 = vpop.f32.mrb[0].mxu0
      %v1428 = vpop.f32.mrb[0].mxu0
      %v1429 = vadd.f32 0.0, %v1428
      %v1430 = vpop.f32.mrb[0].mxu0
      %1431 = vmatprep.mubr.bf16.mxu0 0
      %1432 = vmatmul.mubr.bf16.gmra.mrb[0].mxu0 %v1316
      %v1433 = vpop.f32.mrb[0].mxu0
      %v1434 = vadd.f32 0.0, %v1433
      %v1435 = vpop.f32.mrb[0].mxu0
      %v1436 = vpop.f32.mrb[0].mxu0
      %v1437 = vadd.f32 0.0, %v1436
      %v1438 = vpop.f32.mrb[0].mxu0
      %1439 = vmatprep.mubr.bf16.mxu0 0
      %1440 = vmatmul.mubr.bf16.gmra.mrb[0].mxu0 %v1317
      %v1441 = vpop.f32.mrb[0].mxu0
      %v1442 = vadd.f32 0.0, %v1441
      %v1443 = vpop.f32.mrb[0].mxu0
      %v1444 = vpop.f32.mrb[0].mxu0
      %v1445 = vadd.f32 0.0, %v1444
      %v1446 = vpop.f32.mrb[0].mxu0
      %1447 = vdwg.mxu0
      %v1448 = vadd.f32 %v1302, %v1418
      %v1449 = vadd.f32 %v1303, %v1421
      %v1450 = vadd.f32 %v1304, %v1426
      %v1451 = vadd.f32 %v1305, %v1429
      %v1452 = vadd.f32 %v1306, %v1434
      %v1453 = vadd.f32 %v1307, %v1437
      %v1454 = vadd.f32 %v1308, %v1442
      %v1455 = vadd.f32 %v1309, %v1445
      %v1456 = vpack.c.bf16 %v527, %v525
      %s1457 = scalar_lea.vmem %s1, 384
      %v1458 = vld [vmem:[%s1457] sm:$0xf]
      %v1459 = vld [vmem:[%s1457 + $0x4] sm:$0xf]
      %v1460 = vld [vmem:[%s1457 + $0x8] sm:$0xf]
      %v1461 = vld [vmem:[%s1457 + $0xc] sm:$0xf]
      %v1462 = vld [vmem:[%s1457 + $0x10] sm:$0xf]
      %v1463 = vld [vmem:[%s1457 + $0x14] sm:$0xf]
      %v1464 = vld [vmem:[%s1457 + $0x18] sm:$0xf]
      %v1465 = vld [vmem:[%s1457 + $0x1c] sm:$0xf]
      %v1466 = vld [vmem:[%s1457 + $0x20] sm:$0xf]
      %v1467 = vld [vmem:[%s1457 + $0x24] sm:$0xf]
      %v1468 = vld [vmem:[%s1457 + $0x28] sm:$0xf]
      %v1469 = vld [vmem:[%s1457 + $0x2c] sm:$0xf]
      %v1470 = vld [vmem:[%s1457 + $0x30] sm:$0xf]
      %v1471 = vld [vmem:[%s1457 + $0x34] sm:$0xf]
      %v1472 = vld [vmem:[%s1457 + $0x38] sm:$0xf]
      %v1473 = vld [vmem:[%s1457 + $0x3c] sm:$0xf]
      %v1490 = vunpack.c.l.b16 %v1458
      %v1491 = vunpack.c.l.b16 %v1459
      %v1492 = vunpack.c.l.b16 %v1460
      %v1493 = vunpack.c.l.b16 %v1461
      %v1494 = vunpack.c.l.b16 %v1462
      %v1495 = vunpack.c.l.b16 %v1463
      %v1496 = vunpack.c.l.b16 %v1464
      %v1497 = vunpack.c.l.b16 %v1465
      %v1498 = vunpack.c.l.b16 %v1466
      %v1499 = vunpack.c.l.b16 %v1467
      %v1500 = vunpack.c.l.b16 %v1468
      %v1501 = vunpack.c.l.b16 %v1469
      %v1502 = vunpack.c.l.b16 %v1470
      %v1503 = vunpack.c.l.b16 %v1471
      %v1504 = vunpack.c.l.b16 %v1472
      %v1505 = vunpack.c.l.b16 %v1473
      %v1506 = vpack.c.b16 %v1491, %v1490
      %v1507 = vpack.c.b16 %v1493, %v1492
      %v1508 = vpack.c.b16 %v1495, %v1494
      %v1509 = vpack.c.b16 %v1497, %v1496
      %v1510 = vpack.c.b16 %v1499, %v1498
      %v1511 = vpack.c.b16 %v1501, %v1500
      %v1512 = vpack.c.b16 %v1503, %v1502
      %v1513 = vpack.c.b16 %v1505, %v1504
      %1522 = vmatprep.subr.bf16.mxu0 0
      %1523 = vmatpush1.bf16.msra.mxu0 %v1506
      %1524 = vmatprep.subr.bf16.mxu0 0
      %1525 = vmatpush1.bf16.msra.mxu0 %v1507
      %1526 = vmatprep.subr.bf16.mxu0 0
      %1527 = vmatpush1.bf16.msra.mxu0 %v1508
      %1528 = vmatprep.subr.bf16.mxu0 0
      %1529 = vmatpush1.bf16.msra.mxu0 %v1509
      %1530 = vmatprep.subr.bf16.mxu0 0
      %1531 = vmatpush1.bf16.msra.mxu0 %v1510
      %1532 = vmatprep.subr.bf16.mxu0 0
      %1533 = vmatpush1.bf16.msra.mxu0 %v1511
      %1534 = vmatprep.subr.bf16.mxu0 0
      %1535 = vmatpush1.bf16.msra.mxu0 %v1512
      %1536 = vmatprep.subr.bf16.mxu0 0
      %1537 = vmatpush1.bf16.msra.mxu0 %v1513
      %1538 = vmatprep.subr.bf16.mxu0 0
      %1539 = vmatpush1.bf16.msra.mxu0 0
      %1540 = vmatprep.subr.bf16.mxu0 0
      %1541 = vmatpush1.bf16.msra.mxu0 0
      %1542 = vmatprep.subr.bf16.mxu0 0
      %1543 = vmatpush1.bf16.msra.mxu0 0
      %1544 = vmatprep.subr.bf16.mxu0 0
      %1545 = vmatpush1.bf16.msra.mxu0 0
      %1546 = vmatprep.subr.bf16.mxu0 0
      %1547 = vmatpush1.bf16.msra.mxu0 0
      %1548 = vmatprep.subr.bf16.mxu0 0
      %1549 = vmatpush1.bf16.msra.mxu0 0
      %1550 = vmatprep.subr.bf16.mxu0 0
      %1551 = vmatpush1.bf16.msra.mxu0 0
      %1552 = vmatprep.subr.bf16.mxu0 0
      %1553 = vmatpush1.bf16.msra.mxu0 0
      %1554 = vmatprep.mubr.bf16.mxu0 0
      %1555 = vmatmul.mubr.bf16.gmra.mrb[0].mxu0 %v530
      %v1556 = vpop.f32.mrb[0].mxu0
      %v1557 = vadd.f32 0.0, %v1556
      %v1558 = vpop.f32.mrb[0].mxu0
      %v1559 = vpop.f32.mrb[0].mxu0
      %v1560 = vadd.f32 0.0, %v1559
      %v1561 = vpop.f32.mrb[0].mxu0
      %1562 = vmatprep.mubr.bf16.mxu0 0
      %1563 = vmatmul.mubr.bf16.gmra.mrb[0].mxu0 %v531
      %v1564 = vpop.f32.mrb[0].mxu0
      %v1565 = vadd.f32 0.0, %v1564
      %v1566 = vpop.f32.mrb[0].mxu0
      %v1567 = vpop.f32.mrb[0].mxu0
      %v1568 = vadd.f32 0.0, %v1567
      %v1569 = vpop.f32.mrb[0].mxu0
      %1570 = vmatprep.mubr.bf16.mxu0 0
      %1571 = vmatmul.mubr.bf16.gmra.mrb[0].mxu0 %v532
      %v1572 = vpop.f32.mrb[0].mxu0
      %v1573 = vadd.f32 0.0, %v1572
      %v1574 = vpop.f32.mrb[0].mxu0
      %v1575 = vpop.f32.mrb[0].mxu0
      %v1576 = vadd.f32 0.0, %v1575
      %v1577 = vpop.f32.mrb[0].mxu0
      %1578 = vmatprep.mubr.bf16.mxu0 0
      %1579 = vmatmul.mubr.bf16.gmra.mrb[0].mxu0 %v1456
      %v1580 = vpop.f32.mrb[0].mxu0
      %v1581 = vadd.f32 0.0, %v1580
      %v1582 = vpop.f32.mrb[0].mxu0
      %v1583 = vpop.f32.mrb[0].mxu0
      %v1584 = vadd.f32 0.0, %v1583
      %v1585 = vpop.f32.mrb[0].mxu0
      %1586 = vdwg.mxu0
      %v1587 = vadd.f32 %v1448, %v1557
      %v1588 = vadd.f32 %v1449, %v1560
      %v1589 = vadd.f32 %v1450, %v1565
      %v1590 = vadd.f32 %v1451, %v1568
      %v1591 = vadd.f32 %v1452, %v1573
      %v1592 = vadd.f32 %v1453, %v1576
      %v1593 = vadd.f32 %v1454, %v1581
      %v1594 = vadd.f32 %v1455, %v1584
      %v1597 = vrot.slane %v527, 1
      %v1598 = vrot.slane %v528, 1
      %v1599 = vsel %vm565, %v1597, %v1598
      %v1601 = vpack.c.bf16 %v1599, %v1166
      %s1602 = scalar_lea.vmem %s1, 448
      %v1603 = vld [vmem:[%s1602] sm:$0xf]
      %v1604 = vld [vmem:[%s1602 + $0x4] sm:$0xf]
      %v1605 = vld [vmem:[%s1602 + $0x8] sm:$0xf]
      %v1606 = vld [vmem:[%s1602 + $0xc] sm:$0xf]
      %v1607 = vld [vmem:[%s1602 + $0x10] sm:$0xf]
      %v1608 = vld [vmem:[%s1602 + $0x14] sm:$0xf]
      %v1609 = vld [vmem:[%s1602 + $0x18] sm:$0xf]
      %v1610 = vld [vmem:[%s1602 + $0x1c] sm:$0xf]
      %v1611 = vld [vmem:[%s1602 + $0x20] sm:$0xf]
      %v1612 = vld [vmem:[%s1602 + $0x24] sm:$0xf]
      %v1613 = vld [vmem:[%s1602 + $0x28] sm:$0xf]
      %v1614 = vld [vmem:[%s1602 + $0x2c] sm:$0xf]
      %v1615 = vld [vmem:[%s1602 + $0x30] sm:$0xf]
      %v1616 = vld [vmem:[%s1602 + $0x34] sm:$0xf]
      %v1617 = vld [vmem:[%s1602 + $0x38] sm:$0xf]
      %v1618 = vld [vmem:[%s1602 + $0x3c] sm:$0xf]
      %v1635 = vunpack.c.l.b16 %v1603
      %v1636 = vunpack.c.l.b16 %v1604
      %v1637 = vunpack.c.l.b16 %v1605
      %v1638 = vunpack.c.l.b16 %v1606
      %v1639 = vunpack.c.l.b16 %v1607
      %v1640 = vunpack.c.l.b16 %v1608
      %v1641 = vunpack.c.l.b16 %v1609
      %v1642 = vunpack.c.l.b16 %v1610
      %v1643 = vunpack.c.l.b16 %v1611
      %v1644 = vunpack.c.l.b16 %v1612
      %v1645 = vunpack.c.l.b16 %v1613
      %v1646 = vunpack.c.l.b16 %v1614
      %v1647 = vunpack.c.l.b16 %v1615
      %v1648 = vunpack.c.l.b16 %v1616
      %v1649 = vunpack.c.l.b16 %v1617
      %v1650 = vunpack.c.l.b16 %v1618
      %v1651 = vpack.c.b16 %v1636, %v1635
      %v1652 = vpack.c.b16 %v1638, %v1637
      %v1653 = vpack.c.b16 %v1640, %v1639
      %v1654 = vpack.c.b16 %v1642, %v1641
      %v1655 = vpack.c.b16 %v1644, %v1643
      %v1656 = vpack.c.b16 %v1646, %v1645
      %v1657 = vpack.c.b16 %v1648, %v1647
      %v1658 = vpack.c.b16 %v1650, %v1649
      %1667 = vmatprep.subr.bf16.mxu0 0
      %1668 = vmatpush1.bf16.msra.mxu0 %v1651
      %1669 = vmatprep.subr.bf16.mxu0 0
      %1670 = vmatpush1.bf16.msra.mxu0 %v1652
      %1671 = vmatprep.subr.bf16.mxu0 0
      %1672 = vmatpush1.bf16.msra.mxu0 %v1653
      %1673 = vmatprep.subr.bf16.mxu0 0
      %1674 = vmatpush1.bf16.msra.mxu0 %v1654
      %1675 = vmatprep.subr.bf16.mxu0 0
      %1676 = vmatpush1.bf16.msra.mxu0 %v1655
      %1677 = vmatprep.subr.bf16.mxu0 0
      %1678 = vmatpush1.bf16.msra.mxu0 %v1656
      %1679 = vmatprep.subr.bf16.mxu0 0
      %1680 = vmatpush1.bf16.msra.mxu0 %v1657
      %1681 = vmatprep.subr.bf16.mxu0 0
      %1682 = vmatpush1.bf16.msra.mxu0 %v1658
      %1683 = vmatprep.subr.bf16.mxu0 0
      %1684 = vmatpush1.bf16.msra.mxu0 0
      %1685 = vmatprep.subr.bf16.mxu0 0
      %1686 = vmatpush1.bf16.msra.mxu0 0
      %1687 = vmatprep.subr.bf16.mxu0 0
      %1688 = vmatpush1.bf16.msra.mxu0 0
      %1689 = vmatprep.subr.bf16.mxu0 0
      %1690 = vmatpush1.bf16.msra.mxu0 0
      %1691 = vmatprep.subr.bf16.mxu0 0
      %1692 = vmatpush1.bf16.msra.mxu0 0
      %1693 = vmatprep.subr.bf16.mxu0 0
      %1694 = vmatpush1.bf16.msra.mxu0 0
      %1695 = vmatprep.subr.bf16.mxu0 0
      %1696 = vmatpush1.bf16.msra.mxu0 0
      %1697 = vmatprep.subr.bf16.mxu0 0
      %1698 = vmatpush1.bf16.msra.mxu0 0
      %1699 = vmatprep.mubr.bf16.mxu0 0
      %1700 = vmatmul.mubr.bf16.gmra.mrb[0].mxu0 %v599
      %v1701 = vpop.f32.mrb[0].mxu0
      %v1702 = vadd.f32 0.0, %v1701
      %v1703 = vpop.f32.mrb[0].mxu0
      %v1704 = vpop.f32.mrb[0].mxu0
      %v1705 = vadd.f32 0.0, %v1704
      %v1706 = vpop.f32.mrb[0].mxu0
      %1707 = vmatprep.mubr.bf16.mxu0 0
      %1708 = vmatmul.mubr.bf16.gmra.mrb[0].mxu0 %v600
      %v1709 = vpop.f32.mrb[0].mxu0
      %v1710 = vadd.f32 0.0, %v1709
      %v1711 = vpop.f32.mrb[0].mxu0
      %v1712 = vpop.f32.mrb[0].mxu0
      %v1713 = vadd.f32 0.0, %v1712
      %v1714 = vpop.f32.mrb[0].mxu0
      %1715 = vmatprep.mubr.bf16.mxu0 0
      %1716 = vmatmul.mubr.bf16.gmra.mrb[0].mxu0 %v601
      %v1717 = vpop.f32.mrb[0].mxu0
      %v1718 = vadd.f32 0.0, %v1717
      %v1719 = vpop.f32.mrb[0].mxu0
      %v1720 = vpop.f32.mrb[0].mxu0
      %v1721 = vadd.f32 0.0, %v1720
      %v1722 = vpop.f32.mrb[0].mxu0
      %1723 = vmatprep.mubr.bf16.mxu0 0
      %1724 = vmatmul.mubr.bf16.gmra.mrb[0].mxu0 %v1601
      %v1725 = vpop.f32.mrb[0].mxu0
      %v1726 = vadd.f32 0.0, %v1725
      %v1727 = vpop.f32.mrb[0].mxu0
      %v1728 = vpop.f32.mrb[0].mxu0
      %v1729 = vadd.f32 0.0, %v1728
      %v1730 = vpop.f32.mrb[0].mxu0
      %1731 = vdwg.mxu0
      %v1732 = vadd.f32 %v1587, %v1702
      %v1733 = vadd.f32 %v1588, %v1705
      %v1734 = vadd.f32 %v1589, %v1710
      %v1735 = vadd.f32 %v1590, %v1713
      %v1736 = vadd.f32 %v1591, %v1718
      %v1737 = vadd.f32 %v1592, %v1721
      %v1738 = vadd.f32 %v1593, %v1726
      %v1739 = vadd.f32 %v1594, %v1729
      %v1740 = vrot.slane %v527, 2
      %v1741 = vrot.slane %v528, 2
      %v1742 = vsel %vm845, %v1740, %v1741
      %v1744 = vpack.c.bf16 %v1742, %v1312
      %s1745 = scalar_lea.vmem %s1, 512
      %v1746 = vld [vmem:[%s1745] sm:$0xf]
      %v1747 = vld [vmem:[%s1745 + $0x4] sm:$0xf]
      %v1748 = vld [vmem:[%s1745 + $0x8] sm:$0xf]
      %v1749 = vld [vmem:[%s1745 + $0xc] sm:$0xf]
      %v1750 = vld [vmem:[%s1745 + $0x10] sm:$0xf]
      %v1751 = vld [vmem:[%s1745 + $0x14] sm:$0xf]
      %v1752 = vld [vmem:[%s1745 + $0x18] sm:$0xf]
      %v1753 = vld [vmem:[%s1745 + $0x1c] sm:$0xf]
      %v1754 = vld [vmem:[%s1745 + $0x20] sm:$0xf]
      %v1755 = vld [vmem:[%s1745 + $0x24] sm:$0xf]
      %v1756 = vld [vmem:[%s1745 + $0x28] sm:$0xf]
      %v1757 = vld [vmem:[%s1745 + $0x2c] sm:$0xf]
      %v1758 = vld [vmem:[%s1745 + $0x30] sm:$0xf]
      %v1759 = vld [vmem:[%s1745 + $0x34] sm:$0xf]
      %v1760 = vld [vmem:[%s1745 + $0x38] sm:$0xf]
      %v1761 = vld [vmem:[%s1745 + $0x3c] sm:$0xf]
      %v1778 = vunpack.c.l.b16 %v1746
      %v1779 = vunpack.c.l.b16 %v1747
      %v1780 = vunpack.c.l.b16 %v1748
      %v1781 = vunpack.c.l.b16 %v1749
      %v1782 = vunpack.c.l.b16 %v1750
      %v1783 = vunpack.c.l.b16 %v1751
      %v1784 = vunpack.c.l.b16 %v1752
      %v1785 = vunpack.c.l.b16 %v1753
      %v1786 = vunpack.c.l.b16 %v1754
      %v1787 = vunpack.c.l.b16 %v1755
      %v1788 = vunpack.c.l.b16 %v1756
      %v1789 = vunpack.c.l.b16 %v1757
      %v1790 = vunpack.c.l.b16 %v1758
      %v1791 = vunpack.c.l.b16 %v1759
      %v1792 = vunpack.c.l.b16 %v1760
      %v1793 = vunpack.c.l.b16 %v1761
      %v1794 = vpack.c.b16 %v1779, %v1778
      %v1795 = vpack.c.b16 %v1781, %v1780
      %v1796 = vpack.c.b16 %v1783, %v1782
      %v1797 = vpack.c.b16 %v1785, %v1784
      %v1798 = vpack.c.b16 %v1787, %v1786
      %v1799 = vpack.c.b16 %v1789, %v1788
      %v1800 = vpack.c.b16 %v1791, %v1790
      %v1801 = vpack.c.b16 %v1793, %v1792
      %1810 = vmatprep.subr.bf16.mxu0 0
      %1811 = vmatpush1.bf16.msra.mxu0 %v1794
      %1812 = vmatprep.subr.bf16.mxu0 0
      %1813 = vmatpush1.bf16.msra.mxu0 %v1795
      %1814 = vmatprep.subr.bf16.mxu0 0
      %1815 = vmatpush1.bf16.msra.mxu0 %v1796
      %1816 = vmatprep.subr.bf16.mxu0 0
      %1817 = vmatpush1.bf16.msra.mxu0 %v1797
      %1818 = vmatprep.subr.bf16.mxu0 0
      %1819 = vmatpush1.bf16.msra.mxu0 %v1798
      %1820 = vmatprep.subr.bf16.mxu0 0
      %1821 = vmatpush1.bf16.msra.mxu0 %v1799
      %1822 = vmatprep.subr.bf16.mxu0 0
      %1823 = vmatpush1.bf16.msra.mxu0 %v1800
      %1824 = vmatprep.subr.bf16.mxu0 0
      %1825 = vmatpush1.bf16.msra.mxu0 %v1801
      %1826 = vmatprep.subr.bf16.mxu0 0
      %1827 = vmatpush1.bf16.msra.mxu0 0
      %1828 = vmatprep.subr.bf16.mxu0 0
      %1829 = vmatpush1.bf16.msra.mxu0 0
      %1830 = vmatprep.subr.bf16.mxu0 0
      %1831 = vmatpush1.bf16.msra.mxu0 0
      %1832 = vmatprep.subr.bf16.mxu0 0
      %1833 = vmatpush1.bf16.msra.mxu0 0
      %1834 = vmatprep.subr.bf16.mxu0 0
      %1835 = vmatpush1.bf16.msra.mxu0 0
      %1836 = vmatprep.subr.bf16.mxu0 0
      %1837 = vmatpush1.bf16.msra.mxu0 0
      %1838 = vmatprep.subr.bf16.mxu0 0
      %1839 = vmatpush1.bf16.msra.mxu0 0
      %1840 = vmatprep.subr.bf16.mxu0 0
      %1841 = vmatpush1.bf16.msra.mxu0 0
      %1842 = vmatprep.mubr.bf16.mxu0 0
      %1843 = vmatmul.mubr.bf16.gmra.mrb[0].mxu0 %v879
      %v1844 = vpop.f32.mrb[0].mxu0
      %v1845 = vadd.f32 0.0, %v1844
      %v1846 = vpop.f32.mrb[0].mxu0
      %v1847 = vpop.f32.mrb[0].mxu0
      %v1848 = vadd.f32 0.0, %v1847
      %v1849 = vpop.f32.mrb[0].mxu0
      %1850 = vmatprep.mubr.bf16.mxu0 0
      %1851 = vmatmul.mubr.bf16.gmra.mrb[0].mxu0 %v880
      %v1852 = vpop.f32.mrb[0].mxu0
      %v1853 = vadd.f32 0.0, %v1852
      %v1854 = vpop.f32.mrb[0].mxu0
      %v1855 = vpop.f32.mrb[0].mxu0
      %v1856 = vadd.f32 0.0, %v1855
      %v1857 = vpop.f32.mrb[0].mxu0
      %1858 = vmatprep.mubr.bf16.mxu0 0
      %1859 = vmatmul.mubr.bf16.gmra.mrb[0].mxu0 %v881
      %v1860 = vpop.f32.mrb[0].mxu0
      %v1861 = vadd.f32 0.0, %v1860
      %v1862 = vpop.f32.mrb[0].mxu0
      %v1863 = vpop.f32.mrb[0].mxu0
      %v1864 = vadd.f32 0.0, %v1863
      %v1865 = vpop.f32.mrb[0].mxu0
      %1866 = vmatprep.mubr.bf16.mxu0 0
      %1867 = vmatmul.mubr.bf16.gmra.mrb[0].mxu0 %v1744
      %v1868 = vpop.f32.mrb[0].mxu0
      %v1869 = vadd.f32 0.0, %v1868
      %v1870 = vpop.f32.mrb[0].mxu0
      %v1871 = vpop.f32.mrb[0].mxu0
      %v1872 = vadd.f32 0.0, %v1871
      %v1873 = vpop.f32.mrb[0].mxu0
      %1874 = vdwg.mxu0
      %v1875 = vadd.f32 %v1732, %v1845
      %v1876 = vadd.f32 %v1733, %v1848
      %v1877 = vadd.f32 %v1734, %v1853
      %v1878 = vadd.f32 %v1735, %v1856
      %v1879 = vadd.f32 %v1736, %v1861
      %v1880 = vadd.f32 %v1737, %v1864
      %v1881 = vadd.f32 %v1738, %v1869
      %v1882 = vadd.f32 %v1739, %v1872
      %v1883 = vld [vmem:[%s272] sm:$0xff]
      %v1884 = vld [vmem:[%s272 + $0x8] sm:$0xff]
      %v1885 = vld [vmem:[%s272 + $0x10] sm:$0xff]
      %v1886 = vld [vmem:[%s272 + $0x18] sm:$0xff]
      %v1887 = vld [vmem:[%s272 + $0x20] sm:$0xff]
      %v1888 = vld [vmem:[%s272 + $0x28] sm:$0xff]
      %v1889 = vld [vmem:[%s272 + $0x30] sm:$0xff]
      %v1890 = vld [vmem:[%s272 + $0x38] sm:$0xff]
      %v1891 = vadd.f32 %v1875, %v1883
      %v1892 = vadd.f32 %v1876, %v1884
      %v1893 = vadd.f32 %v1877, %v1885
      %v1894 = vadd.f32 %v1878, %v1886
      %v1895 = vadd.f32 %v1879, %v1887
      %v1896 = vadd.f32 %v1880, %v1888
      %v1897 = vadd.f32 %v1881, %v1889
      %v1898 = vadd.f32 %v1882, %v1890
      %1899 = vst [vmem:[%s282] sm:$0xff] %v1891
      %1900 = vst [vmem:[%s282 + $0x8] sm:$0xff] %v1892
      %1901 = vst [vmem:[%s282 + $0x10] sm:$0xff] %v1893
      %1902 = vst [vmem:[%s282 + $0x18] sm:$0xff] %v1894
      %1903 = vst [vmem:[%s282 + $0x20] sm:$0xff] %v1895
      %1904 = vst [vmem:[%s282 + $0x28] sm:$0xff] %v1896
      %1905 = vst [vmem:[%s282 + $0x30] sm:$0xff] %v1897
      %1906 = vst [vmem:[%s282 + $0x38] sm:$0xff] %v1898
      %s1907 = smul.u32 8, %s21
      %p1908 = scmp.lt.s32.totalorder %s20, 1
      %s1909 = scalar_select %p1908, %s20, 1
      %p1910 = scmp.lt.s32.totalorder %s1907, 7
      %s1911 = scalar_select %p1910, %s1907, 7
      %s1912 = smul.addr %s1909, 8
      %s1913 = sadd.s32 %s1911, %s1912
      %s1914 = smul.addr %s1913, 8
      %s1915 = scalar_lea.vmem %s5, %s1914
      // Predicated region
      $region41: #{base_block_forward.3} parent=39 // pred_check
        %p1916 = pneg %p165
      $region42: #{base_block_forward.3} parent=39 // pred_check_branch
        %1918 = sbr.rel (%p1916) target = $region44
      $region43: #{base_block_forward.3} parent=39 // pred_region
        %s1919 = smul.u32 8, %s21
      $region44: #{base_block_forward.3} parent=39 // pred_fallthru
        _
    $region40: #{base_block_forward.3} parent=5 // pred_fallthru
      _
    %p1920 = scmp.le.s32.totalorder 2, %s11
    // Predicated region
    $region45: #{base_block_forward.3} parent=5 // pred_check
      %p1921 = pneg %p1920
    $region46: #{base_block_forward.3} parent=5 // pred_check_branch
      %1923 = sbr.rel (%p1921) target = $region48
    $region47: #{base_block_forward.3} parent=5 // pred_region
      %s1924 = ssub.s32 %s11, 2
      // Predicated region
      $region49: #{base_block_forward.3} parent=47 // pred_check
        %p1925 = pneg %p171
      $region50: #{base_block_forward.3} parent=47 // pred_check_branch
        %1927 = sbr.rel (%p1925) target = $region52
      $region51: #{base_block_forward.3} parent=47 // pred_region
        %s1928 = smul.u32 8, %s23
        %p1929 = scmp.lt.s32.totalorder %s22, 1
        %s1930 = scalar_select %p1929, %s22, 1
        %p1931 = scmp.lt.s32.totalorder %s1928, 7
        %s1932 = scalar_select %p1931, %s1928, 7
        %s1933 = smul.addr %s1930, 8
        %s1934 = sadd.s32 %s1932, %s1933
        %s1935 = smul.addr %s1934, 8
        %s1936 = scalar_lea.vmem %s5, %s1935
      $region52: #{base_block_forward.3} parent=47 // pred_fallthru
        _
    $region48: #{base_block_forward.3} parent=5 // pred_fallthru
      _
  $region6: #{base_block_forward.3} parent=0 // loop_footer
    %s15 = sadd.s32 1, %s11
  $region7: #{base_block_forward.3} parent=0 // loop_footer_branch
    %10 = sbr.rel target = $region3
  $region8: #{base_block_forward.3} parent=0 // loop_exit
    _

</llo_original>
